<compile_context>
chip_gen: v5e
topology: v5e:2x2
jax: 0.10.0
libtpu: 0.0.40
codegen_flags: <defaults>
</compile_context>

<pallas_src>
import functools

import jax
import jax.numpy as jnp
import numpy as np
from jax.experimental import pallas as pl
from jax.experimental.pallas import tpu as pltpu

try:  # current JAX
    _CompilerParams = pltpu.CompilerParams
except AttributeError:  # older JAX fallback
    _CompilerParams = pltpu.TPUCompilerParams


def _mosaic_params():
    return _CompilerParams(dimension_semantics=("parallel",))


# ----------------------------------------------------------------------------
# Pallas kernels (one batch image per grid step; internal layout (H, C, W))
# ----------------------------------------------------------------------------
def _conv1_pool_kernel(xe_ref, xo_ref, w_ref, b_ref, o_ref, *, po, qo):
    """Fused relu(conv1 3x3) + 2x2 max-pool.

    xe/xo: (2*po+2, Cin, qo+1) bf16 even/odd column-parity planes of one image.
    w:     (3, 3, Cout, Cin)  bf16 per-tap weight matrices.
    b:     (Cout, 1)          f32.
    o:     (po, Cout, qo)     bf16 pooled output (H, C, W layout).
    """
    cout = w_ref.shape[2]
    planes = (xe_ref, xo_ref)

    def row_body(p, carry):
        # Load the 4 needed input rows from both column-parity planes once.
        rows = [[planes[c][2 * p + k] for c in (0, 1)] for k in range(4)]
        best = None
        # pooled[p, q] = relu(b + max_{r,s in {0,1}^2} conv_pre_bias[2p+r, 2q+s])
        # (ReLU and +bias are monotone, so the max can be taken pre-bias.)
        for r in (0, 1):
            for s in (0, 1):
                acc = jnp.zeros((cout, qo), jnp.float32)
                for dh in range(3):
                    for dw in range(3):
                        t = s + dw  # column shift; parity picks the plane
                        patch = rows[r + dh][t % 2][:, t // 2 : t // 2 + qo]
                        acc = acc + jnp.dot(
                            w_ref[dh, dw], patch,
                            preferred_element_type=jnp.float32)
                best = acc if best is None else jnp.maximum(best, acc)
        y = jnp.maximum(best + b_ref[...], 0.0)  # f32 bias + ReLU (VPU, v5e-safe)
        o_ref[p] = y.astype(o_ref.dtype)
        return carry

    jax.lax.fori_loop(0, po, row_body, 0)


def _conv3x3_relu_kernel(x_ref, w_ref, b_ref, o_ref, *, ho, wo):
    """relu(3x3 valid conv).  x: (Hi, Cin, Wi) bf16 -> o: (ho, Cout, wo)."""
    cout = w_ref.shape[2]

    def row_body(h, carry):
        acc = jnp.zeros((cout, wo), jnp.float32)
        for dh in range(3):
            row = x_ref[h + dh]  # (Cin, Wi)
            for dw in range(3):
                acc = acc + jnp.dot(w_ref[dh, dw], row[:, dw:dw + wo],
                                    preferred_element_type=jnp.float32)
        o_ref[h] = jnp.maximum(acc + b_ref[...], 0.0).astype(o_ref.dtype)
        return carry

    jax.lax.fori_loop(0, ho, row_body, 0)


def _conv3_heads_kernel(x_ref, w_ref, b_ref, wh_ref, bh_ref, o_ref, *, ho, wo):
    """relu(conv3 3x3) followed by the three fused 1x1 heads (2+4+10=16 ch).

    The 32-channel conv3 activation never leaves VMEM; only the 16-channel
    concatenated head output is written to HBM.
    """
    c3 = w_ref.shape[2]

    def row_body(h, carry):
        acc = jnp.zeros((c3, wo), jnp.float32)
        for dh in range(3):
            row = x_ref[h + dh]  # (C2, Wi)
            for dw in range(3):
                acc = acc + jnp.dot(w_ref[dh, dw], row[:, dw:dw + wo],
                                    preferred_element_type=jnp.float32)
        a = jnp.maximum(acc + b_ref[...], 0.0)  # (32, wo) f32
        heads = jnp.dot(wh_ref[...], a.astype(wh_ref.dtype),
                        preferred_element_type=jnp.float32) + bh_ref[...]
        o_ref[h] = heads.astype(o_ref.dtype)
        return carry

    jax.lax.fori_loop(0, ho, row_body, 0)


# ----------------------------------------------------------------------------
# pallas_call wrappers
# ----------------------------------------------------------------------------
def _conv1_pool_call(xe, xo, w_taps, bias, po, qo):
    n, hp, cin, qp = xe.shape
    cout = w_taps.shape[2]
    kern = functools.partial(_conv1_pool_kernel, po=po, qo=qo)
    return pl.pallas_call(
        kern,
        out_shape=jax.ShapeDtypeStruct((n, po, cout, qo), jnp.bfloat16),
        grid=(n,),
        in_specs=[
            pl.BlockSpec((None, hp, cin, qp), lambda b: (b, 0, 0, 0)),
            pl.BlockSpec((None, hp, cin, qp), lambda b: (b, 0, 0, 0)),
            pl.BlockSpec((3, 3, cout, cin), lambda b: (0, 0, 0, 0)),
            pl.BlockSpec((cout, 1), lambda b: (0, 0)),
        ],
        out_specs=pl.BlockSpec((None, po, cout, qo), lambda b: (b, 0, 0, 0)),
        compiler_params=_mosaic_params(),
    )(xe, xo, w_taps, bias)


def _conv3x3_call(x, w_taps, bias, out_dtype):
    n, hi, cin, wi = x.shape
    cout = w_taps.shape[2]
    ho, wo = hi - 2, wi - 2
    kern = functools.partial(_conv3x3_relu_kernel, ho=ho, wo=wo)
    return pl.pallas_call(
        kern,
        out_shape=jax.ShapeDtypeStruct((n, ho, cout, wo), out_dtype),
        grid=(n,),
        in_specs=[
            pl.BlockSpec((None, hi, cin, wi), lambda b: (b, 0, 0, 0)),
            pl.BlockSpec((3, 3, cout, cin), lambda b: (0, 0, 0, 0)),
            pl.BlockSpec((cout, 1), lambda b: (0, 0)),
        ],
        out_specs=pl.BlockSpec((None, ho, cout, wo), lambda b: (b, 0, 0, 0)),
        compiler_params=_mosaic_params(),
    )(x, w_taps, bias)


def _conv3_heads_call(x, w_taps, bias, w_heads, b_heads):
    n, hi, cin, wi = x.shape
    c3 = w_taps.shape[2]
    nheads = w_heads.shape[0]
    ho, wo = hi - 2, wi - 2
    kern = functools.partial(_conv3_heads_kernel, ho=ho, wo=wo)
    return pl.pallas_call(
        kern,
        out_shape=jax.ShapeDtypeStruct((n, ho, nheads, wo), jnp.float32),
        grid=(n,),
        in_specs=[
            pl.BlockSpec((None, hi, cin, wi), lambda b: (b, 0, 0, 0)),
            pl.BlockSpec((3, 3, c3, cin), lambda b: (0, 0, 0, 0)),
            pl.BlockSpec((c3, 1), lambda b: (0, 0)),
            pl.BlockSpec((nheads, c3), lambda b: (0, 0)),
            pl.BlockSpec((nheads, 1), lambda b: (0, 0)),
        ],
        out_specs=pl.BlockSpec((None, ho, nheads, wo), lambda b: (b, 0, 0, 0)),
        compiler_params=_mosaic_params(),
    )(x, w_taps, bias, w_heads, b_heads)


# ----------------------------------------------------------------------------
# Glue: weight prep + forward pass
# ----------------------------------------------------------------------------
def _prep_conv(w_oihw, b):
    # (O, I, kh, kw) -> (kh, kw, O, I): per-tap (Cout, Cin) matrices, bf16 for MXU.
    w_taps = jnp.transpose(w_oihw, (2, 3, 0, 1)).astype(jnp.bfloat16)
    return w_taps, b.astype(jnp.float32).reshape(-1, 1)


def _prep_heads(p):
    # Fuse the three 1x1 heads into one (16, 32) matrix: [face(2), bbox(4), lmk(10)].
    wh = jnp.concatenate(
        [p["wf"].reshape(2, 32), p["wb"].reshape(4, 32), p["wl"].reshape(10, 32)],
        axis=0,
    ).astype(jnp.bfloat16)
    bh = jnp.concatenate([p["bf"], p["bb"], p["bl"]]).astype(jnp.float32).reshape(-1, 1)
    return wh, bh


def pnet_forward(x_nchw, p):
    n, _, h, w = x_nchw.shape
    ho1, wo1 = h - 2, w - 2
    po, qo = ho1 // 2, wo1 // 2  # pooled conv1 spatial size (floor, like F.max_pool2d)

    # NCHW in (PyTorch convention) -> NHCW inside (W on the lane axis), bf16.
    x = jnp.transpose(x_nchw, (0, 2, 1, 3)).astype(jnp.bfloat16)
    # Column-parity planes of the 3-channel input so the fused 2x2 pool only
    # ever needs contiguous slices inside the kernel.
    xe = x[:, : 2 * po + 2, :, 0::2][..., : qo + 1]
    xo = x[:, : 2 * po + 2, :, 1::2][..., : qo + 1]

    w1, b1 = _prep_conv(p["w1"], p["b1"])
    w2, b2 = _prep_conv(p["w2"], p["b2"])
    w3, b3 = _prep_conv(p["w3"], p["b3"])
    wh, bh = _prep_heads(p)

    a1 = _conv1_pool_call(xe, xo, w1, b1, po, qo)      # (N, Po, 10, Qo)      bf16
    a2 = _conv3x3_call(a1, w2, b2, jnp.bfloat16)       # (N, Po-2, 16, Qo-2)  bf16
    heads = _conv3_heads_call(a2, w3, b3, wh, bh)      # (N, Ho3, 16, Wo3)    f32

    # torch.flatten(t, 1) on NCHW tensors => present heads as NCHW, then flatten.
    heads_nchw = jnp.transpose(heads, (0, 2, 1, 3))    # (N, 16, Ho3, Wo3)
    facedet = heads_nchw[:, 0:2].reshape(n, -1)
    bbox = heads_nchw[:, 2:6].reshape(n, -1)
    landmark = heads_nchw[:, 6:16].reshape(n, -1)
    return facedet, bbox, landmark


# ----------------------------------------------------------------------------
# Pure-JAX reference (mirrors the PyTorch forward exactly, f32)
# ----------------------------------------------------------------------------
def ref_forward(x, p):
    dn = ("NCHW", "OIHW", "NCHW")

    def conv(x, w, b):
        y = jax.lax.conv_general_dilated(x, w, (1, 1), "VALID", dimension_numbers=dn)
        return y + b.reshape(1, -1, 1, 1)

    x = jax.nn.relu(conv(x, p["w1"], p["b1"]))
    x = jax.lax.reduce_window(x, -jnp.inf, jax.lax.max, (1, 1, 2, 2), (1, 1, 2, 2), "VALID")
    x = jax.nn.relu(conv(x, p["w2"], p["b2"]))
    x = jax.nn.relu(conv(x, p["w3"], p["b3"]))
    fd = conv(x, p["wf"], p["bf"])
    bb = conv(x, p["wb"], p["bb"])
    lm = conv(x, p["wl"], p["bl"])
    f = lambda t: t.reshape(t.shape[0], -1)
    return f(fd), f(bb), f(lm)


# ----------------------------------------------------------------------------
def make_params(key):
    ks = jax.random.split(key, 12)
    w = lambda k, co, ci, kh, kw: 0.1 * jax.random.normal(k, (co, ci, kh, kw), jnp.float32)
    b = lambda k, co: 0.1 * jax.random.normal(k, (co,), jnp.float32)
    return {
        "w1": w(ks[0], 10, 3, 3, 3),  "b1": b(ks[1], 10),
        "w2": w(ks[2], 16, 10, 3, 3), "b2": b(ks[3], 16),
        "w3": w(ks[4], 32, 16, 3, 3), "b3": b(ks[5], 32),
        "wf": w(ks[6], 2, 32, 1, 1),  "bf": b(ks[7], 2),
        "wb": w(ks[8], 4, 32, 1, 1),  "bb": b(ks[9], 4),
        "wl": w(ks[10], 10, 32, 1, 1), "bl": b(ks[11], 10),
    }


if __name__ == "__main__":
    key = jax.random.PRNGKey(0)
    k_params, k_x = jax.random.split(key)
    params = make_params(k_params)
    x = jax.random.normal(k_x, (2, 3, 16, 16), jnp.float32)  # NCHW like PyTorch

    fwd = jax.jit(pnet_forward)
    facedet, bbox, landmark = fwd(x, params)
    jax.block_until_ready((facedet, bbox, landmark))

    assert facedet.shape == (2, 2 * 3 * 3)
    assert bbox.shape == (2, 4 * 3 * 3)
    assert landmark.shape == (2, 10 * 3 * 3)

    # Sanity check vs. a pure-f32 reference of the PyTorch forward.
    # Tolerance 2e-2 because MXU operands / inter-layer activations are bf16
    # (accumulation, bias, ReLU, max are all f32).
    rf, rb, rl = ref_forward(x, params)
    np.testing.assert_allclose(np.asarray(facedet), np.asarray(rf), rtol=2e-2, atol=2e-2)
    np.testing.assert_allclose(np.asarray(bbox), np.asarray(rb), rtol=2e-2, atol=2e-2)
    np.testing.assert_allclose(np.asarray(landmark), np.asarray(rl), rtol=2e-2, atol=2e-2)

    print("KERNEL_OK")
</pallas_src>

<mosaic_0001>
module attributes {stable_mosaic.version = 11 : i64} {
  func.func @_conv1_pool_kernel(%arg0: i32, %arg1: memref<1x16x3x8xbf16, #tpu.memory_space<vmem>>, %arg2: memref<1x16x3x8xbf16, #tpu.memory_space<vmem>>, %arg3: memref<3x3x10x3xbf16, #tpu.memory_space<vmem>>, %arg4: memref<10x1xf32, #tpu.memory_space<vmem>>, %arg5: memref<1x7x10x7xbf16, #tpu.memory_space<vmem>>) attributes {dimension_semantics = [#tpu.dimension_semantics<parallel>], iteration_bounds = array<i64: 2>, scalar_prefetch = 0 : i64, scratch_operands = 0 : i64, tpu.core_type = #tpu.core_type<tc>, window_params = [{transform_indices = @transform_0, window_bounds = array<i64: 1, 16, 3, 8>}, {transform_indices = @transform_1, window_bounds = array<i64: 1, 16, 3, 8>}, {pipeline_mode = #tpu.pipeline_mode<synchronous>, transform_indices = @transform_2, window_bounds = array<i64: 3, 3, 10, 3>}, {pipeline_mode = #tpu.pipeline_mode<synchronous>, transform_indices = @transform_3, window_bounds = array<i64: 10, 1>}, {transform_indices = @transform_4, window_bounds = array<i64: 1, 7, 10, 7>}]} {
    %c0_i32 = arith.constant 0 : i32
    %c7_i32 = arith.constant 7 : i32
    %0 = arith.addi %c0_i32, %c7_i32 : i32
    %c1_i32 = arith.constant 1 : i32
    scf.for %arg6 = %c0_i32 to %0 step %c1_i32  : i32 {
      %c2_i32 = arith.constant 2 : i32
      %1 = arith.muli %c2_i32, %arg6 : i32
      %c0_i32_1 = arith.constant 0 : i32
      %2 = arith.addi %1, %c0_i32_1 : i32
      %c0 = arith.constant 0 : index
      %3 = arith.index_cast %2 : i32 to index
      %c0_2 = arith.constant 0 : index
      %c0_3 = arith.constant 0 : index
      %4 = vector.load %arg1[%c0, %3, %c0_2, %c0_3] : memref<1x16x3x8xbf16, #tpu.memory_space<vmem>>, vector<1x1x3x8xbf16>
      %5 = vector.shape_cast %4 : vector<1x1x3x8xbf16> to vector<3x8xbf16>
      %c2_i32_4 = arith.constant 2 : i32
      %6 = arith.muli %c2_i32_4, %arg6 : i32
      %c0_i32_5 = arith.constant 0 : i32
      %7 = arith.addi %6, %c0_i32_5 : i32
      %c0_6 = arith.constant 0 : index
      %8 = arith.index_cast %7 : i32 to index
      %c0_7 = arith.constant 0 : index
      %c0_8 = arith.constant 0 : index
      %9 = vector.load %arg2[%c0_6, %8, %c0_7, %c0_8] : memref<1x16x3x8xbf16, #tpu.memory_space<vmem>>, vector<1x1x3x8xbf16>
      %10 = vector.shape_cast %9 : vector<1x1x3x8xbf16> to vector<3x8xbf16>
      %c2_i32_9 = arith.constant 2 : i32
      %11 = arith.muli %c2_i32_9, %arg6 : i32
      %c1_i32_10 = arith.constant 1 : i32
      %12 = arith.addi %11, %c1_i32_10 : i32
      %c0_11 = arith.constant 0 : index
      %13 = arith.index_cast %12 : i32 to index
      %c0_12 = arith.constant 0 : index
      %c0_13 = arith.constant 0 : index
      %14 = vector.load %arg1[%c0_11, %13, %c0_12, %c0_13] : memref<1x16x3x8xbf16, #tpu.memory_space<vmem>>, vector<1x1x3x8xbf16>
      %15 = vector.shape_cast %14 : vector<1x1x3x8xbf16> to vector<3x8xbf16>
      %c2_i32_14 = arith.constant 2 : i32
      %16 = arith.muli %c2_i32_14, %arg6 : i32
      %c1_i32_15 = arith.constant 1 : i32
      %17 = arith.addi %16, %c1_i32_15 : i32
      %c0_16 = arith.constant 0 : index
      %18 = arith.index_cast %17 : i32 to index
      %c0_17 = arith.constant 0 : index
      %c0_18 = arith.constant 0 : index
      %19 = vector.load %arg2[%c0_16, %18, %c0_17, %c0_18] : memref<1x16x3x8xbf16, #tpu.memory_space<vmem>>, vector<1x1x3x8xbf16>
      %20 = vector.shape_cast %19 : vector<1x1x3x8xbf16> to vector<3x8xbf16>
      %c2_i32_19 = arith.constant 2 : i32
      %21 = arith.muli %c2_i32_19, %arg6 : i32
      %c2_i32_20 = arith.constant 2 : i32
      %22 = arith.addi %21, %c2_i32_20 : i32
      %c0_21 = arith.constant 0 : index
      %23 = arith.index_cast %22 : i32 to index
      %c0_22 = arith.constant 0 : index
      %c0_23 = arith.constant 0 : index
      %24 = vector.load %arg1[%c0_21, %23, %c0_22, %c0_23] : memref<1x16x3x8xbf16, #tpu.memory_space<vmem>>, vector<1x1x3x8xbf16>
      %25 = vector.shape_cast %24 : vector<1x1x3x8xbf16> to vector<3x8xbf16>
      %c2_i32_24 = arith.constant 2 : i32
      %26 = arith.muli %c2_i32_24, %arg6 : i32
      %c2_i32_25 = arith.constant 2 : i32
      %27 = arith.addi %26, %c2_i32_25 : i32
      %c0_26 = arith.constant 0 : index
      %28 = arith.index_cast %27 : i32 to index
      %c0_27 = arith.constant 0 : index
      %c0_28 = arith.constant 0 : index
      %29 = vector.load %arg2[%c0_26, %28, %c0_27, %c0_28] : memref<1x16x3x8xbf16, #tpu.memory_space<vmem>>, vector<1x1x3x8xbf16>
      %30 = vector.shape_cast %29 : vector<1x1x3x8xbf16> to vector<3x8xbf16>
      %c2_i32_29 = arith.constant 2 : i32
      %31 = arith.muli %c2_i32_29, %arg6 : i32
      %c3_i32 = arith.constant 3 : i32
      %32 = arith.addi %31, %c3_i32 : i32
      %c0_30 = arith.constant 0 : index
      %33 = arith.index_cast %32 : i32 to index
      %c0_31 = arith.constant 0 : index
      %c0_32 = arith.constant 0 : index
      %34 = vector.load %arg1[%c0_30, %33, %c0_31, %c0_32] : memref<1x16x3x8xbf16, #tpu.memory_space<vmem>>, vector<1x1x3x8xbf16>
      %35 = vector.shape_cast %34 : vector<1x1x3x8xbf16> to vector<3x8xbf16>
      %c2_i32_33 = arith.constant 2 : i32
      %36 = arith.muli %c2_i32_33, %arg6 : i32
      %c3_i32_34 = arith.constant 3 : i32
      %37 = arith.addi %36, %c3_i32_34 : i32
      %c0_35 = arith.constant 0 : index
      %38 = arith.index_cast %37 : i32 to index
      %c0_36 = arith.constant 0 : index
      %c0_37 = arith.constant 0 : index
      %39 = vector.load %arg2[%c0_35, %38, %c0_36, %c0_37] : memref<1x16x3x8xbf16, #tpu.memory_space<vmem>>, vector<1x1x3x8xbf16>
      %40 = vector.shape_cast %39 : vector<1x1x3x8xbf16> to vector<3x8xbf16>
      %cst = arith.constant 0.000000e+00 : f32
      %41 = vector.broadcast %cst : f32 to vector<10x7xf32>
      %42 = vector.extract_strided_slice %5 {offsets = [0, 0], sizes = [3, 7], strides = [1, 1]} : vector<3x8xbf16> to vector<3x7xbf16>
      %c0_38 = arith.constant 0 : index
      %c0_39 = arith.constant 0 : index
      %c0_40 = arith.constant 0 : index
      %c0_41 = arith.constant 0 : index
      %43 = vector.load %arg3[%c0_38, %c0_39, %c0_40, %c0_41] : memref<3x3x10x3xbf16, #tpu.memory_space<vmem>>, vector<1x1x10x3xbf16>
      %44 = vector.shape_cast %43 : vector<1x1x10x3xbf16> to vector<10x3xbf16>
      %cst_42 = arith.constant dense<0.000000e+00> : vector<10x7xf32>
      %45 = tpu.matmul %44, %42, %cst_42 {dimension_numbers = #tpu.dot_dimension_numbers<[1], [0], [0], [1], [0, 0, 1, 1], [], []>} : vector<10x3xbf16>, vector<3x7xbf16>, vector<10x7xf32> -> vector<10x7xf32>
      %46 = arith.addf %41, %45 : vector<10x7xf32>
      %47 = vector.extract_strided_slice %10 {offsets = [0, 0], sizes = [3, 7], strides = [1, 1]} : vector<3x8xbf16> to vector<3x7xbf16>
      %c0_43 = arith.constant 0 : index
      %c1 = arith.constant 1 : index
      %c0_44 = arith.constant 0 : index
      %c0_45 = arith.constant 0 : index
      %48 = vector.load %arg3[%c0_43, %c1, %c0_44, %c0_45] : memref<3x3x10x3xbf16, #tpu.memory_space<vmem>>, vector<1x1x10x3xbf16>
      %49 = vector.shape_cast %48 : vector<1x1x10x3xbf16> to vector<10x3xbf16>
      %cst_46 = arith.constant dense<0.000000e+00> : vector<10x7xf32>
      %50 = tpu.matmul %49, %47, %cst_46 {dimension_numbers = #tpu.dot_dimension_numbers<[1], [0], [0], [1], [0, 0, 1, 1], [], []>} : vector<10x3xbf16>, vector<3x7xbf16>, vector<10x7xf32> -> vector<10x7xf32>
      %51 = arith.addf %46, %50 : vector<10x7xf32>
      %52 = vector.extract_strided_slice %5 {offsets = [0, 1], sizes = [3, 7], strides = [1, 1]} : vector<3x8xbf16> to vector<3x7xbf16>
      %c0_47 = arith.constant 0 : index
      %c2 = arith.constant 2 : index
      %c0_48 = arith.constant 0 : index
      %c0_49 = arith.constant 0 : index
      %53 = vector.load %arg3[%c0_47, %c2, %c0_48, %c0_49] : memref<3x3x10x3xbf16, #tpu.memory_space<vmem>>, vector<1x1x10x3xbf16>
      %54 = vector.shape_cast %53 : vector<1x1x10x3xbf16> to vector<10x3xbf16>
      %cst_50 = arith.constant dense<0.000000e+00> : vector<10x7xf32>
      %55 = tpu.matmul %54, %52, %cst_50 {dimension_numbers = #tpu.dot_dimension_numbers<[1], [0], [0], [1], [0, 0, 1, 1], [], []>} : vector<10x3xbf16>, vector<3x7xbf16>, vector<10x7xf32> -> vector<10x7xf32>
      %56 = arith.addf %51, %55 : vector<10x7xf32>
      %57 = vector.extract_strided_slice %15 {offsets = [0, 0], sizes = [3, 7], strides = [1, 1]} : vector<3x8xbf16> to vector<3x7xbf16>
      %c1_51 = arith.constant 1 : index
      %c0_52 = arith.constant 0 : index
      %c0_53 = arith.constant 0 : index
      %c0_54 = arith.constant 0 : index
      %58 = vector.load %arg3[%c1_51, %c0_52, %c0_53, %c0_54] : memref<3x3x10x3xbf16, #tpu.memory_space<vmem>>, vector<1x1x10x3xbf16>
      %59 = vector.shape_cast %58 : vector<1x1x10x3xbf16> to vector<10x3xbf16>
      %cst_55 = arith.constant dense<0.000000e+00> : vector<10x7xf32>
      %60 = tpu.matmul %59, %57, %cst_55 {dimension_numbers = #tpu.dot_dimension_numbers<[1], [0], [0], [1], [0, 0, 1, 1], [], []>} : vector<10x3xbf16>, vector<3x7xbf16>, vector<10x7xf32> -> vector<10x7xf32>
      %61 = arith.addf %56, %60 : vector<10x7xf32>
      %62 = vector.extract_strided_slice %20 {offsets = [0, 0], sizes = [3, 7], strides = [1, 1]} : vector<3x8xbf16> to vector<3x7xbf16>
      %c1_56 = arith.constant 1 : index
      %c1_57 = arith.constant 1 : index
      %c0_58 = arith.constant 0 : index
      %c0_59 = arith.constant 0 : index
      %63 = vector.load %arg3[%c1_56, %c1_57, %c0_58, %c0_59] : memref<3x3x10x3xbf16, #tpu.memory_space<vmem>>, vector<1x1x10x3xbf16>
      %64 = vector.shape_cast %63 : vector<1x1x10x3xbf16> to vector<10x3xbf16>
      %cst_60 = arith.constant dense<0.000000e+00> : vector<10x7xf32>
      %65 = tpu.matmul %64, %62, %cst_60 {dimension_numbers = #tpu.dot_dimension_numbers<[1], [0], [0], [1], [0, 0, 1, 1], [], []>} : vector<10x3xbf16>, vector<3x7xbf16>, vector<10x7xf32> -> vector<10x7xf32>
      %66 = arith.addf %61, %65 : vector<10x7xf32>
      %67 = vector.extract_strided_slice %15 {offsets = [0, 1], sizes = [3, 7], strides = [1, 1]} : vector<3x8xbf16> to vector<3x7xbf16>
      %c1_61 = arith.constant 1 : index
      %c2_62 = arith.constant 2 : index
      %c0_63 = arith.constant 0 : index
      %c0_64 = arith.constant 0 : index
      %68 = vector.load %arg3[%c1_61, %c2_62, %c0_63, %c0_64] : memref<3x3x10x3xbf16, #tpu.memory_space<vmem>>, vector<1x1x10x3xbf16>
      %69 = vector.shape_cast %68 : vector<1x1x10x3xbf16> to vector<10x3xbf16>
      %cst_65 = arith.constant dense<0.000000e+00> : vector<10x7xf32>
      %70 = tpu.matmul %69, %67, %cst_65 {dimension_numbers = #tpu.dot_dimension_numbers<[1], [0], [0], [1], [0, 0, 1, 1], [], []>} : vector<10x3xbf16>, vector<3x7xbf16>, vector<10x7xf32> -> vector<10x7xf32>
      %71 = arith.addf %66, %70 : vector<10x7xf32>
      %72 = vector.extract_strided_slice %25 {offsets = [0, 0], sizes = [3, 7], strides = [1, 1]} : vector<3x8xbf16> to vector<3x7xbf16>
      %c2_66 = arith.constant 2 : index
      %c0_67 = arith.constant 0 : index
      %c0_68 = arith.constant 0 : index
      %c0_69 = arith.constant 0 : index
      %73 = vector.load %arg3[%c2_66, %c0_67, %c0_68, %c0_69] : memref<3x3x10x3xbf16, #tpu.memory_space<vmem>>, vector<1x1x10x3xbf16>
      %74 = vector.shape_cast %73 : vector<1x1x10x3xbf16> to vector<10x3xbf16>
      %cst_70 = arith.constant dense<0.000000e+00> : vector<10x7xf32>
      %75 = tpu.matmul %74, %72, %cst_70 {dimension_numbers = #tpu.dot_dimension_numbers<[1], [0], [0], [1], [0, 0, 1, 1], [], []>} : vector<10x3xbf16>, vector<3x7xbf16>, vector<10x7xf32> -> vector<10x7xf32>
      %76 = arith.addf %71, %75 : vector<10x7xf32>
      %77 = vector.extract_strided_slice %30 {offsets = [0, 0], sizes = [3, 7], strides = [1, 1]} : vector<3x8xbf16> to vector<3x7xbf16>
      %c2_71 = arith.constant 2 : index
      %c1_72 = arith.constant 1 : index
      %c0_73 = arith.constant 0 : index
      %c0_74 = arith.constant 0 : index
      %78 = vector.load %arg3[%c2_71, %c1_72, %c0_73, %c0_74] : memref<3x3x10x3xbf16, #tpu.memory_space<vmem>>, vector<1x1x10x3xbf16>
      %79 = vector.shape_cast %78 : vector<1x1x10x3xbf16> to vector<10x3xbf16>
      %cst_75 = arith.constant dense<0.000000e+00> : vector<10x7xf32>
      %80 = tpu.matmul %79, %77, %cst_75 {dimension_numbers = #tpu.dot_dimension_numbers<[1], [0], [0], [1], [0, 0, 1, 1], [], []>} : vector<10x3xbf16>, vector<3x7xbf16>, vector<10x7xf32> -> vector<10x7xf32>
      %81 = arith.addf %76, %80 : vector<10x7xf32>
      %82 = vector.extract_strided_slice %25 {offsets = [0, 1], sizes = [3, 7], strides = [1, 1]} : vector<3x8xbf16> to vector<3x7xbf16>
      %c2_76 = arith.constant 2 : index
      %c2_77 = arith.constant 2 : index
      %c0_78 = arith.constant 0 : index
      %c0_79 = arith.constant 0 : index
      %83 = vector.load %arg3[%c2_76, %c2_77, %c0_78, %c0_79] : memref<3x3x10x3xbf16, #tpu.memory_space<vmem>>, vector<1x1x10x3xbf16>
      %84 = vector.shape_cast %83 : vector<1x1x10x3xbf16> to vector<10x3xbf16>
      %cst_80 = arith.constant dense<0.000000e+00> : vector<10x7xf32>
      %85 = tpu.matmul %84, %82, %cst_80 {dimension_numbers = #tpu.dot_dimension_numbers<[1], [0], [0], [1], [0, 0, 1, 1], [], []>} : vector<10x3xbf16>, vector<3x7xbf16>, vector<10x7xf32> -> vector<10x7xf32>
      %86 = arith.addf %81, %85 : vector<10x7xf32>
      %cst_81 = arith.constant 0.000000e+00 : f32
      %87 = vector.broadcast %cst_81 : f32 to vector<10x7xf32>
      %88 = vector.extract_strided_slice %10 {offsets = [0, 0], sizes = [3, 7], strides = [1, 1]} : vector<3x8xbf16> to vector<3x7xbf16>
      %c0_82 = arith.constant 0 : index
      %c0_83 = arith.constant 0 : index
      %c0_84 = arith.constant 0 : index
      %c0_85 = arith.constant 0 : index
      %89 = vector.load %arg3[%c0_82, %c0_83, %c0_84, %c0_85] : memref<3x3x10x3xbf16, #tpu.memory_space<vmem>>, vector<1x1x10x3xbf16>
      %90 = vector.shape_cast %89 : vector<1x1x10x3xbf16> to vector<10x3xbf16>
      %cst_86 = arith.constant dense<0.000000e+00> : vector<10x7xf32>
      %91 = tpu.matmul %90, %88, %cst_86 {dimension_numbers = #tpu.dot_dimension_numbers<[1], [0], [0], [1], [0, 0, 1, 1], [], []>} : vector<10x3xbf16>, vector<3x7xbf16>, vector<10x7xf32> -> vector<10x7xf32>
      %92 = arith.addf %87, %91 : vector<10x7xf32>
      %93 = vector.extract_strided_slice %5 {offsets = [0, 1], sizes = [3, 7], strides = [1, 1]} : vector<3x8xbf16> to vector<3x7xbf16>
      %c0_87 = arith.constant 0 : index
      %c1_88 = arith.constant 1 : index
      %c0_89 = arith.constant 0 : index
      %c0_90 = arith.constant 0 : index
      %94 = vector.load %arg3[%c0_87, %c1_88, %c0_89, %c0_90] : memref<3x3x10x3xbf16, #tpu.memory_space<vmem>>, vector<1x1x10x3xbf16>
      %95 = vector.shape_cast %94 : vector<1x1x10x3xbf16> to vector<10x3xbf16>
      %cst_91 = arith.constant dense<0.000000e+00> : vector<10x7xf32>
      %96 = tpu.matmul %95, %93, %cst_91 {dimension_numbers = #tpu.dot_dimension_numbers<[1], [0], [0], [1], [0, 0, 1, 1], [], []>} : vector<10x3xbf16>, vector<3x7xbf16>, vector<10x7xf32> -> vector<10x7xf32>
      %97 = arith.addf %92, %96 : vector<10x7xf32>
      %98 = vector.extract_strided_slice %10 {offsets = [0, 1], sizes = [3, 7], strides = [1, 1]} : vector<3x8xbf16> to vector<3x7xbf16>
      %c0_92 = arith.constant 0 : index
      %c2_93 = arith.constant 2 : index
      %c0_94 = arith.constant 0 : index
      %c0_95 = arith.constant 0 : index
      %99 = vector.load %arg3[%c0_92, %c2_93, %c0_94, %c0_95] : memref<3x3x10x3xbf16, #tpu.memory_space<vmem>>, vector<1x1x10x3xbf16>
      %100 = vector.shape_cast %99 : vector<1x1x10x3xbf16> to vector<10x3xbf16>
      %cst_96 = arith.constant dense<0.000000e+00> : vector<10x7xf32>
      %101 = tpu.matmul %100, %98, %cst_96 {dimension_numbers = #tpu.dot_dimension_numbers<[1], [0], [0], [1], [0, 0, 1, 1], [], []>} : vector<10x3xbf16>, vector<3x7xbf16>, vector<10x7xf32> -> vector<10x7xf32>
      %102 = arith.addf %97, %101 : vector<10x7xf32>
      %103 = vector.extract_strided_slice %20 {offsets = [0, 0], sizes = [3, 7], strides = [1, 1]} : vector<3x8xbf16> to vector<3x7xbf16>
      %c1_97 = arith.constant 1 : index
      %c0_98 = arith.constant 0 : index
      %c0_99 = arith.constant 0 : index
      %c0_100 = arith.constant 0 : index
      %104 = vector.load %arg3[%c1_97, %c0_98, %c0_99, %c0_100] : memref<3x3x10x3xbf16, #tpu.memory_space<vmem>>, vector<1x1x10x3xbf16>
      %105 = vector.shape_cast %104 : vector<1x1x10x3xbf16> to vector<10x3xbf16>
      %cst_101 = arith.constant dense<0.000000e+00> : vector<10x7xf32>
      %106 = tpu.matmul %105, %103, %cst_101 {dimension_numbers = #tpu.dot_dimension_numbers<[1], [0], [0], [1], [0, 0, 1, 1], [], []>} : vector<10x3xbf16>, vector<3x7xbf16>, vector<10x7xf32> -> vector<10x7xf32>
      %107 = arith.addf %102, %106 : vector<10x7xf32>
      %108 = vector.extract_strided_slice %15 {offsets = [0, 1], sizes = [3, 7], strides = [1, 1]} : vector<3x8xbf16> to vector<3x7xbf16>
      %c1_102 = arith.constant 1 : index
      %c1_103 = arith.constant 1 : index
      %c0_104 = arith.constant 0 : index
      %c0_105 = arith.constant 0 : index
      %109 = vector.load %arg3[%c1_102, %c1_103, %c0_104, %c0_105] : memref<3x3x10x3xbf16, #tpu.memory_space<vmem>>, vector<1x1x10x3xbf16>
      %110 = vector.shape_cast %109 : vector<1x1x10x3xbf16> to vector<10x3xbf16>
      %cst_106 = arith.constant dense<0.000000e+00> : vector<10x7xf32>
      %111 = tpu.matmul %110, %108, %cst_106 {dimension_numbers = #tpu.dot_dimension_numbers<[1], [0], [0], [1], [0, 0, 1, 1], [], []>} : vector<10x3xbf16>, vector<3x7xbf16>, vector<10x7xf32> -> vector<10x7xf32>
      %112 = arith.addf %107, %111 : vector<10x7xf32>
      %113 = vector.extract_strided_slice %20 {offsets = [0, 1], sizes = [3, 7], strides = [1, 1]} : vector<3x8xbf16> to vector<3x7xbf16>
      %c1_107 = arith.constant 1 : index
      %c2_108 = arith.constant 2 : index
      %c0_109 = arith.constant 0 : index
      %c0_110 = arith.constant 0 : index
      %114 = vector.load %arg3[%c1_107, %c2_108, %c0_109, %c0_110] : memref<3x3x10x3xbf16, #tpu.memory_space<vmem>>, vector<1x1x10x3xbf16>
      %115 = vector.shape_cast %114 : vector<1x1x10x3xbf16> to vector<10x3xbf16>
      %cst_111 = arith.constant dense<0.000000e+00> : vector<10x7xf32>
      %116 = tpu.matmul %115, %113, %cst_111 {dimension_numbers = #tpu.dot_dimension_numbers<[1], [0], [0], [1], [0, 0, 1, 1], [], []>} : vector<10x3xbf16>, vector<3x7xbf16>, vector<10x7xf32> -> vector<10x7xf32>
      %117 = arith.addf %112, %116 : vector<10x7xf32>
      %118 = vector.extract_strided_slice %30 {offsets = [0, 0], sizes = [3, 7], strides = [1, 1]} : vector<3x8xbf16> to vector<3x7xbf16>
      %c2_112 = arith.constant 2 : index
      %c0_113 = arith.constant 0 : index
      %c0_114 = arith.constant 0 : index
      %c0_115 = arith.constant 0 : index
      %119 = vector.load %arg3[%c2_112, %c0_113, %c0_114, %c0_115] : memref<3x3x10x3xbf16, #tpu.memory_space<vmem>>, vector<1x1x10x3xbf16>
      %120 = vector.shape_cast %119 : vector<1x1x10x3xbf16> to vector<10x3xbf16>
      %cst_116 = arith.constant dense<0.000000e+00> : vector<10x7xf32>
      %121 = tpu.matmul %120, %118, %cst_116 {dimension_numbers = #tpu.dot_dimension_numbers<[1], [0], [0], [1], [0, 0, 1, 1], [], []>} : vector<10x3xbf16>, vector<3x7xbf16>, vector<10x7xf32> -> vector<10x7xf32>
      %122 = arith.addf %117, %121 : vector<10x7xf32>
      %123 = vector.extract_strided_slice %25 {offsets = [0, 1], sizes = [3, 7], strides = [1, 1]} : vector<3x8xbf16> to vector<3x7xbf16>
      %c2_117 = arith.constant 2 : index
      %c1_118 = arith.constant 1 : index
      %c0_119 = arith.constant 0 : index
      %c0_120 = arith.constant 0 : index
      %124 = vector.load %arg3[%c2_117, %c1_118, %c0_119, %c0_120] : memref<3x3x10x3xbf16, #tpu.memory_space<vmem>>, vector<1x1x10x3xbf16>
      %125 = vector.shape_cast %124 : vector<1x1x10x3xbf16> to vector<10x3xbf16>
      %cst_121 = arith.constant dense<0.000000e+00> : vector<10x7xf32>
      %126 = tpu.matmul %125, %123, %cst_121 {dimension_numbers = #tpu.dot_dimension_numbers<[1], [0], [0], [1], [0, 0, 1, 1], [], []>} : vector<10x3xbf16>, vector<3x7xbf16>, vector<10x7xf32> -> vector<10x7xf32>
      %127 = arith.addf %122, %126 : vector<10x7xf32>
      %128 = vector.extract_strided_slice %30 {offsets = [0, 1], sizes = [3, 7], strides = [1, 1]} : vector<3x8xbf16> to vector<3x7xbf16>
      %c2_122 = arith.constant 2 : index
      %c2_123 = arith.constant 2 : index
      %c0_124 = arith.constant 0 : index
      %c0_125 = arith.constant 0 : index
      %129 = vector.load %arg3[%c2_122, %c2_123, %c0_124, %c0_125] : memref<3x3x10x3xbf16, #tpu.memory_space<vmem>>, vector<1x1x10x3xbf16>
      %130 = vector.shape_cast %129 : vector<1x1x10x3xbf16> to vector<10x3xbf16>
      %cst_126 = arith.constant dense<0.000000e+00> : vector<10x7xf32>
      %131 = tpu.matmul %130, %128, %cst_126 {dimension_numbers = #tpu.dot_dimension_numbers<[1], [0], [0], [1], [0, 0, 1, 1], [], []>} : vector<10x3xbf16>, vector<3x7xbf16>, vector<10x7xf32> -> vector<10x7xf32>
      %132 = arith.addf %127, %131 : vector<10x7xf32>
      %133 = arith.maximumf %86, %132 : vector<10x7xf32>
      %cst_127 = arith.constant 0.000000e+00 : f32
      %134 = vector.broadcast %cst_127 : f32 to vector<10x7xf32>
      %135 = vector.extract_strided_slice %15 {offsets = [0, 0], sizes = [3, 7], strides = [1, 1]} : vector<3x8xbf16> to vector<3x7xbf16>
      %c0_128 = arith.constant 0 : index
      %c0_129 = arith.constant 0 : index
      %c0_130 = arith.constant 0 : index
      %c0_131 = arith.constant 0 : index
      %136 = vector.load %arg3[%c0_128, %c0_129, %c0_130, %c0_131] : memref<3x3x10x3xbf16, #tpu.memory_space<vmem>>, vector<1x1x10x3xbf16>
      %137 = vector.shape_cast %136 : vector<1x1x10x3xbf16> to vector<10x3xbf16>
      %cst_132 = arith.constant dense<0.000000e+00> : vector<10x7xf32>
      %138 = tpu.matmul %137, %135, %cst_132 {dimension_numbers = #tpu.dot_dimension_numbers<[1], [0], [0], [1], [0, 0, 1, 1], [], []>} : vector<10x3xbf16>, vector<3x7xbf16>, vector<10x7xf32> -> vector<10x7xf32>
      %139 = arith.addf %134, %138 : vector<10x7xf32>
      %140 = vector.extract_strided_slice %20 {offsets = [0, 0], sizes = [3, 7], strides = [1, 1]} : vector<3x8xbf16> to vector<3x7xbf16>
      %c0_133 = arith.constant 0 : index
      %c1_134 = arith.constant 1 : index
      %c0_135 = arith.constant 0 : index
      %c0_136 = arith.constant 0 : index
      %141 = vector.load %arg3[%c0_133, %c1_134, %c0_135, %c0_136] : memref<3x3x10x3xbf16, #tpu.memory_space<vmem>>, vector<1x1x10x3xbf16>
      %142 = vector.shape_cast %141 : vector<1x1x10x3xbf16> to vector<10x3xbf16>
      %cst_137 = arith.constant dense<0.000000e+00> : vector<10x7xf32>
      %143 = tpu.matmul %142, %140, %cst_137 {dimension_numbers = #tpu.dot_dimension_numbers<[1], [0], [0], [1], [0, 0, 1, 1], [], []>} : vector<10x3xbf16>, vector<3x7xbf16>, vector<10x7xf32> -> vector<10x7xf32>
      %144 = arith.addf %139, %143 : vector<10x7xf32>
      %145 = vector.extract_strided_slice %15 {offsets = [0, 1], sizes = [3, 7], strides = [1, 1]} : vector<3x8xbf16> to vector<3x7xbf16>
      %c0_138 = arith.constant 0 : index
      %c2_139 = arith.constant 2 : index
      %c0_140 = arith.constant 0 : index
      %c0_141 = arith.constant 0 : index
      %146 = vector.load %arg3[%c0_138, %c2_139, %c0_140, %c0_141] : memref<3x3x10x3xbf16, #tpu.memory_space<vmem>>, vector<1x1x10x3xbf16>
      %147 = vector.shape_cast %146 : vector<1x1x10x3xbf16> to vector<10x3xbf16>
      %cst_142 = arith.constant dense<0.000000e+00> : vector<10x7xf32>
      %148 = tpu.matmul %147, %145, %cst_142 {dimension_numbers = #tpu.dot_dimension_numbers<[1], [0], [0], [1], [0, 0, 1, 1], [], []>} : vector<10x3xbf16>, vector<3x7xbf16>, vector<10x7xf32> -> vector<10x7xf32>
      %149 = arith.addf %144, %148 : vector<10x7xf32>
      %150 = vector.extract_strided_slice %25 {offsets = [0, 0], sizes = [3, 7], strides = [1, 1]} : vector<3x8xbf16> to vector<3x7xbf16>
      %c1_143 = arith.constant 1 : index
      %c0_144 = arith.constant 0 : index
      %c0_145 = arith.constant 0 : index
      %c0_146 = arith.constant 0 : index
      %151 = vector.load %arg3[%c1_143, %c0_144, %c0_145, %c0_146] : memref<3x3x10x3xbf16, #tpu.memory_space<vmem>>, vector<1x1x10x3xbf16>
      %152 = vector.shape_cast %151 : vector<1x1x10x3xbf16> to vector<10x3xbf16>
      %cst_147 = arith.constant dense<0.000000e+00> : vector<10x7xf32>
      %153 = tpu.matmul %152, %150, %cst_147 {dimension_numbers = #tpu.dot_dimension_numbers<[1], [0], [0], [1], [0, 0, 1, 1], [], []>} : vector<10x3xbf16>, vector<3x7xbf16>, vector<10x7xf32> -> vector<10x7xf32>
      %154 = arith.addf %149, %153 : vector<10x7xf32>
      %155 = vector.extract_strided_slice %30 {offsets = [0, 0], sizes = [3, 7], strides = [1, 1]} : vector<3x8xbf16> to vector<3x7xbf16>
      %c1_148 = arith.constant 1 : index
      %c1_149 = arith.constant 1 : index
      %c0_150 = arith.constant 0 : index
      %c0_151 = arith.constant 0 : index
      %156 = vector.load %arg3[%c1_148, %c1_149, %c0_150, %c0_151] : memref<3x3x10x3xbf16, #tpu.memory_space<vmem>>, vector<1x1x10x3xbf16>
      %157 = vector.shape_cast %156 : vector<1x1x10x3xbf16> to vector<10x3xbf16>
      %cst_152 = arith.constant dense<0.000000e+00> : vector<10x7xf32>
      %158 = tpu.matmul %157, %155, %cst_152 {dimension_numbers = #tpu.dot_dimension_numbers<[1], [0], [0], [1], [0, 0, 1, 1], [], []>} : vector<10x3xbf16>, vector<3x7xbf16>, vector<10x7xf32> -> vector<10x7xf32>
      %159 = arith.addf %154, %158 : vector<10x7xf32>
      %160 = vector.extract_strided_slice %25 {offsets = [0, 1], sizes = [3, 7], strides = [1, 1]} : vector<3x8xbf16> to vector<3x7xbf16>
      %c1_153 = arith.constant 1 : index
      %c2_154 = arith.constant 2 : index
      %c0_155 = arith.constant 0 : index
      %c0_156 = arith.constant 0 : index
      %161 = vector.load %arg3[%c1_153, %c2_154, %c0_155, %c0_156] : memref<3x3x10x3xbf16, #tpu.memory_space<vmem>>, vector<1x1x10x3xbf16>
      %162 = vector.shape_cast %161 : vector<1x1x10x3xbf16> to vector<10x3xbf16>
      %cst_157 = arith.constant dense<0.000000e+00> : vector<10x7xf32>
      %163 = tpu.matmul %162, %160, %cst_157 {dimension_numbers = #tpu.dot_dimension_numbers<[1], [0], [0], [1], [0, 0, 1, 1], [], []>} : vector<10x3xbf16>, vector<3x7xbf16>, vector<10x7xf32> -> vector<10x7xf32>
      %164 = arith.addf %159, %163 : vector<10x7xf32>
      %165 = vector.extract_strided_slice %35 {offsets = [0, 0], sizes = [3, 7], strides = [1, 1]} : vector<3x8xbf16> to vector<3x7xbf16>
      %c2_158 = arith.constant 2 : index
      %c0_159 = arith.constant 0 : index
      %c0_160 = arith.constant 0 : index
      %c0_161 = arith.constant 0 : index
      %166 = vector.load %arg3[%c2_158, %c0_159, %c0_160, %c0_161] : memref<3x3x10x3xbf16, #tpu.memory_space<vmem>>, vector<1x1x10x3xbf16>
      %167 = vector.shape_cast %166 : vector<1x1x10x3xbf16> to vector<10x3xbf16>
      %cst_162 = arith.constant dense<0.000000e+00> : vector<10x7xf32>
      %168 = tpu.matmul %167, %165, %cst_162 {dimension_numbers = #tpu.dot_dimension_numbers<[1], [0], [0], [1], [0, 0, 1, 1], [], []>} : vector<10x3xbf16>, vector<3x7xbf16>, vector<10x7xf32> -> vector<10x7xf32>
      %169 = arith.addf %164, %168 : vector<10x7xf32>
      %170 = vector.extract_strided_slice %40 {offsets = [0, 0], sizes = [3, 7], strides = [1, 1]} : vector<3x8xbf16> to vector<3x7xbf16>
      %c2_163 = arith.constant 2 : index
      %c1_164 = arith.constant 1 : index
      %c0_165 = arith.constant 0 : index
      %c0_166 = arith.constant 0 : index
      %171 = vector.load %arg3[%c2_163, %c1_164, %c0_165, %c0_166] : memref<3x3x10x3xbf16, #tpu.memory_space<vmem>>, vector<1x1x10x3xbf16>
      %172 = vector.shape_cast %171 : vector<1x1x10x3xbf16> to vector<10x3xbf16>
      %cst_167 = arith.constant dense<0.000000e+00> : vector<10x7xf32>
      %173 = tpu.matmul %172, %170, %cst_167 {dimension_numbers = #tpu.dot_dimension_numbers<[1], [0], [0], [1], [0, 0, 1, 1], [], []>} : vector<10x3xbf16>, vector<3x7xbf16>, vector<10x7xf32> -> vector<10x7xf32>
      %174 = arith.addf %169, %173 : vector<10x7xf32>
      %175 = vector.extract_strided_slice %35 {offsets = [0, 1], sizes = [3, 7], strides = [1, 1]} : vector<3x8xbf16> to vector<3x7xbf16>
      %c2_168 = arith.constant 2 : index
      %c2_169 = arith.constant 2 : index
      %c0_170 = arith.constant 0 : index
      %c0_171 = arith.constant 0 : index
      %176 = vector.load %arg3[%c2_168, %c2_169, %c0_170, %c0_171] : memref<3x3x10x3xbf16, #tpu.memory_space<vmem>>, vector<1x1x10x3xbf16>
      %177 = vector.shape_cast %176 : vector<1x1x10x3xbf16> to vector<10x3xbf16>
      %cst_172 = arith.constant dense<0.000000e+00> : vector<10x7xf32>
      %178 = tpu.matmul %177, %175, %cst_172 {dimension_numbers = #tpu.dot_dimension_numbers<[1], [0], [0], [1], [0, 0, 1, 1], [], []>} : vector<10x3xbf16>, vector<3x7xbf16>, vector<10x7xf32> -> vector<10x7xf32>
      %179 = arith.addf %174, %178 : vector<10x7xf32>
      %180 = arith.maximumf %133, %179 : vector<10x7xf32>
      %cst_173 = arith.constant 0.000000e+00 : f32
      %181 = vector.broadcast %cst_173 : f32 to vector<10x7xf32>
      %182 = vector.extract_strided_slice %20 {offsets = [0, 0], sizes = [3, 7], strides = [1, 1]} : vector<3x8xbf16> to vector<3x7xbf16>
      %c0_174 = arith.constant 0 : index
      %c0_175 = arith.constant 0 : index
      %c0_176 = arith.constant 0 : index
      %c0_177 = arith.constant 0 : index
      %183 = vector.load %arg3[%c0_174, %c0_175, %c0_176, %c0_177] : memref<3x3x10x3xbf16, #tpu.memory_space<vmem>>, vector<1x1x10x3xbf16>
      %184 = vector.shape_cast %183 : vector<1x1x10x3xbf16> to vector<10x3xbf16>
      %cst_178 = arith.constant dense<0.000000e+00> : vector<10x7xf32>
      %185 = tpu.matmul %184, %182, %cst_178 {dimension_numbers = #tpu.dot_dimension_numbers<[1], [0], [0], [1], [0, 0, 1, 1], [], []>} : vector<10x3xbf16>, vector<3x7xbf16>, vector<10x7xf32> -> vector<10x7xf32>
      %186 = arith.addf %181, %185 : vector<10x7xf32>
      %187 = vector.extract_strided_slice %15 {offsets = [0, 1], sizes = [3, 7], strides = [1, 1]} : vector<3x8xbf16> to vector<3x7xbf16>
      %c0_179 = arith.constant 0 : index
      %c1_180 = arith.constant 1 : index
      %c0_181 = arith.constant 0 : index
      %c0_182 = arith.constant 0 : index
      %188 = vector.load %arg3[%c0_179, %c1_180, %c0_181, %c0_182] : memref<3x3x10x3xbf16, #tpu.memory_space<vmem>>, vector<1x1x10x3xbf16>
      %189 = vector.shape_cast %188 : vector<1x1x10x3xbf16> to vector<10x3xbf16>
      %cst_183 = arith.constant dense<0.000000e+00> : vector<10x7xf32>
      %190 = tpu.matmul %189, %187, %cst_183 {dimension_numbers = #tpu.dot_dimension_numbers<[1], [0], [0], [1], [0, 0, 1, 1], [], []>} : vector<10x3xbf16>, vector<3x7xbf16>, vector<10x7xf32> -> vector<10x7xf32>
      %191 = arith.addf %186, %190 : vector<10x7xf32>
      %192 = vector.extract_strided_slice %20 {offsets = [0, 1], sizes = [3, 7], strides = [1, 1]} : vector<3x8xbf16> to vector<3x7xbf16>
      %c0_184 = arith.constant 0 : index
      %c2_185 = arith.constant 2 : index
      %c0_186 = arith.constant 0 : index
      %c0_187 = arith.constant 0 : index
      %193 = vector.load %arg3[%c0_184, %c2_185, %c0_186, %c0_187] : memref<3x3x10x3xbf16, #tpu.memory_space<vmem>>, vector<1x1x10x3xbf16>
      %194 = vector.shape_cast %193 : vector<1x1x10x3xbf16> to vector<10x3xbf16>
      %cst_188 = arith.constant dense<0.000000e+00> : vector<10x7xf32>
      %195 = tpu.matmul %194, %192, %cst_188 {dimension_numbers = #tpu.dot_dimension_numbers<[1], [0], [0], [1], [0, 0, 1, 1], [], []>} : vector<10x3xbf16>, vector<3x7xbf16>, vector<10x7xf32> -> vector<10x7xf32>
      %196 = arith.addf %191, %195 : vector<10x7xf32>
      %197 = vector.extract_strided_slice %30 {offsets = [0, 0], sizes = [3, 7], strides = [1, 1]} : vector<3x8xbf16> to vector<3x7xbf16>
      %c1_189 = arith.constant 1 : index
      %c0_190 = arith.constant 0 : index
      %c0_191 = arith.constant 0 : index
      %c0_192 = arith.constant 0 : index
      %198 = vector.load %arg3[%c1_189, %c0_190, %c0_191, %c0_192] : memref<3x3x10x3xbf16, #tpu.memory_space<vmem>>, vector<1x1x10x3xbf16>
      %199 = vector.shape_cast %198 : vector<1x1x10x3xbf16> to vector<10x3xbf16>
      %cst_193 = arith.constant dense<0.000000e+00> : vector<10x7xf32>
      %200 = tpu.matmul %199, %197, %cst_193 {dimension_numbers = #tpu.dot_dimension_numbers<[1], [0], [0], [1], [0, 0, 1, 1], [], []>} : vector<10x3xbf16>, vector<3x7xbf16>, vector<10x7xf32> -> vector<10x7xf32>
      %201 = arith.addf %196, %200 : vector<10x7xf32>
      %202 = vector.extract_strided_slice %25 {offsets = [0, 1], sizes = [3, 7], strides = [1, 1]} : vector<3x8xbf16> to vector<3x7xbf16>
      %c1_194 = arith.constant 1 : index
      %c1_195 = arith.constant 1 : index
      %c0_196 = arith.constant 0 : index
      %c0_197 = arith.constant 0 : index
      %203 = vector.load %arg3[%c1_194, %c1_195, %c0_196, %c0_197] : memref<3x3x10x3xbf16, #tpu.memory_space<vmem>>, vector<1x1x10x3xbf16>
      %204 = vector.shape_cast %203 : vector<1x1x10x3xbf16> to vector<10x3xbf16>
      %cst_198 = arith.constant dense<0.000000e+00> : vector<10x7xf32>
      %205 = tpu.matmul %204, %202, %cst_198 {dimension_numbers = #tpu.dot_dimension_numbers<[1], [0], [0], [1], [0, 0, 1, 1], [], []>} : vector<10x3xbf16>, vector<3x7xbf16>, vector<10x7xf32> -> vector<10x7xf32>
      %206 = arith.addf %201, %205 : vector<10x7xf32>
      %207 = vector.extract_strided_slice %30 {offsets = [0, 1], sizes = [3, 7], strides = [1, 1]} : vector<3x8xbf16> to vector<3x7xbf16>
      %c1_199 = arith.constant 1 : index
      %c2_200 = arith.constant 2 : index
      %c0_201 = arith.constant 0 : index
      %c0_202 = arith.constant 0 : index
      %208 = vector.load %arg3[%c1_199, %c2_200, %c0_201, %c0_202] : memref<3x3x10x3xbf16, #tpu.memory_space<vmem>>, vector<1x1x10x3xbf16>
      %209 = vector.shape_cast %208 : vector<1x1x10x3xbf16> to vector<10x3xbf16>
      %cst_203 = arith.constant dense<0.000000e+00> : vector<10x7xf32>
      %210 = tpu.matmul %209, %207, %cst_203 {dimension_numbers = #tpu.dot_dimension_numbers<[1], [0], [0], [1], [0, 0, 1, 1], [], []>} : vector<10x3xbf16>, vector<3x7xbf16>, vector<10x7xf32> -> vector<10x7xf32>
      %211 = arith.addf %206, %210 : vector<10x7xf32>
      %212 = vector.extract_strided_slice %40 {offsets = [0, 0], sizes = [3, 7], strides = [1, 1]} : vector<3x8xbf16> to vector<3x7xbf16>
      %c2_204 = arith.constant 2 : index
      %c0_205 = arith.constant 0 : index
      %c0_206 = arith.constant 0 : index
      %c0_207 = arith.constant 0 : index
      %213 = vector.load %arg3[%c2_204, %c0_205, %c0_206, %c0_207] : memref<3x3x10x3xbf16, #tpu.memory_space<vmem>>, vector<1x1x10x3xbf16>
      %214 = vector.shape_cast %213 : vector<1x1x10x3xbf16> to vector<10x3xbf16>
      %cst_208 = arith.constant dense<0.000000e+00> : vector<10x7xf32>
      %215 = tpu.matmul %214, %212, %cst_208 {dimension_numbers = #tpu.dot_dimension_numbers<[1], [0], [0], [1], [0, 0, 1, 1], [], []>} : vector<10x3xbf16>, vector<3x7xbf16>, vector<10x7xf32> -> vector<10x7xf32>
      %216 = arith.addf %211, %215 : vector<10x7xf32>
      %217 = vector.extract_strided_slice %35 {offsets = [0, 1], sizes = [3, 7], strides = [1, 1]} : vector<3x8xbf16> to vector<3x7xbf16>
      %c2_209 = arith.constant 2 : index
      %c1_210 = arith.constant 1 : index
      %c0_211 = arith.constant 0 : index
      %c0_212 = arith.constant 0 : index
      %218 = vector.load %arg3[%c2_209, %c1_210, %c0_211, %c0_212] : memref<3x3x10x3xbf16, #tpu.memory_space<vmem>>, vector<1x1x10x3xbf16>
      %219 = vector.shape_cast %218 : vector<1x1x10x3xbf16> to vector<10x3xbf16>
      %cst_213 = arith.constant dense<0.000000e+00> : vector<10x7xf32>
      %220 = tpu.matmul %219, %217, %cst_213 {dimension_numbers = #tpu.dot_dimension_numbers<[1], [0], [0], [1], [0, 0, 1, 1], [], []>} : vector<10x3xbf16>, vector<3x7xbf16>, vector<10x7xf32> -> vector<10x7xf32>
      %221 = arith.addf %216, %220 : vector<10x7xf32>
      %222 = vector.extract_strided_slice %40 {offsets = [0, 1], sizes = [3, 7], strides = [1, 1]} : vector<3x8xbf16> to vector<3x7xbf16>
      %c2_214 = arith.constant 2 : index
      %c2_215 = arith.constant 2 : index
      %c0_216 = arith.constant 0 : index
      %c0_217 = arith.constant 0 : index
      %223 = vector.load %arg3[%c2_214, %c2_215, %c0_216, %c0_217] : memref<3x3x10x3xbf16, #tpu.memory_space<vmem>>, vector<1x1x10x3xbf16>
      %224 = vector.shape_cast %223 : vector<1x1x10x3xbf16> to vector<10x3xbf16>
      %cst_218 = arith.constant dense<0.000000e+00> : vector<10x7xf32>
      %225 = tpu.matmul %224, %222, %cst_218 {dimension_numbers = #tpu.dot_dimension_numbers<[1], [0], [0], [1], [0, 0, 1, 1], [], []>} : vector<10x3xbf16>, vector<3x7xbf16>, vector<10x7xf32> -> vector<10x7xf32>
      %226 = arith.addf %221, %225 : vector<10x7xf32>
      %227 = arith.maximumf %180, %226 : vector<10x7xf32>
      %c0_219 = arith.constant 0 : index
      %c0_220 = arith.constant 0 : index
      %228 = vector.load %arg4[%c0_219, %c0_220] : memref<10x1xf32, #tpu.memory_space<vmem>>, vector<10x1xf32>
      %229 = vector.broadcast %228 : vector<10x1xf32> to vector<10x7xf32>
      %230 = arith.addf %227, %229 : vector<10x7xf32>
      %cst_221 = arith.constant 0.000000e+00 : f32
      %231 = vector.broadcast %cst_221 : f32 to vector<10x7xf32>
      %232 = arith.maximumf %230, %231 : vector<10x7xf32>
      %233 = arith.truncf %232 : vector<10x7xf32> to vector<10x7xbf16>
      %c0_222 = arith.constant 0 : index
      %234 = arith.index_cast %arg6 : i32 to index
      %c0_223 = arith.constant 0 : index
      %c0_224 = arith.constant 0 : index
      %235 = vector.load %arg5[%c0_222, %234, %c0_223, %c0_224] : memref<1x7x10x7xbf16, #tpu.memory_space<vmem>>, vector<1x1x10x7xbf16>
      %236 = vector.shape_cast %235 : vector<1x1x10x7xbf16> to vector<10x7xbf16>
      %237 = vector.shape_cast %233 : vector<10x7xbf16> to vector<1x1x10x7xbf16>
      tpu.vector_store %arg5[%c0_222, %234, %c0_223, %c0_224], %237 {strides = array<i32>} : memref<1x7x10x7xbf16, #tpu.memory_space<vmem>>, vector<1x1x10x7xbf16>,
    }
    %c7_i32_0 = arith.constant 7 : i32
    return
  }
  func.func @transform_0(%arg0: i32) -> (i32, i32, i32, i32) {
    %c0_i32 = arith.constant 0 : i32
    %c0_i32_0 = arith.constant 0 : i32
    %c0_i32_1 = arith.constant 0 : i32
    %c0_i32_2 = arith.constant 0 : i32
    return %arg0, %c0_i32, %c0_i32_0, %c0_i32_1 : i32, i32, i32, i32
  }
  func.func @transform_1(%arg0: i32) -> (i32, i32, i32, i32) {
    %c0_i32 = arith.constant 0 : i32
    %c0_i32_0 = arith.constant 0 : i32
    %c0_i32_1 = arith.constant 0 : i32
    %c0_i32_2 = arith.constant 0 : i32
    return %arg0, %c0_i32, %c0_i32_0, %c0_i32_1 : i32, i32, i32, i32
  }
  func.func @transform_2(%arg0: i32) -> (i32, i32, i32, i32) {
    %c0_i32 = arith.constant 0 : i32
    %c0_i32_0 = arith.constant 0 : i32
    %c0_i32_1 = arith.constant 0 : i32
    %c0_i32_2 = arith.constant 0 : i32
    %c0_i32_3 = arith.constant 0 : i32
    return %c0_i32, %c0_i32_0, %c0_i32_1, %c0_i32_2 : i32, i32, i32, i32
  }
  func.func @transform_3(%arg0: i32) -> (i32, i32) {
    %c0_i32 = arith.constant 0 : i32
    %c0_i32_0 = arith.constant 0 : i32
    %c0_i32_1 = arith.constant 0 : i32
    return %c0_i32, %c0_i32_0 : i32, i32
  }
  func.func @transform_4(%arg0: i32) -> (i32, i32, i32, i32) {
    %c0_i32 = arith.constant 0 : i32
    %c0_i32_0 = arith.constant 0 : i32
    %c0_i32_1 = arith.constant 0 : i32
    %c0_i32_2 = arith.constant 0 : i32
    return %arg0, %c0_i32, %c0_i32_0, %c0_i32_1 : i32, i32, i32, i32
  }
}

module attributes {stable_mosaic.version = 11 : i64} {
  func.func @_conv3x3_relu_kernel(%arg0: i32, %arg1: memref<1x7x10x7xbf16, #tpu.memory_space<vmem>>, %arg2: memref<3x3x16x10xbf16, #tpu.memory_space<vmem>>, %arg3: memref<16x1xf32, #tpu.memory_space<vmem>>, %arg4: memref<1x5x16x5xbf16, #tpu.memory_space<vmem>>) attributes {dimension_semantics = [#tpu.dimension_semantics<parallel>], iteration_bounds = array<i64: 2>, scalar_prefetch = 0 : i64, scratch_operands = 0 : i64, tpu.core_type = #tpu.core_type<tc>, window_params = [{transform_indices = @transform_0, window_bounds = array<i64: 1, 7, 10, 7>}, {pipeline_mode = #tpu.pipeline_mode<synchronous>, transform_indices = @transform_1, window_bounds = array<i64: 3, 3, 16, 10>}, {pipeline_mode = #tpu.pipeline_mode<synchronous>, transform_indices = @transform_2, window_bounds = array<i64: 16, 1>}, {transform_indices = @transform_3, window_bounds = array<i64: 1, 5, 16, 5>}]} {
    %c0_i32 = arith.constant 0 : i32
    %c5_i32 = arith.constant 5 : i32
    %0 = arith.addi %c0_i32, %c5_i32 : i32
    %c1_i32 = arith.constant 1 : i32
    scf.for %arg5 = %c0_i32 to %0 step %c1_i32  : i32 {
      %cst = arith.constant 0.000000e+00 : f32
      %1 = vector.broadcast %cst : f32 to vector<16x5xf32>
      %c0_i32_1 = arith.constant 0 : i32
      %2 = arith.addi %arg5, %c0_i32_1 : i32
      %c0 = arith.constant 0 : index
      %3 = arith.index_cast %2 : i32 to index
      %c0_2 = arith.constant 0 : index
      %c0_3 = arith.constant 0 : index
      %4 = vector.load %arg1[%c0, %3, %c0_2, %c0_3] : memref<1x7x10x7xbf16, #tpu.memory_space<vmem>>, vector<1x1x10x7xbf16>
      %5 = vector.shape_cast %4 : vector<1x1x10x7xbf16> to vector<10x7xbf16>
      %c0_4 = arith.constant 0 : index
      %c0_5 = arith.constant 0 : index
      %c0_6 = arith.constant 0 : index
      %c0_7 = arith.constant 0 : index
      %6 = vector.load %arg2[%c0_4, %c0_5, %c0_6, %c0_7] : memref<3x3x16x10xbf16, #tpu.memory_space<vmem>>, vector<1x1x16x10xbf16>
      %7 = vector.shape_cast %6 : vector<1x1x16x10xbf16> to vector<16x10xbf16>
      %8 = vector.extract_strided_slice %5 {offsets = [0, 0], sizes = [10, 5], strides = [1, 1]} : vector<10x7xbf16> to vector<10x5xbf16>
      %cst_8 = arith.constant dense<0.000000e+00> : vector<16x5xf32>
      %9 = tpu.matmul %7, %8, %cst_8 {dimension_numbers = #tpu.dot_dimension_numbers<[1], [0], [0], [1], [0, 0, 1, 1], [], []>} : vector<16x10xbf16>, vector<10x5xbf16>, vector<16x5xf32> -> vector<16x5xf32>
      %10 = arith.addf %1, %9 : vector<16x5xf32>
      %c0_9 = arith.constant 0 : index
      %c1 = arith.constant 1 : index
      %c0_10 = arith.constant 0 : index
      %c0_11 = arith.constant 0 : index
      %11 = vector.load %arg2[%c0_9, %c1, %c0_10, %c0_11] : memref<3x3x16x10xbf16, #tpu.memory_space<vmem>>, vector<1x1x16x10xbf16>
      %12 = vector.shape_cast %11 : vector<1x1x16x10xbf16> to vector<16x10xbf16>
      %13 = vector.extract_strided_slice %5 {offsets = [0, 1], sizes = [10, 5], strides = [1, 1]} : vector<10x7xbf16> to vector<10x5xbf16>
      %cst_12 = arith.constant dense<0.000000e+00> : vector<16x5xf32>
      %14 = tpu.matmul %12, %13, %cst_12 {dimension_numbers = #tpu.dot_dimension_numbers<[1], [0], [0], [1], [0, 0, 1, 1], [], []>} : vector<16x10xbf16>, vector<10x5xbf16>, vector<16x5xf32> -> vector<16x5xf32>
      %15 = arith.addf %10, %14 : vector<16x5xf32>
      %c0_13 = arith.constant 0 : index
      %c2 = arith.constant 2 : index
      %c0_14 = arith.constant 0 : index
      %c0_15 = arith.constant 0 : index
      %16 = vector.load %arg2[%c0_13, %c2, %c0_14, %c0_15] : memref<3x3x16x10xbf16, #tpu.memory_space<vmem>>, vector<1x1x16x10xbf16>
      %17 = vector.shape_cast %16 : vector<1x1x16x10xbf16> to vector<16x10xbf16>
      %18 = vector.extract_strided_slice %5 {offsets = [0, 2], sizes = [10, 5], strides = [1, 1]} : vector<10x7xbf16> to vector<10x5xbf16>
      %cst_16 = arith.constant dense<0.000000e+00> : vector<16x5xf32>
      %19 = tpu.matmul %17, %18, %cst_16 {dimension_numbers = #tpu.dot_dimension_numbers<[1], [0], [0], [1], [0, 0, 1, 1], [], []>} : vector<16x10xbf16>, vector<10x5xbf16>, vector<16x5xf32> -> vector<16x5xf32>
      %20 = arith.addf %15, %19 : vector<16x5xf32>
      %c1_i32_17 = arith.constant 1 : i32
      %21 = arith.addi %arg5, %c1_i32_17 : i32
      %c0_18 = arith.constant 0 : index
      %22 = arith.index_cast %21 : i32 to index
      %c0_19 = arith.constant 0 : index
      %c0_20 = arith.constant 0 : index
      %23 = vector.load %arg1[%c0_18, %22, %c0_19, %c0_20] : memref<1x7x10x7xbf16, #tpu.memory_space<vmem>>, vector<1x1x10x7xbf16>
      %24 = vector.shape_cast %23 : vector<1x1x10x7xbf16> to vector<10x7xbf16>
      %c1_21 = arith.constant 1 : index
      %c0_22 = arith.constant 0 : index
      %c0_23 = arith.constant 0 : index
      %c0_24 = arith.constant 0 : index
      %25 = vector.load %arg2[%c1_21, %c0_22, %c0_23, %c0_24] : memref<3x3x16x10xbf16, #tpu.memory_space<vmem>>, vector<1x1x16x10xbf16>
      %26 = vector.shape_cast %25 : vector<1x1x16x10xbf16> to vector<16x10xbf16>
      %27 = vector.extract_strided_slice %24 {offsets = [0, 0], sizes = [10, 5], strides = [1, 1]} : vector<10x7xbf16> to vector<10x5xbf16>
      %cst_25 = arith.constant dense<0.000000e+00> : vector<16x5xf32>
      %28 = tpu.matmul %26, %27, %cst_25 {dimension_numbers = #tpu.dot_dimension_numbers<[1], [0], [0], [1], [0, 0, 1, 1], [], []>} : vector<16x10xbf16>, vector<10x5xbf16>, vector<16x5xf32> -> vector<16x5xf32>
      %29 = arith.addf %20, %28 : vector<16x5xf32>
      %c1_26 = arith.constant 1 : index
      %c1_27 = arith.constant 1 : index
      %c0_28 = arith.constant 0 : index
      %c0_29 = arith.constant 0 : index
      %30 = vector.load %arg2[%c1_26, %c1_27, %c0_28, %c0_29] : memref<3x3x16x10xbf16, #tpu.memory_space<vmem>>, vector<1x1x16x10xbf16>
      %31 = vector.shape_cast %30 : vector<1x1x16x10xbf16> to vector<16x10xbf16>
      %32 = vector.extract_strided_slice %24 {offsets = [0, 1], sizes = [10, 5], strides = [1, 1]} : vector<10x7xbf16> to vector<10x5xbf16>
      %cst_30 = arith.constant dense<0.000000e+00> : vector<16x5xf32>
      %33 = tpu.matmul %31, %32, %cst_30 {dimension_numbers = #tpu.dot_dimension_numbers<[1], [0], [0], [1], [0, 0, 1, 1], [], []>} : vector<16x10xbf16>, vector<10x5xbf16>, vector<16x5xf32> -> vector<16x5xf32>
      %34 = arith.addf %29, %33 : vector<16x5xf32>
      %c1_31 = arith.constant 1 : index
      %c2_32 = arith.constant 2 : index
      %c0_33 = arith.constant 0 : index
      %c0_34 = arith.constant 0 : index
      %35 = vector.load %arg2[%c1_31, %c2_32, %c0_33, %c0_34] : memref<3x3x16x10xbf16, #tpu.memory_space<vmem>>, vector<1x1x16x10xbf16>
      %36 = vector.shape_cast %35 : vector<1x1x16x10xbf16> to vector<16x10xbf16>
      %37 = vector.extract_strided_slice %24 {offsets = [0, 2], sizes = [10, 5], strides = [1, 1]} : vector<10x7xbf16> to vector<10x5xbf16>
      %cst_35 = arith.constant dense<0.000000e+00> : vector<16x5xf32>
      %38 = tpu.matmul %36, %37, %cst_35 {dimension_numbers = #tpu.dot_dimension_numbers<[1], [0], [0], [1], [0, 0, 1, 1], [], []>} : vector<16x10xbf16>, vector<10x5xbf16>, vector<16x5xf32> -> vector<16x5xf32>
      %39 = arith.addf %34, %38 : vector<16x5xf32>
      %c2_i32 = arith.constant 2 : i32
      %40 = arith.addi %arg5, %c2_i32 : i32
      %c0_36 = arith.constant 0 : index
      %41 = arith.index_cast %40 : i32 to index
      %c0_37 = arith.constant 0 : index
      %c0_38 = arith.constant 0 : index
      %42 = vector.load %arg1[%c0_36, %41, %c0_37, %c0_38] : memref<1x7x10x7xbf16, #tpu.memory_space<vmem>>, vector<1x1x10x7xbf16>
      %43 = vector.shape_cast %42 : vector<1x1x10x7xbf16> to vector<10x7xbf16>
      %c2_39 = arith.constant 2 : index
      %c0_40 = arith.constant 0 : index
      %c0_41 = arith.constant 0 : index
      %c0_42 = arith.constant 0 : index
      %44 = vector.load %arg2[%c2_39, %c0_40, %c0_41, %c0_42] : memref<3x3x16x10xbf16, #tpu.memory_space<vmem>>, vector<1x1x16x10xbf16>
      %45 = vector.shape_cast %44 : vector<1x1x16x10xbf16> to vector<16x10xbf16>
      %46 = vector.extract_strided_slice %43 {offsets = [0, 0], sizes = [10, 5], strides = [1, 1]} : vector<10x7xbf16> to vector<10x5xbf16>
      %cst_43 = arith.constant dense<0.000000e+00> : vector<16x5xf32>
      %47 = tpu.matmul %45, %46, %cst_43 {dimension_numbers = #tpu.dot_dimension_numbers<[1], [0], [0], [1], [0, 0, 1, 1], [], []>} : vector<16x10xbf16>, vector<10x5xbf16>, vector<16x5xf32> -> vector<16x5xf32>
      %48 = arith.addf %39, %47 : vector<16x5xf32>
      %c2_44 = arith.constant 2 : index
      %c1_45 = arith.constant 1 : index
      %c0_46 = arith.constant 0 : index
      %c0_47 = arith.constant 0 : index
      %49 = vector.load %arg2[%c2_44, %c1_45, %c0_46, %c0_47] : memref<3x3x16x10xbf16, #tpu.memory_space<vmem>>, vector<1x1x16x10xbf16>
      %50 = vector.shape_cast %49 : vector<1x1x16x10xbf16> to vector<16x10xbf16>
      %51 = vector.extract_strided_slice %43 {offsets = [0, 1], sizes = [10, 5], strides = [1, 1]} : vector<10x7xbf16> to vector<10x5xbf16>
      %cst_48 = arith.constant dense<0.000000e+00> : vector<16x5xf32>
      %52 = tpu.matmul %50, %51, %cst_48 {dimension_numbers = #tpu.dot_dimension_numbers<[1], [0], [0], [1], [0, 0, 1, 1], [], []>} : vector<16x10xbf16>, vector<10x5xbf16>, vector<16x5xf32> -> vector<16x5xf32>
      %53 = arith.addf %48, %52 : vector<16x5xf32>
      %c2_49 = arith.constant 2 : index
      %c2_50 = arith.constant 2 : index
      %c0_51 = arith.constant 0 : index
      %c0_52 = arith.constant 0 : index
      %54 = vector.load %arg2[%c2_49, %c2_50, %c0_51, %c0_52] : memref<3x3x16x10xbf16, #tpu.memory_space<vmem>>, vector<1x1x16x10xbf16>
      %55 = vector.shape_cast %54 : vector<1x1x16x10xbf16> to vector<16x10xbf16>
      %56 = vector.extract_strided_slice %43 {offsets = [0, 2], sizes = [10, 5], strides = [1, 1]} : vector<10x7xbf16> to vector<10x5xbf16>
      %cst_53 = arith.constant dense<0.000000e+00> : vector<16x5xf32>
      %57 = tpu.matmul %55, %56, %cst_53 {dimension_numbers = #tpu.dot_dimension_numbers<[1], [0], [0], [1], [0, 0, 1, 1], [], []>} : vector<16x10xbf16>, vector<10x5xbf16>, vector<16x5xf32> -> vector<16x5xf32>
      %58 = arith.addf %53, %57 : vector<16x5xf32>
      %c0_54 = arith.constant 0 : index
      %c0_55 = arith.constant 0 : index
      %59 = vector.load %arg3[%c0_54, %c0_55] : memref<16x1xf32, #tpu.memory_space<vmem>>, vector<16x1xf32>
      %60 = vector.broadcast %59 : vector<16x1xf32> to vector<16x5xf32>
      %61 = arith.addf %58, %60 : vector<16x5xf32>
      %cst_56 = arith.constant 0.000000e+00 : f32
      %62 = vector.broadcast %cst_56 : f32 to vector<16x5xf32>
      %63 = arith.maximumf %61, %62 : vector<16x5xf32>
      %64 = arith.truncf %63 : vector<16x5xf32> to vector<16x5xbf16>
      %c0_57 = arith.constant 0 : index
      %65 = arith.index_cast %arg5 : i32 to index
      %c0_58 = arith.constant 0 : index
      %c0_59 = arith.constant 0 : index
      %66 = vector.load %arg4[%c0_57, %65, %c0_58, %c0_59] : memref<1x5x16x5xbf16, #tpu.memory_space<vmem>>, vector<1x1x16x5xbf16>
      %67 = vector.shape_cast %66 : vector<1x1x16x5xbf16> to vector<16x5xbf16>
      %68 = vector.shape_cast %64 : vector<16x5xbf16> to vector<1x1x16x5xbf16>
      tpu.vector_store %arg4[%c0_57, %65, %c0_58, %c0_59], %68 {strides = array<i32>} : memref<1x5x16x5xbf16, #tpu.memory_space<vmem>>, vector<1x1x16x5xbf16>,
    }
    %c5_i32_0 = arith.constant 5 : i32
    return
  }
  func.func @transform_0(%arg0: i32) -> (i32, i32, i32, i32) {
    %c0_i32 = arith.constant 0 : i32
    %c0_i32_0 = arith.constant 0 : i32
    %c0_i32_1 = arith.constant 0 : i32
    %c0_i32_2 = arith.constant 0 : i32
    return %arg0, %c0_i32, %c0_i32_0, %c0_i32_1 : i32, i32, i32, i32
  }
  func.func @transform_1(%arg0: i32) -> (i32, i32, i32, i32) {
    %c0_i32 = arith.constant 0 : i32
    %c0_i32_0 = arith.constant 0 : i32
    %c0_i32_1 = arith.constant 0 : i32
    %c0_i32_2 = arith.constant 0 : i32
    %c0_i32_3 = arith.constant 0 : i32
    return %c0_i32, %c0_i32_0, %c0_i32_1, %c0_i32_2 : i32, i32, i32, i32
  }
  func.func @transform_2(%arg0: i32) -> (i32, i32) {
    %c0_i32 = arith.constant 0 : i32
    %c0_i32_0 = arith.constant 0 : i32
    %c0_i32_1 = arith.constant 0 : i32
    return %c0_i32, %c0_i32_0 : i32, i32
  }
  func.func @transform_3(%arg0: i32) -> (i32, i32, i32, i32) {
    %c0_i32 = arith.constant 0 : i32
    %c0_i32_0 = arith.constant 0 : i32
    %c0_i32_1 = arith.constant 0 : i32
    %c0_i32_2 = arith.constant 0 : i32
    return %arg0, %c0_i32, %c0_i32_0, %c0_i32_1 : i32, i32, i32, i32
  }
}

module attributes {stable_mosaic.version = 11 : i64} {
  func.func @_conv3_heads_kernel(%arg0: i32, %arg1: memref<1x5x16x5xbf16, #tpu.memory_space<vmem>>, %arg2: memref<3x3x32x16xbf16, #tpu.memory_space<vmem>>, %arg3: memref<32x1xf32, #tpu.memory_space<vmem>>, %arg4: memref<16x32xbf16, #tpu.memory_space<vmem>>, %arg5: memref<16x1xf32, #tpu.memory_space<vmem>>, %arg6: memref<1x3x16x3xf32, #tpu.memory_space<vmem>>) attributes {dimension_semantics = [#tpu.dimension_semantics<parallel>], iteration_bounds = array<i64: 2>, scalar_prefetch = 0 : i64, scratch_operands = 0 : i64, tpu.core_type = #tpu.core_type<tc>, window_params = [{transform_indices = @transform_0, window_bounds = array<i64: 1, 5, 16, 5>}, {pipeline_mode = #tpu.pipeline_mode<synchronous>, transform_indices = @transform_1, window_bounds = array<i64: 3, 3, 32, 16>}, {pipeline_mode = #tpu.pipeline_mode<synchronous>, transform_indices = @transform_2, window_bounds = array<i64: 32, 1>}, {pipeline_mode = #tpu.pipeline_mode<synchronous>, transform_indices = @transform_3, window_bounds = array<i64: 16, 32>}, {pipeline_mode = #tpu.pipeline_mode<synchronous>, transform_indices = @transform_4, window_bounds = array<i64: 16, 1>}, {transform_indices = @transform_5, window_bounds = array<i64: 1, 3, 16, 3>}]} {
    %c0_i32 = arith.constant 0 : i32
    %c3_i32 = arith.constant 3 : i32
    %0 = arith.addi %c0_i32, %c3_i32 : i32
    %c1_i32 = arith.constant 1 : i32
    scf.for %arg7 = %c0_i32 to %0 step %c1_i32  : i32 {
      %cst = arith.constant 0.000000e+00 : f32
      %1 = vector.broadcast %cst : f32 to vector<32x3xf32>
      %c0_i32_1 = arith.constant 0 : i32
      %2 = arith.addi %arg7, %c0_i32_1 : i32
      %c0 = arith.constant 0 : index
      %3 = arith.index_cast %2 : i32 to index
      %c0_2 = arith.constant 0 : index
      %c0_3 = arith.constant 0 : index
      %4 = vector.load %arg1[%c0, %3, %c0_2, %c0_3] : memref<1x5x16x5xbf16, #tpu.memory_space<vmem>>, vector<1x1x16x5xbf16>
      %5 = vector.shape_cast %4 : vector<1x1x16x5xbf16> to vector<16x5xbf16>
      %c0_4 = arith.constant 0 : index
      %c0_5 = arith.constant 0 : index
      %c0_6 = arith.constant 0 : index
      %c0_7 = arith.constant 0 : index
      %6 = vector.load %arg2[%c0_4, %c0_5, %c0_6, %c0_7] : memref<3x3x32x16xbf16, #tpu.memory_space<vmem>>, vector<1x1x32x16xbf16>
      %7 = vector.shape_cast %6 : vector<1x1x32x16xbf16> to vector<32x16xbf16>
      %8 = vector.extract_strided_slice %5 {offsets = [0, 0], sizes = [16, 3], strides = [1, 1]} : vector<16x5xbf16> to vector<16x3xbf16>
      %cst_8 = arith.constant dense<0.000000e+00> : vector<32x3xf32>
      %9 = tpu.matmul %7, %8, %cst_8 {dimension_numbers = #tpu.dot_dimension_numbers<[1], [0], [0], [1], [0, 0, 1, 1], [], []>} : vector<32x16xbf16>, vector<16x3xbf16>, vector<32x3xf32> -> vector<32x3xf32>
      %10 = arith.addf %1, %9 : vector<32x3xf32>
      %c0_9 = arith.constant 0 : index
      %c1 = arith.constant 1 : index
      %c0_10 = arith.constant 0 : index
      %c0_11 = arith.constant 0 : index
      %11 = vector.load %arg2[%c0_9, %c1, %c0_10, %c0_11] : memref<3x3x32x16xbf16, #tpu.memory_space<vmem>>, vector<1x1x32x16xbf16>
      %12 = vector.shape_cast %11 : vector<1x1x32x16xbf16> to vector<32x16xbf16>
      %13 = vector.extract_strided_slice %5 {offsets = [0, 1], sizes = [16, 3], strides = [1, 1]} : vector<16x5xbf16> to vector<16x3xbf16>
      %cst_12 = arith.constant dense<0.000000e+00> : vector<32x3xf32>
      %14 = tpu.matmul %12, %13, %cst_12 {dimension_numbers = #tpu.dot_dimension_numbers<[1], [0], [0], [1], [0, 0, 1, 1], [], []>} : vector<32x16xbf16>, vector<16x3xbf16>, vector<32x3xf32> -> vector<32x3xf32>
      %15 = arith.addf %10, %14 : vector<32x3xf32>
      %c0_13 = arith.constant 0 : index
      %c2 = arith.constant 2 : index
      %c0_14 = arith.constant 0 : index
      %c0_15 = arith.constant 0 : index
      %16 = vector.load %arg2[%c0_13, %c2, %c0_14, %c0_15] : memref<3x3x32x16xbf16, #tpu.memory_space<vmem>>, vector<1x1x32x16xbf16>
      %17 = vector.shape_cast %16 : vector<1x1x32x16xbf16> to vector<32x16xbf16>
      %18 = vector.extract_strided_slice %5 {offsets = [0, 2], sizes = [16, 3], strides = [1, 1]} : vector<16x5xbf16> to vector<16x3xbf16>
      %cst_16 = arith.constant dense<0.000000e+00> : vector<32x3xf32>
      %19 = tpu.matmul %17, %18, %cst_16 {dimension_numbers = #tpu.dot_dimension_numbers<[1], [0], [0], [1], [0, 0, 1, 1], [], []>} : vector<32x16xbf16>, vector<16x3xbf16>, vector<32x3xf32> -> vector<32x3xf32>
      %20 = arith.addf %15, %19 : vector<32x3xf32>
      %c1_i32_17 = arith.constant 1 : i32
      %21 = arith.addi %arg7, %c1_i32_17 : i32
      %c0_18 = arith.constant 0 : index
      %22 = arith.index_cast %21 : i32 to index
      %c0_19 = arith.constant 0 : index
      %c0_20 = arith.constant 0 : index
      %23 = vector.load %arg1[%c0_18, %22, %c0_19, %c0_20] : memref<1x5x16x5xbf16, #tpu.memory_space<vmem>>, vector<1x1x16x5xbf16>
      %24 = vector.shape_cast %23 : vector<1x1x16x5xbf16> to vector<16x5xbf16>
      %c1_21 = arith.constant 1 : index
      %c0_22 = arith.constant 0 : index
      %c0_23 = arith.constant 0 : index
      %c0_24 = arith.constant 0 : index
      %25 = vector.load %arg2[%c1_21, %c0_22, %c0_23, %c0_24] : memref<3x3x32x16xbf16, #tpu.memory_space<vmem>>, vector<1x1x32x16xbf16>
      %26 = vector.shape_cast %25 : vector<1x1x32x16xbf16> to vector<32x16xbf16>
      %27 = vector.extract_strided_slice %24 {offsets = [0, 0], sizes = [16, 3], strides = [1, 1]} : vector<16x5xbf16> to vector<16x3xbf16>
      %cst_25 = arith.constant dense<0.000000e+00> : vector<32x3xf32>
      %28 = tpu.matmul %26, %27, %cst_25 {dimension_numbers = #tpu.dot_dimension_numbers<[1], [0], [0], [1], [0, 0, 1, 1], [], []>} : vector<32x16xbf16>, vector<16x3xbf16>, vector<32x3xf32> -> vector<32x3xf32>
      %29 = arith.addf %20, %28 : vector<32x3xf32>
      %c1_26 = arith.constant 1 : index
      %c1_27 = arith.constant 1 : index
      %c0_28 = arith.constant 0 : index
      %c0_29 = arith.constant 0 : index
      %30 = vector.load %arg2[%c1_26, %c1_27, %c0_28, %c0_29] : memref<3x3x32x16xbf16, #tpu.memory_space<vmem>>, vector<1x1x32x16xbf16>
      %31 = vector.shape_cast %30 : vector<1x1x32x16xbf16> to vector<32x16xbf16>
      %32 = vector.extract_strided_slice %24 {offsets = [0, 1], sizes = [16, 3], strides = [1, 1]} : vector<16x5xbf16> to vector<16x3xbf16>
      %cst_30 = arith.constant dense<0.000000e+00> : vector<32x3xf32>
      %33 = tpu.matmul %31, %32, %cst_30 {dimension_numbers = #tpu.dot_dimension_numbers<[1], [0], [0], [1], [0, 0, 1, 1], [], []>} : vector<32x16xbf16>, vector<16x3xbf16>, vector<32x3xf32> -> vector<32x3xf32>
      %34 = arith.addf %29, %33 : vector<32x3xf32>
      %c1_31 = arith.constant 1 : index
      %c2_32 = arith.constant 2 : index
      %c0_33 = arith.constant 0 : index
      %c0_34 = arith.constant 0 : index
      %35 = vector.load %arg2[%c1_31, %c2_32, %c0_33, %c0_34] : memref<3x3x32x16xbf16, #tpu.memory_space<vmem>>, vector<1x1x32x16xbf16>
      %36 = vector.shape_cast %35 : vector<1x1x32x16xbf16> to vector<32x16xbf16>
      %37 = vector.extract_strided_slice %24 {offsets = [0, 2], sizes = [16, 3], strides = [1, 1]} : vector<16x5xbf16> to vector<16x3xbf16>
      %cst_35 = arith.constant dense<0.000000e+00> : vector<32x3xf32>
      %38 = tpu.matmul %36, %37, %cst_35 {dimension_numbers = #tpu.dot_dimension_numbers<[1], [0], [0], [1], [0, 0, 1, 1], [], []>} : vector<32x16xbf16>, vector<16x3xbf16>, vector<32x3xf32> -> vector<32x3xf32>
      %39 = arith.addf %34, %38 : vector<32x3xf32>
      %c2_i32 = arith.constant 2 : i32
      %40 = arith.addi %arg7, %c2_i32 : i32
      %c0_36 = arith.constant 0 : index
      %41 = arith.index_cast %40 : i32 to index
      %c0_37 = arith.constant 0 : index
      %c0_38 = arith.constant 0 : index
      %42 = vector.load %arg1[%c0_36, %41, %c0_37, %c0_38] : memref<1x5x16x5xbf16, #tpu.memory_space<vmem>>, vector<1x1x16x5xbf16>
      %43 = vector.shape_cast %42 : vector<1x1x16x5xbf16> to vector<16x5xbf16>
      %c2_39 = arith.constant 2 : index
      %c0_40 = arith.constant 0 : index
      %c0_41 = arith.constant 0 : index
      %c0_42 = arith.constant 0 : index
      %44 = vector.load %arg2[%c2_39, %c0_40, %c0_41, %c0_42] : memref<3x3x32x16xbf16, #tpu.memory_space<vmem>>, vector<1x1x32x16xbf16>
      %45 = vector.shape_cast %44 : vector<1x1x32x16xbf16> to vector<32x16xbf16>
      %46 = vector.extract_strided_slice %43 {offsets = [0, 0], sizes = [16, 3], strides = [1, 1]} : vector<16x5xbf16> to vector<16x3xbf16>
      %cst_43 = arith.constant dense<0.000000e+00> : vector<32x3xf32>
      %47 = tpu.matmul %45, %46, %cst_43 {dimension_numbers = #tpu.dot_dimension_numbers<[1], [0], [0], [1], [0, 0, 1, 1], [], []>} : vector<32x16xbf16>, vector<16x3xbf16>, vector<32x3xf32> -> vector<32x3xf32>
      %48 = arith.addf %39, %47 : vector<32x3xf32>
      %c2_44 = arith.constant 2 : index
      %c1_45 = arith.constant 1 : index
      %c0_46 = arith.constant 0 : index
      %c0_47 = arith.constant 0 : index
      %49 = vector.load %arg2[%c2_44, %c1_45, %c0_46, %c0_47] : memref<3x3x32x16xbf16, #tpu.memory_space<vmem>>, vector<1x1x32x16xbf16>
      %50 = vector.shape_cast %49 : vector<1x1x32x16xbf16> to vector<32x16xbf16>
      %51 = vector.extract_strided_slice %43 {offsets = [0, 1], sizes = [16, 3], strides = [1, 1]} : vector<16x5xbf16> to vector<16x3xbf16>
      %cst_48 = arith.constant dense<0.000000e+00> : vector<32x3xf32>
      %52 = tpu.matmul %50, %51, %cst_48 {dimension_numbers = #tpu.dot_dimension_numbers<[1], [0], [0], [1], [0, 0, 1, 1], [], []>} : vector<32x16xbf16>, vector<16x3xbf16>, vector<32x3xf32> -> vector<32x3xf32>
      %53 = arith.addf %48, %52 : vector<32x3xf32>
      %c2_49 = arith.constant 2 : index
      %c2_50 = arith.constant 2 : index
      %c0_51 = arith.constant 0 : index
      %c0_52 = arith.constant 0 : index
      %54 = vector.load %arg2[%c2_49, %c2_50, %c0_51, %c0_52] : memref<3x3x32x16xbf16, #tpu.memory_space<vmem>>, vector<1x1x32x16xbf16>
      %55 = vector.shape_cast %54 : vector<1x1x32x16xbf16> to vector<32x16xbf16>
      %56 = vector.extract_strided_slice %43 {offsets = [0, 2], sizes = [16, 3], strides = [1, 1]} : vector<16x5xbf16> to vector<16x3xbf16>
      %cst_53 = arith.constant dense<0.000000e+00> : vector<32x3xf32>
      %57 = tpu.matmul %55, %56, %cst_53 {dimension_numbers = #tpu.dot_dimension_numbers<[1], [0], [0], [1], [0, 0, 1, 1], [], []>} : vector<32x16xbf16>, vector<16x3xbf16>, vector<32x3xf32> -> vector<32x3xf32>
      %58 = arith.addf %53, %57 : vector<32x3xf32>
      %c0_54 = arith.constant 0 : index
      %c0_55 = arith.constant 0 : index
      %59 = vector.load %arg3[%c0_54, %c0_55] : memref<32x1xf32, #tpu.memory_space<vmem>>, vector<32x1xf32>
      %60 = vector.broadcast %59 : vector<32x1xf32> to vector<32x3xf32>
      %61 = arith.addf %58, %60 : vector<32x3xf32>
      %cst_56 = arith.constant 0.000000e+00 : f32
      %62 = vector.broadcast %cst_56 : f32 to vector<32x3xf32>
      %63 = arith.maximumf %61, %62 : vector<32x3xf32>
      %c0_57 = arith.constant 0 : index
      %c0_58 = arith.constant 0 : index
      %64 = vector.load %arg4[%c0_57, %c0_58] : memref<16x32xbf16, #tpu.memory_space<vmem>>, vector<16x32xbf16>
      %65 = arith.truncf %63 : vector<32x3xf32> to vector<32x3xbf16>
      %cst_59 = arith.constant dense<0.000000e+00> : vector<16x3xf32>
      %66 = tpu.matmul %64, %65, %cst_59 {dimension_numbers = #tpu.dot_dimension_numbers<[1], [0], [0], [1], [0, 0, 1, 1], [], []>} : vector<16x32xbf16>, vector<32x3xbf16>, vector<16x3xf32> -> vector<16x3xf32>
      %c0_60 = arith.constant 0 : index
      %c0_61 = arith.constant 0 : index
      %67 = vector.load %arg5[%c0_60, %c0_61] : memref<16x1xf32, #tpu.memory_space<vmem>>, vector<16x1xf32>
      %68 = vector.broadcast %67 : vector<16x1xf32> to vector<16x3xf32>
      %69 = arith.addf %66, %68 : vector<16x3xf32>
      %c0_62 = arith.constant 0 : index
      %70 = arith.index_cast %arg7 : i32 to index
      %c0_63 = arith.constant 0 : index
      %c0_64 = arith.constant 0 : index
      %71 = vector.load %arg6[%c0_62, %70, %c0_63, %c0_64] : memref<1x3x16x3xf32, #tpu.memory_space<vmem>>, vector<1x1x16x3xf32>
      %72 = vector.shape_cast %71 : vector<1x1x16x3xf32> to vector<16x3xf32>
      %73 = vector.shape_cast %69 : vector<16x3xf32> to vector<1x1x16x3xf32>
      tpu.vector_store %arg6[%c0_62, %70, %c0_63, %c0_64], %73 {strides = array<i32>} : memref<1x3x16x3xf32, #tpu.memory_space<vmem>>, vector<1x1x16x3xf32>,
    }
    %c3_i32_0 = arith.constant 3 : i32
    return
  }
  func.func @transform_0(%arg0: i32) -> (i32, i32, i32, i32) {
    %c0_i32 = arith.constant 0 : i32
    %c0_i32_0 = arith.constant 0 : i32
    %c0_i32_1 = arith.constant 0 : i32
    %c0_i32_2 = arith.constant 0 : i32
    return %arg0, %c0_i32, %c0_i32_0, %c0_i32_1 : i32, i32, i32, i32
  }
  func.func @transform_1(%arg0: i32) -> (i32, i32, i32, i32) {
    %c0_i32 = arith.constant 0 : i32
    %c0_i32_0 = arith.constant 0 : i32
    %c0_i32_1 = arith.constant 0 : i32
    %c0_i32_2 = arith.constant 0 : i32
    %c0_i32_3 = arith.constant 0 : i32
    return %c0_i32, %c0_i32_0, %c0_i32_1, %c0_i32_2 : i32, i32, i32, i32
  }
  func.func @transform_2(%arg0: i32) -> (i32, i32) {
    %c0_i32 = arith.constant 0 : i32
    %c0_i32_0 = arith.constant 0 : i32
    %c0_i32_1 = arith.constant 0 : i32
    return %c0_i32, %c0_i32_0 : i32, i32
  }
  func.func @transform_3(%arg0: i32) -> (i32, i32) {
    %c0_i32 = arith.constant 0 : i32
    %c0_i32_0 = arith.constant 0 : i32
    %c0_i32_1 = arith.constant 0 : i32
    return %c0_i32, %c0_i32_0 : i32, i32
  }
  func.func @transform_4(%arg0: i32) -> (i32, i32) {
    %c0_i32 = arith.constant 0 : i32
    %c0_i32_0 = arith.constant 0 : i32
    %c0_i32_1 = arith.constant 0 : i32
    return %c0_i32, %c0_i32_0 : i32, i32
  }
  func.func @transform_5(%arg0: i32) -> (i32, i32, i32, i32) {
    %c0_i32 = arith.constant 0 : i32
    %c0_i32_0 = arith.constant 0 : i32
    %c0_i32_1 = arith.constant 0 : i32
    %c0_i32_2 = arith.constant 0 : i32
    return %arg0, %c0_i32, %c0_i32_0, %c0_i32_1 : i32, i32, i32, i32
  }
}

</mosaic_0001>

<llo_original>
// kernel: pnet_forward.4
$region0: #{pnet_forward.4}
  #allocation0 [shape = 'u32[]', space=smem, size = 0x4, offset = 0x4, fixed_abs, tag = 'smem constant byte address 0x4 - core index']
  #allocation1 [shape = 'u32[72,128]{1,0:T(1,128)}', space=vmem, size = 0x9000, scoped, tag = 'internal scratch']
  %s0 = inlined_call_operand.vmem [shape: bf16[2,7,10,7], index: 0, kind: input, shape index: {}]
  %s1 = inlined_call_operand.vmem [shape: bf16[3,3,16,10], index: 1, kind: input, shape index: {}]
  %s2 = inlined_call_operand.vmem [shape: f32[16,1], index: 2, kind: input, shape index: {}]
  %s3 = inlined_call_operand.vmem [shape: bf16[2,5,16,5], index: 3, kind: output, shape index: {}]
  %s4 = sld [smem:[#allocation0]]
  $region52: #{pnet_forward.4} parent=0
    _
  %s6 = ssub.s32 1, %s4
  %s7 = scalar_select 0, %s6, %s4
  loop: start=0, step=1, limit=4
  $region2: #{pnet_forward.4} parent=0 // loop_pre_header
    _
  $region3: #{pnet_forward.4} parent=0 // loop_header
    %s9 = sphi 0, %s13
    %p10 = scmp.ge.s32.totalorder %s9, 4
    %s19 = sphi 0, %s21
    %s22 = sphi 0, %s19
    %s23 = sphi 0, %s22
    %s39 = sphi 0, %s23
    %s43 = sphi 0, %s43
    %s45 = sphi 0, %s43
    %s46 = sphi 0, %s45
    %s60 = sphi 0, %s46
    %s64 = sphi 0, %s64
    %s66 = sphi 0, %s64
    %s67 = sphi 0, %s66
    %s81 = sphi 0, %s67
    %s87 = sphi 0, %s89
    %s90 = sphi 0, %s87
    %s91 = sphi 0, %s90
    %s107 = sphi 0, %s91
  $region4: #{pnet_forward.4} parent=0 // loop_header_branch
    %12 = sbr.rel (%p10) target = $region8
  $region5: #{pnet_forward.4} parent=0 // loop_body
    %s14 = ssub.s32 %s9, 1
    %s15 = ssub.s32 %s9, 2
    %s16 = sadd.s32 %s9, 1
    %s17 = ssub.s32 %s9, %s16
    %p18 = scmp.eq.s32.totalorder %s17, 0
    %s20 = sadd.s32 %s19, 1
    %s21 = scalar_select %p18, %s19, %s20
    %p24 = pneg %p18
    %p25 = scmp.eq.s32.totalorder %s9, 1
    %p26 = por %p24, %p25
    %p27 = scmp.ne.s32.totalorder %s19, %s22
    %p28 = scmp.eq.s32.totalorder %s9, 0
    %p29 = por %p27, %p28
    %p30 = scmp.ne.s32.totalorder %s19, %s22
    %p31 = scmp.eq.s32.totalorder %s14, 1
    %p32 = por %p30, %p31
    %p33 = scmp.ne.s32.totalorder %s22, %s23
    %p34 = scmp.eq.s32.totalorder %s14, 0
    %p35 = por %p33, %p34
    %p36 = scmp.ne.s32.totalorder %s22, %s23
    %p37 = scmp.eq.s32.totalorder %s15, 1
    %p38 = por %p36, %p37
    %p40 = scmp.ne.s32.totalorder %s23, %s39
    %p41 = scmp.eq.s32.totalorder %s15, 0
    %p42 = por %p40, %p41
    %s44 = sadd.s32 %s43, 1
    %p47 = scmp.eq.s32.totalorder %s9, 1
    %p48 = scmp.ne.s32.totalorder %s43, %s45
    %p49 = scmp.eq.s32.totalorder %s9, 0
    %p50 = por %p48, %p49
    %p51 = scmp.ne.s32.totalorder %s43, %s45
    %p52 = scmp.eq.s32.totalorder %s14, 1
    %p53 = por %p51, %p52
    %p54 = scmp.ne.s32.totalorder %s45, %s46
    %p55 = scmp.eq.s32.totalorder %s14, 0
    %p56 = por %p54, %p55
    %p57 = scmp.ne.s32.totalorder %s45, %s46
    %p58 = scmp.eq.s32.totalorder %s15, 1
    %p59 = por %p57, %p58
    %p61 = scmp.ne.s32.totalorder %s46, %s60
    %p62 = scmp.eq.s32.totalorder %s15, 0
    %p63 = por %p61, %p62
    %s65 = sadd.s32 %s64, 1
    %p68 = scmp.eq.s32.totalorder %s9, 1
    %p69 = scmp.ne.s32.totalorder %s64, %s66
    %p70 = scmp.eq.s32.totalorder %s9, 0
    %p71 = por %p69, %p70
    %p72 = scmp.ne.s32.totalorder %s64, %s66
    %p73 = scmp.eq.s32.totalorder %s14, 1
    %p74 = por %p72, %p73
    %p75 = scmp.ne.s32.totalorder %s66, %s67
    %p76 = scmp.eq.s32.totalorder %s14, 0
    %p77 = por %p75, %p76
    %p78 = scmp.ne.s32.totalorder %s66, %s67
    %p79 = scmp.eq.s32.totalorder %s15, 1
    %p80 = por %p78, %p79
    %p82 = scmp.ne.s32.totalorder %s67, %s81
    %p83 = scmp.eq.s32.totalorder %s15, 0
    %p84 = por %p82, %p83
    %s85 = ssub.s32 %s9, %s16
    %p86 = scmp.eq.s32.totalorder %s85, 0
    %s88 = sadd.s32 %s87, 1
    %s89 = scalar_select %p86, %s87, %s88
    %p92 = pneg %p86
    %p93 = scmp.eq.s32.totalorder %s9, 1
    %p94 = por %p92, %p93
    %p95 = scmp.ne.s32.totalorder %s87, %s90
    %p96 = scmp.eq.s32.totalorder %s9, 0
    %p97 = por %p95, %p96
    %p98 = scmp.ne.s32.totalorder %s87, %s90
    %p99 = scmp.eq.s32.totalorder %s14, 1
    %p100 = por %p98, %p99
    %p101 = scmp.ne.s32.totalorder %s90, %s91
    %p102 = scmp.eq.s32.totalorder %s14, 0
    %p103 = por %p101, %p102
    %p104 = scmp.ne.s32.totalorder %s90, %s91
    %p105 = scmp.eq.s32.totalorder %s15, 1
    %p106 = por %p104, %p105
    %p108 = scmp.ne.s32.totalorder %s91, %s107
    %p109 = scmp.eq.s32.totalorder %s15, 0
    %p110 = por %p108, %p109
    %p111 = scmp.le.s32.totalorder 1, %s9
    %p112 = scmp.lt.s32.totalorder %s9, 3
    %p113 = pnand %p111, %p112
    %p114 = pneg %p113
    // Predicated region
    $region9: #{pnet_forward.4} parent=5 // pred_check
      _
    $region10: #{pnet_forward.4} parent=5 // pred_check_branch
      %116 = sbr.rel (%p113) target = $region12
    $region11: #{pnet_forward.4} parent=5 // pred_region
      %s117 = ssub.s32 %s9, 1
      // Predicated region
      $region13: #{pnet_forward.4} parent=11 // pred_check
        %p118 = pneg %p56
      $region14: #{pnet_forward.4} parent=11 // pred_check_branch
        %120 = sbr.rel (%p118) target = $region16
      $region15: #{pnet_forward.4} parent=11 // pred_region
        _
      $region16: #{pnet_forward.4} parent=11 // pred_fallthru
        _
      // Predicated region
      $region17: #{pnet_forward.4} parent=11 // pred_check
        %p121 = pneg %p77
      $region18: #{pnet_forward.4} parent=11 // pred_check_branch
        %123 = sbr.rel (%p121) target = $region20
      $region19: #{pnet_forward.4} parent=11 // pred_region
        _
      $region20: #{pnet_forward.4} parent=11 // pred_fallthru
        _
    $region12: #{pnet_forward.4} parent=5 // pred_fallthru
      _
    %p124 = scmp.lt.s32.totalorder %s9, 2
    // Predicated region
    $region21: #{pnet_forward.4} parent=5 // pred_check
      %p125 = pneg %p124
    $region22: #{pnet_forward.4} parent=5 // pred_check_branch
      %127 = sbr.rel (%p125) target = $region24
    $region23: #{pnet_forward.4} parent=5 // pred_region
      // Predicated region
      $region25: #{pnet_forward.4} parent=23 // pred_check
        %p128 = pneg %p29
      $region26: #{pnet_forward.4} parent=23 // pred_check_branch
        %130 = sbr.rel (%p128) target = $region28
      $region27: #{pnet_forward.4} parent=23 // pred_region
        %p131 = scmp.lt.s32.totalorder %s9, 1
        %s132 = scalar_select %p131, %s9, 1
        %s133 = smul.addr %s132, 14
        %s134 = smul.addr %s133, 4
        %s135 = scalar_lea.vmem %s0, %s134
      $region28: #{pnet_forward.4} parent=23 // pred_fallthru
        _
    $region24: #{pnet_forward.4} parent=5 // pred_fallthru
      _
    %p136 = scmp.le.s32.totalorder 1, %s9
    %p137 = scmp.lt.s32.totalorder %s9, 3
    %p138 = pnand %p136, %p137
    %p139 = pneg %p138
    // Predicated region
    $region29: #{pnet_forward.4} parent=5 // pred_check
      _
    $region30: #{pnet_forward.4} parent=5 // pred_check_branch
      %141 = sbr.rel (%p138) target = $region32
    $region31: #{pnet_forward.4} parent=5 // pred_region
      %s142 = ssub.s32 %s9, 1
      %p143 = scmp.lt.s32.totalorder %s14, 1
      %s144 = scalar_select %p143, %s14, 1
      %s145 = smul.addr %s144, 14
      %s146 = smul.addr %s145, 4
      %s147 = scalar_lea.vmem %s0, %s146
      %p148 = pneg %p35
      %p149 = pneg %p32
      %p150 = pneg %p56
      %p151 = pneg %p53
      %p152 = pneg %p77
      %p153 = pneg %p74
      %p154 = pneg %p103
      %p155 = pneg %p100
      %p156 = scmp.lt.s32.totalorder %s14, 1
      %s157 = scalar_select %p156, %s14, 1
      %s158 = smul.addr %s157, 10
      %s159 = smul.addr %s158, 4
      %s160 = scalar_lea.vmem %s3, %s159
      %p161 = scmp.lt.s32.totalorder %s14, 1
      %s162 = scalar_select %p161, %s14, 1
      %s163 = smul.addr %s162, 14
      %s164 = smul.addr %s163, 4
      %s165 = scalar_lea.vmem %s0, %s164
      %p166 = scmp.lt.s32.totalorder %s14, 1
      %s167 = scalar_select %p166, %s14, 1
      %s168 = smul.addr %s167, 10
      %s169 = smul.addr %s168, 4
      %s170 = scalar_lea.vmem %s3, %s169
      loop: start=0, step=1, limit=5
      $region33: #{pnet_forward.4} parent=31 // loop_pre_header
        _
      $region34: #{pnet_forward.4} parent=31 // loop_header
        %s173 = sphi 0, %s177
        %p174 = scmp.ge.s32.totalorder %s173, 5
      $region35: #{pnet_forward.4} parent=31 // loop_header_branch
        %176 = sbr.rel (%p174) target = $region39
      $region36: #{pnet_forward.4} parent=31 // loop_body
        %s178 = smul.u32 %s173, 2
        %s179 = smul.addr %s178, 4
        %s180 = scalar_lea.vmem %s165, %s179
        %v181 = vld [vmem:[%s180] sm:$0xf]
        %v182 = vld [vmem:[%s180 + $0x4] sm:$0x1]
        %v183 = vld [vmem:[%s1] sm:$0xf]
        %v184 = vld [vmem:[%s1 + $0x4] sm:$0xf]
        %s185 = scalar_lea.vmem %s1, 8
        %v186 = vld [vmem:[%s185] sm:$0xf]
        %v187 = vld [vmem:[%s185 + $0x4] sm:$0xf]
        %v190 = vunpack.c.l.b16 %v186
        %v191 = vunpack.c.l.b16 %v187
        %v192 = vpack.c.b16 %v191, %v190
        %v195 = vunpack.c.l.b16 %v181
        %v196 = vunpack.c.l.b16 %v182
        %v197 = vpack.c.b16 %v196, %v195
        %198 = vrot.lane.b32.xlu0 %v197, 127
        %v199 = vpop.permute.xlu0 %198
        %vm200 = vcmask 80896
        %v202 = vsel %vm200, %v192, 0
        %vm204 = vcmask 1044480
        %v206 = vsel %vm204, %v199, 0
        %208 = vmatpush.bf16.msra.mxu0 0
        %209 = vmatpush.bf16.msra.mxu0 0
        %210 = vmatpush.bf16.msra.mxu0 0
        %211 = vmatpush.bf16.msra.mxu0 0
        %212 = vmatpush.bf16.msra.mxu0 0
        %213 = vmatpush.bf16.msra.mxu0 0
        %214 = vmatpush.bf16.msra.mxu0 0
        %215 = vmatpush.bf16.msra.mxu0 %v206
        %216 = vmatmul.bf16.gmra.mxu0 %v202
        %v217 = vpop.f32.mrf.mxu0
        %v218 = vadd.f32 0.0, %v217
        %v219 = vpop.f32.mrf.mxu0
        %v220 = vadd.f32 0.0, %v219
        %221 = vdwg.mxu0
        %v224 = vunpack.c.l.b16 %v183
        %v225 = vunpack.c.l.b16 %v184
        %v226 = vpack.c.b16 %v225, %v224
        %v228 = vsel %vm200, %v226, 0
        %v231 = vsel %vm204, %v197, 0
        %233 = vmatpush.bf16.msra.mxu0 0
        %234 = vmatpush.bf16.msra.mxu0 0
        %235 = vmatpush.bf16.msra.mxu0 0
        %236 = vmatpush.bf16.msra.mxu0 0
        %237 = vmatpush.bf16.msra.mxu0 0
        %238 = vmatpush.bf16.msra.mxu0 0
        %239 = vmatpush.bf16.msra.mxu0 0
        %240 = vmatpush.bf16.msra.mxu0 %v231
        %241 = vmatmul.bf16.gmra.mxu0 %v228
        %v242 = vpop.f32.mrf.mxu0
        %v243 = vadd.f32 %v218, %v242
        %v244 = vpop.f32.mrf.mxu0
        %v245 = vadd.f32 %v220, %v244
        %246 = vdwg.mxu0
        %s247 = scalar_lea.vmem %s1, 16
        %v248 = vld [vmem:[%s247] sm:$0xf]
        %v249 = vld [vmem:[%s247 + $0x4] sm:$0xf]
        %v252 = vunpack.c.l.b16 %v248
        %v253 = vunpack.c.l.b16 %v249
        %v254 = vpack.c.b16 %v253, %v252
        %255 = vrot.lane.b32.xlu0 %v197, 126
        %v256 = vpop.permute.xlu0 %255
        %v258 = vsel %vm200, %v254, 0
        %v261 = vsel %vm204, %v256, 0
        %263 = vmatpush.bf16.msra.mxu0 0
        %264 = vmatpush.bf16.msra.mxu0 0
        %265 = vmatpush.bf16.msra.mxu0 0
        %266 = vmatpush.bf16.msra.mxu0 0
        %267 = vmatpush.bf16.msra.mxu0 0
        %268 = vmatpush.bf16.msra.mxu0 0
        %269 = vmatpush.bf16.msra.mxu0 0
        %270 = vmatpush.bf16.msra.mxu0 %v261
        %271 = vmatmul.bf16.gmra.mxu0 %v258
        %v272 = vpop.f32.mrf.mxu0
        %v273 = vadd.f32 0.0, %v272
        %v274 = vpop.f32.mrf.mxu0
        %v275 = vadd.f32 0.0, %v274
        %276 = vdwg.mxu0
        %v277 = vadd.f32 %v243, %v273
        %v278 = vadd.f32 %v245, %v275
        %s279 = sadd.s32 %s173, 1
        %s280 = smul.u32 %s279, 2
        %s281 = smul.addr %s280, 4
        %s282 = scalar_lea.vmem %s165, %s281
        %v283 = vld [vmem:[%s282] sm:$0xf]
        %v284 = vld [vmem:[%s282 + $0x4] sm:$0x1]
        %s285 = scalar_lea.vmem %s1, 24
        %v286 = vld [vmem:[%s285] sm:$0xf]
        %v287 = vld [vmem:[%s285 + $0x4] sm:$0xf]
        %v290 = vunpack.c.l.b16 %v286
        %v291 = vunpack.c.l.b16 %v287
        %v292 = vpack.c.b16 %v291, %v290
        %v295 = vunpack.c.l.b16 %v283
        %v296 = vunpack.c.l.b16 %v284
        %v297 = vpack.c.b16 %v296, %v295
        %v299 = vsel %vm200, %v292, 0
        %v302 = vsel %vm204, %v297, 0
        %304 = vmatpush.bf16.msra.mxu0 0
        %305 = vmatpush.bf16.msra.mxu0 0
        %306 = vmatpush.bf16.msra.mxu0 0
        %307 = vmatpush.bf16.msra.mxu0 0
        %308 = vmatpush.bf16.msra.mxu0 0
        %309 = vmatpush.bf16.msra.mxu0 0
        %310 = vmatpush.bf16.msra.mxu0 0
        %311 = vmatpush.bf16.msra.mxu0 %v302
        %312 = vmatmul.bf16.gmra.mxu0 %v299
        %v313 = vpop.f32.mrf.mxu0
        %v314 = vadd.f32 0.0, %v313
        %v315 = vpop.f32.mrf.mxu0
        %v316 = vadd.f32 0.0, %v315
        %317 = vdwg.mxu0
        %v318 = vadd.f32 %v277, %v314
        %v319 = vadd.f32 %v278, %v316
        %s320 = scalar_lea.vmem %s1, 32
        %v321 = vld [vmem:[%s320] sm:$0xf]
        %v322 = vld [vmem:[%s320 + $0x4] sm:$0xf]
        %v325 = vunpack.c.l.b16 %v321
        %v326 = vunpack.c.l.b16 %v322
        %v327 = vpack.c.b16 %v326, %v325
        %328 = vrot.lane.b32.xlu0 %v297, 127
        %v329 = vpop.permute.xlu0 %328
        %v331 = vsel %vm200, %v327, 0
        %v334 = vsel %vm204, %v329, 0
        %336 = vmatpush.bf16.msra.mxu0 0
        %337 = vmatpush.bf16.msra.mxu0 0
        %338 = vmatpush.bf16.msra.mxu0 0
        %339 = vmatpush.bf16.msra.mxu0 0
        %340 = vmatpush.bf16.msra.mxu0 0
        %341 = vmatpush.bf16.msra.mxu0 0
        %342 = vmatpush.bf16.msra.mxu0 0
        %343 = vmatpush.bf16.msra.mxu0 %v334
        %344 = vmatmul.bf16.gmra.mxu0 %v331
        %v345 = vpop.f32.mrf.mxu0
        %v346 = vadd.f32 0.0, %v345
        %v347 = vpop.f32.mrf.mxu0
        %v348 = vadd.f32 0.0, %v347
        %349 = vdwg.mxu0
        %v350 = vadd.f32 %v318, %v346
        %v351 = vadd.f32 %v319, %v348
        %s352 = scalar_lea.vmem %s1, 40
        %v353 = vld [vmem:[%s352] sm:$0xf]
        %v354 = vld [vmem:[%s352 + $0x4] sm:$0xf]
        %v357 = vunpack.c.l.b16 %v353
        %v358 = vunpack.c.l.b16 %v354
        %v359 = vpack.c.b16 %v358, %v357
        %360 = vrot.lane.b32.xlu0 %v297, 126
        %v361 = vpop.permute.xlu0 %360
        %v363 = vsel %vm200, %v359, 0
        %v366 = vsel %vm204, %v361, 0
        %368 = vmatpush.bf16.msra.mxu0 0
        %369 = vmatpush.bf16.msra.mxu0 0
        %370 = vmatpush.bf16.msra.mxu0 0
        %371 = vmatpush.bf16.msra.mxu0 0
        %372 = vmatpush.bf16.msra.mxu0 0
        %373 = vmatpush.bf16.msra.mxu0 0
        %374 = vmatpush.bf16.msra.mxu0 0
        %375 = vmatpush.bf16.msra.mxu0 %v366
        %376 = vmatmul.bf16.gmra.mxu0 %v363
        %v377 = vpop.f32.mrf.mxu0
        %v378 = vadd.f32 0.0, %v377
        %v379 = vpop.f32.mrf.mxu0
        %v380 = vadd.f32 0.0, %v379
        %381 = vdwg.mxu0
        %v382 = vadd.f32 %v350, %v378
        %v383 = vadd.f32 %v351, %v380
        %s384 = sadd.s32 %s173, 2
        %s385 = smul.u32 %s384, 2
        %s386 = smul.addr %s385, 4
        %s387 = scalar_lea.vmem %s165, %s386
        %v388 = vld [vmem:[%s387] sm:$0xf]
        %v389 = vld [vmem:[%s387 + $0x4] sm:$0x1]
        %s390 = scalar_lea.vmem %s1, 48
        %v391 = vld [vmem:[%s390] sm:$0xf]
        %v392 = vld [vmem:[%s390 + $0x4] sm:$0xf]
        %v395 = vunpack.c.l.b16 %v391
        %v396 = vunpack.c.l.b16 %v392
        %v397 = vpack.c.b16 %v396, %v395
        %v400 = vunpack.c.l.b16 %v388
        %v401 = vunpack.c.l.b16 %v389
        %v402 = vpack.c.b16 %v401, %v400
        %v404 = vsel %vm200, %v397, 0
        %v407 = vsel %vm204, %v402, 0
        %409 = vmatpush.bf16.msra.mxu0 0
        %410 = vmatpush.bf16.msra.mxu0 0
        %411 = vmatpush.bf16.msra.mxu0 0
        %412 = vmatpush.bf16.msra.mxu0 0
        %413 = vmatpush.bf16.msra.mxu0 0
        %414 = vmatpush.bf16.msra.mxu0 0
        %415 = vmatpush.bf16.msra.mxu0 0
        %416 = vmatpush.bf16.msra.mxu0 %v407
        %417 = vmatmul.bf16.gmra.mxu0 %v404
        %v418 = vpop.f32.mrf.mxu0
        %v419 = vadd.f32 0.0, %v418
        %v420 = vpop.f32.mrf.mxu0
        %v421 = vadd.f32 0.0, %v420
        %422 = vdwg.mxu0
        %v423 = vadd.f32 %v382, %v419
        %v424 = vadd.f32 %v383, %v421
        %s425 = scalar_lea.vmem %s1, 56
        %v426 = vld [vmem:[%s425] sm:$0xf]
        %v427 = vld [vmem:[%s425 + $0x4] sm:$0xf]
        %v430 = vunpack.c.l.b16 %v426
        %v431 = vunpack.c.l.b16 %v427
        %v432 = vpack.c.b16 %v431, %v430
        %433 = vrot.lane.b32.xlu0 %v402, 127
        %v434 = vpop.permute.xlu0 %433
        %v436 = vsel %vm200, %v432, 0
        %v439 = vsel %vm204, %v434, 0
        %441 = vmatpush.bf16.msra.mxu0 0
        %442 = vmatpush.bf16.msra.mxu0 0
        %443 = vmatpush.bf16.msra.mxu0 0
        %444 = vmatpush.bf16.msra.mxu0 0
        %445 = vmatpush.bf16.msra.mxu0 0
        %446 = vmatpush.bf16.msra.mxu0 0
        %447 = vmatpush.bf16.msra.mxu0 0
        %448 = vmatpush.bf16.msra.mxu0 %v439
        %449 = vmatmul.bf16.gmra.mxu0 %v436
        %v450 = vpop.f32.mrf.mxu0
        %v451 = vadd.f32 0.0, %v450
        %v452 = vpop.f32.mrf.mxu0
        %v453 = vadd.f32 0.0, %v452
        %454 = vdwg.mxu0
        %v455 = vadd.f32 %v423, %v451
        %v456 = vadd.f32 %v424, %v453
        %s457 = scalar_lea.vmem %s1, 64
        %v458 = vld [vmem:[%s457] sm:$0xf]
        %v459 = vld [vmem:[%s457 + $0x4] sm:$0xf]
        %v462 = vunpack.c.l.b16 %v458
        %v463 = vunpack.c.l.b16 %v459
        %v464 = vpack.c.b16 %v463, %v462
        %465 = vrot.lane.b32.xlu0 %v402, 126
        %v466 = vpop.permute.xlu0 %465
        %v468 = vsel %vm200, %v464, 0
        %v471 = vsel %vm204, %v466, 0
        %473 = vmatpush.bf16.msra.mxu0 0
        %474 = vmatpush.bf16.msra.mxu0 0
        %475 = vmatpush.bf16.msra.mxu0 0
        %476 = vmatpush.bf16.msra.mxu0 0
        %477 = vmatpush.bf16.msra.mxu0 0
        %478 = vmatpush.bf16.msra.mxu0 0
        %479 = vmatpush.bf16.msra.mxu0 0
        %480 = vmatpush.bf16.msra.mxu0 %v471
        %481 = vmatmul.bf16.gmra.mxu0 %v468
        %v482 = vpop.f32.mrf.mxu0
        %v483 = vadd.f32 0.0, %v482
        %v484 = vpop.f32.mrf.mxu0
        %v485 = vadd.f32 0.0, %v484
        %486 = vdwg.mxu0
        %v487 = vadd.f32 %v455, %v483
        %v488 = vadd.f32 %v456, %v485
        %v489 = vld [vmem:[%s2] sm:$0xff]
        %v490 = vld [vmem:[%s2 + $0x8] sm:$0xff]
        %492 = vset.pattern.permute.xlu0 0
        %493 = vperm.xlu0 %492, %v489
        %v494 = vpop.permute.xlu0 %493
        %497 = vset.pattern.permute.xlu0 0
        %498 = vperm.xlu0 %497, %v490
        %v499 = vpop.permute.xlu0 %498
        %v501 = vadd.f32 %v487, %v494
        %v502 = vadd.f32 %v488, %v499
        %v503 = vmax.f32 %v501, 0.0
        %v504 = vmax.f32 %v502, 0.0
        %v505 = vpack.c.bf16 %v503, %v503
        %v506 = vpack.c.bf16 %v504, %v504
        %s507 = smul.addr %s178, 4
        %s508 = scalar_lea.vmem %s170, %s507
        %vm509 = vcmask 35840
        %510 = vst.msk [vmem:[%s508] sm:$0xf] %vm509, %v505
        %511 = vst.msk [vmem:[%s508 + $0x4] sm:$0xf] %vm509, %v506
      $region37: #{pnet_forward.4} parent=31 // loop_footer
        %s177 = sadd.s32 1, %s173
      $region38: #{pnet_forward.4} parent=31 // loop_footer_branch
        %172 = sbr.rel target = $region34
      $region39: #{pnet_forward.4} parent=31 // loop_exit
        _
      %p512 = scmp.lt.s32.totalorder %s14, 1
      %s513 = scalar_select %p512, %s14, 1
      %s514 = smul.addr %s513, 10
      %s515 = smul.addr %s514, 4
      %s516 = scalar_lea.vmem %s3, %s515
      // Predicated region
      $region40: #{pnet_forward.4} parent=31 // pred_check
        %p517 = pneg %p100
      $region41: #{pnet_forward.4} parent=31 // pred_check_branch
        %519 = sbr.rel (%p517) target = $region43
      $region42: #{pnet_forward.4} parent=31 // pred_region
        _
      $region43: #{pnet_forward.4} parent=31 // pred_fallthru
        _
    $region32: #{pnet_forward.4} parent=5 // pred_fallthru
      _
    %p520 = scmp.le.s32.totalorder 2, %s9
    // Predicated region
    $region44: #{pnet_forward.4} parent=5 // pred_check
      %p521 = pneg %p520
    $region45: #{pnet_forward.4} parent=5 // pred_check_branch
      %523 = sbr.rel (%p521) target = $region47
    $region46: #{pnet_forward.4} parent=5 // pred_region
      %s524 = ssub.s32 %s9, 2
      // Predicated region
      $region48: #{pnet_forward.4} parent=46 // pred_check
        %p525 = pneg %p106
      $region49: #{pnet_forward.4} parent=46 // pred_check_branch
        %527 = sbr.rel (%p525) target = $region51
      $region50: #{pnet_forward.4} parent=46 // pred_region
        %p528 = scmp.lt.s32.totalorder %s15, 1
        %s529 = scalar_select %p528, %s15, 1
        %s530 = smul.addr %s529, 10
        %s531 = smul.addr %s530, 4
        %s532 = scalar_lea.vmem %s3, %s531
      $region51: #{pnet_forward.4} parent=46 // pred_fallthru
        _
    $region47: #{pnet_forward.4} parent=5 // pred_fallthru
      _
  $region6: #{pnet_forward.4} parent=0 // loop_footer
    %s13 = sadd.s32 1, %s9
  $region7: #{pnet_forward.4} parent=0 // loop_footer_branch
    %8 = sbr.rel target = $region3
  $region8: #{pnet_forward.4} parent=0 // loop_exit
    _

// kernel: pnet_forward.3
$region0: #{pnet_forward.3}
  #allocation0 [shape = 'u32[]', space=smem, size = 0x4, offset = 0x4, fixed_abs, tag = 'smem constant byte address 0x4 - core index']
  #allocation1 [shape = 'u32[72,128]{1,0:T(1,128)}', space=vmem, size = 0x9000, scoped, tag = 'internal scratch']
  %s0 = inlined_call_operand.vmem [shape: bf16[2,16,3,8], index: 0, kind: input, shape index: {}]
  %s1 = inlined_call_operand.vmem [shape: bf16[2,16,3,8], index: 1, kind: input, shape index: {}]
  %s2 = inlined_call_operand.vmem [shape: bf16[3,3,10,3], index: 2, kind: input, shape index: {}]
  %s3 = inlined_call_operand.vmem [shape: f32[10,1], index: 3, kind: input, shape index: {}]
  %s4 = inlined_call_operand.vmem [shape: bf16[2,7,10,7], index: 4, kind: output, shape index: {}]
  %s5 = sld [smem:[#allocation0]]
  $region56: #{pnet_forward.3} parent=0
    _
  %s7 = ssub.s32 1, %s5
  %s8 = scalar_select 0, %s7, %s5
  loop: start=0, step=1, limit=4
  $region2: #{pnet_forward.3} parent=0 // loop_pre_header
    _
  $region3: #{pnet_forward.3} parent=0 // loop_header
    %s10 = sphi 0, %s14
    %p11 = scmp.ge.s32.totalorder %s10, 4
    %s20 = sphi 0, %s22
    %s23 = sphi 0, %s20
    %s24 = sphi 0, %s23
    %s40 = sphi 0, %s24
    %s46 = sphi 0, %s48
    %s49 = sphi 0, %s46
    %s50 = sphi 0, %s49
    %s66 = sphi 0, %s50
    %s70 = sphi 0, %s70
    %s72 = sphi 0, %s70
    %s73 = sphi 0, %s72
    %s87 = sphi 0, %s73
    %s91 = sphi 0, %s91
    %s93 = sphi 0, %s91
    %s94 = sphi 0, %s93
    %s108 = sphi 0, %s94
    %s114 = sphi 0, %s116
    %s117 = sphi 0, %s114
    %s118 = sphi 0, %s117
    %s134 = sphi 0, %s118
  $region4: #{pnet_forward.3} parent=0 // loop_header_branch
    %13 = sbr.rel (%p11) target = $region8
  $region5: #{pnet_forward.3} parent=0 // loop_body
    %s15 = ssub.s32 %s10, 1
    %s16 = ssub.s32 %s10, 2
    %s17 = sadd.s32 %s10, 1
    %s18 = ssub.s32 %s10, %s17
    %p19 = scmp.eq.s32.totalorder %s18, 0
    %s21 = sadd.s32 %s20, 1
    %s22 = scalar_select %p19, %s20, %s21
    %p25 = pneg %p19
    %p26 = scmp.eq.s32.totalorder %s10, 1
    %p27 = por %p25, %p26
    %p28 = scmp.ne.s32.totalorder %s20, %s23
    %p29 = scmp.eq.s32.totalorder %s10, 0
    %p30 = por %p28, %p29
    %p31 = scmp.ne.s32.totalorder %s20, %s23
    %p32 = scmp.eq.s32.totalorder %s15, 1
    %p33 = por %p31, %p32
    %p34 = scmp.ne.s32.totalorder %s23, %s24
    %p35 = scmp.eq.s32.totalorder %s15, 0
    %p36 = por %p34, %p35
    %p37 = scmp.ne.s32.totalorder %s23, %s24
    %p38 = scmp.eq.s32.totalorder %s16, 1
    %p39 = por %p37, %p38
    %p41 = scmp.ne.s32.totalorder %s24, %s40
    %p42 = scmp.eq.s32.totalorder %s16, 0
    %p43 = por %p41, %p42
    %s44 = ssub.s32 %s10, %s17
    %p45 = scmp.eq.s32.totalorder %s44, 0
    %s47 = sadd.s32 %s46, 1
    %s48 = scalar_select %p45, %s46, %s47
    %p51 = pneg %p45
    %p52 = scmp.eq.s32.totalorder %s10, 1
    %p53 = por %p51, %p52
    %p54 = scmp.ne.s32.totalorder %s46, %s49
    %p55 = scmp.eq.s32.totalorder %s10, 0
    %p56 = por %p54, %p55
    %p57 = scmp.ne.s32.totalorder %s46, %s49
    %p58 = scmp.eq.s32.totalorder %s15, 1
    %p59 = por %p57, %p58
    %p60 = scmp.ne.s32.totalorder %s49, %s50
    %p61 = scmp.eq.s32.totalorder %s15, 0
    %p62 = por %p60, %p61
    %p63 = scmp.ne.s32.totalorder %s49, %s50
    %p64 = scmp.eq.s32.totalorder %s16, 1
    %p65 = por %p63, %p64
    %p67 = scmp.ne.s32.totalorder %s50, %s66
    %p68 = scmp.eq.s32.totalorder %s16, 0
    %p69 = por %p67, %p68
    %s71 = sadd.s32 %s70, 1
    %p74 = scmp.eq.s32.totalorder %s10, 1
    %p75 = scmp.ne.s32.totalorder %s70, %s72
    %p76 = scmp.eq.s32.totalorder %s10, 0
    %p77 = por %p75, %p76
    %p78 = scmp.ne.s32.totalorder %s70, %s72
    %p79 = scmp.eq.s32.totalorder %s15, 1
    %p80 = por %p78, %p79
    %p81 = scmp.ne.s32.totalorder %s72, %s73
    %p82 = scmp.eq.s32.totalorder %s15, 0
    %p83 = por %p81, %p82
    %p84 = scmp.ne.s32.totalorder %s72, %s73
    %p85 = scmp.eq.s32.totalorder %s16, 1
    %p86 = por %p84, %p85
    %p88 = scmp.ne.s32.totalorder %s73, %s87
    %p89 = scmp.eq.s32.totalorder %s16, 0
    %p90 = por %p88, %p89
    %s92 = sadd.s32 %s91, 1
    %p95 = scmp.eq.s32.totalorder %s10, 1
    %p96 = scmp.ne.s32.totalorder %s91, %s93
    %p97 = scmp.eq.s32.totalorder %s10, 0
    %p98 = por %p96, %p97
    %p99 = scmp.ne.s32.totalorder %s91, %s93
    %p100 = scmp.eq.s32.totalorder %s15, 1
    %p101 = por %p99, %p100
    %p102 = scmp.ne.s32.totalorder %s93, %s94
    %p103 = scmp.eq.s32.totalorder %s15, 0
    %p104 = por %p102, %p103
    %p105 = scmp.ne.s32.totalorder %s93, %s94
    %p106 = scmp.eq.s32.totalorder %s16, 1
    %p107 = por %p105, %p106
    %p109 = scmp.ne.s32.totalorder %s94, %s108
    %p110 = scmp.eq.s32.totalorder %s16, 0
    %p111 = por %p109, %p110
    %s112 = ssub.s32 %s10, %s17
    %p113 = scmp.eq.s32.totalorder %s112, 0
    %s115 = sadd.s32 %s114, 1
    %s116 = scalar_select %p113, %s114, %s115
    %p119 = pneg %p113
    %p120 = scmp.eq.s32.totalorder %s10, 1
    %p121 = por %p119, %p120
    %p122 = scmp.ne.s32.totalorder %s114, %s117
    %p123 = scmp.eq.s32.totalorder %s10, 0
    %p124 = por %p122, %p123
    %p125 = scmp.ne.s32.totalorder %s114, %s117
    %p126 = scmp.eq.s32.totalorder %s15, 1
    %p127 = por %p125, %p126
    %p128 = scmp.ne.s32.totalorder %s117, %s118
    %p129 = scmp.eq.s32.totalorder %s15, 0
    %p130 = por %p128, %p129
    %p131 = scmp.ne.s32.totalorder %s117, %s118
    %p132 = scmp.eq.s32.totalorder %s16, 1
    %p133 = por %p131, %p132
    %p135 = scmp.ne.s32.totalorder %s118, %s134
    %p136 = scmp.eq.s32.totalorder %s16, 0
    %p137 = por %p135, %p136
    %p138 = scmp.le.s32.totalorder 1, %s10
    %p139 = scmp.lt.s32.totalorder %s10, 3
    %p140 = pnand %p138, %p139
    %p141 = pneg %p140
    // Predicated region
    $region9: #{pnet_forward.3} parent=5 // pred_check
      _
    $region10: #{pnet_forward.3} parent=5 // pred_check_branch
      %143 = sbr.rel (%p140) target = $region12
    $region11: #{pnet_forward.3} parent=5 // pred_region
      %s144 = ssub.s32 %s10, 1
      // Predicated region
      $region13: #{pnet_forward.3} parent=11 // pred_check
        %p145 = pneg %p83
      $region14: #{pnet_forward.3} parent=11 // pred_check_branch
        %147 = sbr.rel (%p145) target = $region16
      $region15: #{pnet_forward.3} parent=11 // pred_region
        _
      $region16: #{pnet_forward.3} parent=11 // pred_fallthru
        _
      // Predicated region
      $region17: #{pnet_forward.3} parent=11 // pred_check
        %p148 = pneg %p104
      $region18: #{pnet_forward.3} parent=11 // pred_check_branch
        %150 = sbr.rel (%p148) target = $region20
      $region19: #{pnet_forward.3} parent=11 // pred_region
        _
      $region20: #{pnet_forward.3} parent=11 // pred_fallthru
        _
    $region12: #{pnet_forward.3} parent=5 // pred_fallthru
      _
    %p151 = scmp.lt.s32.totalorder %s10, 2
    // Predicated region
    $region21: #{pnet_forward.3} parent=5 // pred_check
      %p152 = pneg %p151
    $region22: #{pnet_forward.3} parent=5 // pred_check_branch
      %154 = sbr.rel (%p152) target = $region24
    $region23: #{pnet_forward.3} parent=5 // pred_region
      // Predicated region
      $region25: #{pnet_forward.3} parent=23 // pred_check
        %p155 = pneg %p30
      $region26: #{pnet_forward.3} parent=23 // pred_check_branch
        %157 = sbr.rel (%p155) target = $region28
      $region27: #{pnet_forward.3} parent=23 // pred_region
        %p158 = scmp.lt.s32.totalorder %s10, 1
        %s159 = scalar_select %p158, %s10, 1
        %s160 = smul.addr %s159, 16
        %s161 = smul.addr %s160, 2
        %s162 = scalar_lea.vmem %s0, %s161
      $region28: #{pnet_forward.3} parent=23 // pred_fallthru
        _
      // Predicated region
      $region29: #{pnet_forward.3} parent=23 // pred_check
        %p163 = pneg %p56
      $region30: #{pnet_forward.3} parent=23 // pred_check_branch
        %165 = sbr.rel (%p163) target = $region32
      $region31: #{pnet_forward.3} parent=23 // pred_region
        %p166 = scmp.lt.s32.totalorder %s10, 1
        %s167 = scalar_select %p166, %s10, 1
        %s168 = smul.addr %s167, 16
        %s169 = smul.addr %s168, 2
        %s170 = scalar_lea.vmem %s1, %s169
      $region32: #{pnet_forward.3} parent=23 // pred_fallthru
        _
    $region24: #{pnet_forward.3} parent=5 // pred_fallthru
      _
    %p171 = scmp.le.s32.totalorder 1, %s10
    %p172 = scmp.lt.s32.totalorder %s10, 3
    %p173 = pnand %p171, %p172
    %p174 = pneg %p173
    // Predicated region
    $region33: #{pnet_forward.3} parent=5 // pred_check
      _
    $region34: #{pnet_forward.3} parent=5 // pred_check_branch
      %176 = sbr.rel (%p173) target = $region36
    $region35: #{pnet_forward.3} parent=5 // pred_region
      %s177 = ssub.s32 %s10, 1
      %p178 = scmp.lt.s32.totalorder %s15, 1
      %s179 = scalar_select %p178, %s15, 1
      %s180 = smul.addr %s179, 16
      %s181 = smul.addr %s180, 2
      %s182 = scalar_lea.vmem %s0, %s181
      %p183 = pneg %p36
      %p184 = pneg %p33
      %p185 = scmp.lt.s32.totalorder %s15, 1
      %s186 = scalar_select %p185, %s15, 1
      %s187 = smul.addr %s186, 16
      %s188 = smul.addr %s187, 2
      %s189 = scalar_lea.vmem %s1, %s188
      %p190 = pneg %p62
      %p191 = pneg %p59
      %p192 = pneg %p83
      %p193 = pneg %p80
      %p194 = pneg %p104
      %p195 = pneg %p101
      %p196 = pneg %p130
      %p197 = pneg %p127
      %p198 = scmp.lt.s32.totalorder %s15, 1
      %s199 = scalar_select %p198, %s15, 1
      %s200 = smul.addr %s199, 14
      %s201 = smul.addr %s200, 4
      %s202 = scalar_lea.vmem %s4, %s201
      %p203 = scmp.lt.s32.totalorder %s15, 1
      %s204 = scalar_select %p203, %s15, 1
      %s205 = smul.addr %s204, 16
      %s206 = smul.addr %s205, 2
      %s207 = scalar_lea.vmem %s0, %s206
      %p208 = scmp.lt.s32.totalorder %s15, 1
      %s209 = scalar_select %p208, %s15, 1
      %s210 = smul.addr %s209, 16
      %s211 = smul.addr %s210, 2
      %s212 = scalar_lea.vmem %s1, %s211
      %p213 = scmp.lt.s32.totalorder %s15, 1
      %s214 = scalar_select %p213, %s15, 1
      %s215 = smul.addr %s214, 14
      %s216 = smul.addr %s215, 4
      %s217 = scalar_lea.vmem %s4, %s216
      loop: start=0, step=1, limit=7
      $region37: #{pnet_forward.3} parent=35 // loop_pre_header
        _
      $region38: #{pnet_forward.3} parent=35 // loop_header
        %s220 = sphi 0, %s224
        %p221 = scmp.ge.s32.totalorder %s220, 7
      $region39: #{pnet_forward.3} parent=35 // loop_header_branch
        %223 = sbr.rel (%p221) target = $region43
      $region40: #{pnet_forward.3} parent=35 // loop_body
        %s225 = smul.u32 %s220, 2
        %s226 = smul.addr %s225, 2
        %s227 = scalar_lea.vmem %s207, %s226
        %v228 = vld [vmem:[%s227] sm:$0x3]
        %s229 = smul.addr %s225, 2
        %s230 = scalar_lea.vmem %s212, %s229
        %v231 = vld [vmem:[%s230] sm:$0x3]
        %s232 = sadd.s32 %s225, 1
        %s233 = smul.addr %s232, 2
        %s234 = scalar_lea.vmem %s207, %s233
        %v235 = vld [vmem:[%s234] sm:$0x3]
        %s236 = smul.addr %s232, 2
        %s237 = scalar_lea.vmem %s212, %s236
        %v238 = vld [vmem:[%s237] sm:$0x3]
        %s239 = sadd.s32 %s225, 2
        %s240 = smul.addr %s239, 2
        %s241 = scalar_lea.vmem %s207, %s240
        %v242 = vld [vmem:[%s241] sm:$0x3]
        %s243 = smul.addr %s239, 2
        %s244 = scalar_lea.vmem %s212, %s243
        %v245 = vld [vmem:[%s244] sm:$0x3]
        %s246 = sadd.s32 %s225, 3
        %s247 = smul.addr %s246, 2
        %s248 = scalar_lea.vmem %s207, %s247
        %v249 = vld [vmem:[%s248] sm:$0x3]
        %s250 = smul.addr %s246, 2
        %s251 = scalar_lea.vmem %s212, %s250
        %v252 = vld [vmem:[%s251] sm:$0x3]
        %v253 = vld [vmem:[%s2] sm:$0xf]
        %v254 = vld [vmem:[%s2 + $0x4] sm:$0x1]
        %s255 = scalar_lea.vmem %s2, 8
        %v256 = vld [vmem:[%s255] sm:$0xf]
        %v257 = vld [vmem:[%s255 + $0x4] sm:$0x1]
        %v260 = vunpack.c.l.b16 %v256
        %v261 = vunpack.c.l.b16 %v257
        %v262 = vpack.c.b16 %v261, %v260
        %vm263 = vcmask 23552
        %v265 = vsel %vm263, %v262, 0
        %vm267 = vcmask 1040384
        %vm268 = vcmask 1041408
        %v269 = vsel %vm267, 4294967295, 65535
        %v270 = vsel %vm268, %v269, 0
        %v272 = vand.u32 %v231, %v270
        %274 = vmatpush.bf16.msra.mxu0 0
        %275 = vmatpush.bf16.msra.mxu0 0
        %276 = vmatpush.bf16.msra.mxu0 0
        %277 = vmatpush.bf16.msra.mxu0 0
        %278 = vmatpush.bf16.msra.mxu0 0
        %279 = vmatpush.bf16.msra.mxu0 0
        %280 = vmatpush.bf16.msra.mxu0 0
        %281 = vmatpush.bf16.msra.mxu0 %v272
        %282 = vmatmul.bf16.gmra.mxu0 %v265
        %v283 = vpop.f32.mrf.mxu0
        %v284 = vadd.f32 0.0, %v283
        %v285 = vpop.f32.mrf.mxu0
        %v286 = vadd.f32 0.0, %v285
        %287 = vdwg.mxu0
        %v290 = vunpack.c.l.b16 %v253
        %v291 = vunpack.c.l.b16 %v254
        %v292 = vpack.c.b16 %v291, %v290
        %v294 = vsel %vm263, %v292, 0
        %v297 = vand.u32 %v228, %v270
        %299 = vmatpush.bf16.msra.mxu0 0
        %300 = vmatpush.bf16.msra.mxu0 0
        %301 = vmatpush.bf16.msra.mxu0 0
        %302 = vmatpush.bf16.msra.mxu0 0
        %303 = vmatpush.bf16.msra.mxu0 0
        %304 = vmatpush.bf16.msra.mxu0 0
        %305 = vmatpush.bf16.msra.mxu0 0
        %306 = vmatpush.bf16.msra.mxu0 %v297
        %307 = vmatmul.bf16.gmra.mxu0 %v294
        %v308 = vpop.f32.mrf.mxu0
        %v309 = vadd.f32 %v284, %v308
        %v310 = vpop.f32.mrf.mxu0
        %v311 = vadd.f32 %v286, %v310
        %312 = vdwg.mxu0
        %s313 = scalar_lea.vmem %s2, 16
        %v314 = vld [vmem:[%s313] sm:$0xf]
        %v315 = vld [vmem:[%s313 + $0x4] sm:$0x1]
        %v318 = vunpack.c.l.b16 %v314
        %v319 = vunpack.c.l.b16 %v315
        %v320 = vpack.c.b16 %v319, %v318
        %321 = vst [vmem:[#allocation1] ss:$4 sm:$0xff] %v228
        %v322 = vld.sshfl [vmem:[#allocation1] sm:$0xff pattern:$0x73625140]
        %324 = vrot.lane.b32.xlu0 %v322, 127
        %v325 = vpop.permute.xlu0 %324
        %v327 = vsel %vm263, %v320, 0
        %v330 = vand.u32 %v325, %v270
        %332 = vmatpush.bf16.msra.mxu0 0
        %333 = vmatpush.bf16.msra.mxu0 0
        %334 = vmatpush.bf16.msra.mxu0 0
        %335 = vmatpush.bf16.msra.mxu0 0
        %336 = vmatpush.bf16.msra.mxu0 0
        %337 = vmatpush.bf16.msra.mxu0 0
        %338 = vmatpush.bf16.msra.mxu0 0
        %339 = vmatpush.bf16.msra.mxu0 %v330
        %340 = vmatmul.bf16.gmra.mxu0 %v327
        %v341 = vpop.f32.mrf.mxu0
        %v342 = vadd.f32 0.0, %v341
        %v343 = vpop.f32.mrf.mxu0
        %v344 = vadd.f32 0.0, %v343
        %345 = vdwg.mxu0
        %v346 = vadd.f32 %v309, %v342
        %v347 = vadd.f32 %v311, %v344
        %s348 = scalar_lea.vmem %s2, 24
        %v349 = vld [vmem:[%s348] sm:$0xf]
        %v350 = vld [vmem:[%s348 + $0x4] sm:$0x1]
        %v353 = vunpack.c.l.b16 %v349
        %v354 = vunpack.c.l.b16 %v350
        %v355 = vpack.c.b16 %v354, %v353
        %v357 = vsel %vm263, %v355, 0
        %v360 = vand.u32 %v235, %v270
        %362 = vmatpush.bf16.msra.mxu0 0
        %363 = vmatpush.bf16.msra.mxu0 0
        %364 = vmatpush.bf16.msra.mxu0 0
        %365 = vmatpush.bf16.msra.mxu0 0
        %366 = vmatpush.bf16.msra.mxu0 0
        %367 = vmatpush.bf16.msra.mxu0 0
        %368 = vmatpush.bf16.msra.mxu0 0
        %369 = vmatpush.bf16.msra.mxu0 %v360
        %370 = vmatmul.bf16.gmra.mxu0 %v357
        %v371 = vpop.f32.mrf.mxu0
        %v372 = vadd.f32 0.0, %v371
        %v373 = vpop.f32.mrf.mxu0
        %v374 = vadd.f32 0.0, %v373
        %375 = vdwg.mxu0
        %v376 = vadd.f32 %v346, %v372
        %v377 = vadd.f32 %v347, %v374
        %s378 = scalar_lea.vmem %s2, 32
        %v379 = vld [vmem:[%s378] sm:$0xf]
        %v380 = vld [vmem:[%s378 + $0x4] sm:$0x1]
        %v383 = vunpack.c.l.b16 %v379
        %v384 = vunpack.c.l.b16 %v380
        %v385 = vpack.c.b16 %v384, %v383
        %v387 = vsel %vm263, %v385, 0
        %v390 = vand.u32 %v238, %v270
        %392 = vmatpush.bf16.msra.mxu0 0
        %393 = vmatpush.bf16.msra.mxu0 0
        %394 = vmatpush.bf16.msra.mxu0 0
        %395 = vmatpush.bf16.msra.mxu0 0
        %396 = vmatpush.bf16.msra.mxu0 0
        %397 = vmatpush.bf16.msra.mxu0 0
        %398 = vmatpush.bf16.msra.mxu0 0
        %399 = vmatpush.bf16.msra.mxu0 %v390
        %400 = vmatmul.bf16.gmra.mxu0 %v387
        %v401 = vpop.f32.mrf.mxu0
        %v402 = vadd.f32 0.0, %v401
        %v403 = vpop.f32.mrf.mxu0
        %v404 = vadd.f32 0.0, %v403
        %405 = vdwg.mxu0
        %v406 = vadd.f32 %v376, %v402
        %v407 = vadd.f32 %v377, %v404
        %s408 = scalar_lea.vmem %s2, 40
        %v409 = vld [vmem:[%s408] sm:$0xf]
        %v410 = vld [vmem:[%s408 + $0x4] sm:$0x1]
        %v413 = vunpack.c.l.b16 %v409
        %v414 = vunpack.c.l.b16 %v410
        %v415 = vpack.c.b16 %v414, %v413
        %416 = vst [vmem:[#allocation1] ss:$4 sm:$0xff] %v235
        %v417 = vld.sshfl [vmem:[#allocation1] sm:$0xff pattern:$0x73625140]
        %419 = vrot.lane.b32.xlu0 %v417, 127
        %v420 = vpop.permute.xlu0 %419
        %v422 = vsel %vm263, %v415, 0
        %v425 = vand.u32 %v420, %v270
        %427 = vmatpush.bf16.msra.mxu0 0
        %428 = vmatpush.bf16.msra.mxu0 0
        %429 = vmatpush.bf16.msra.mxu0 0
        %430 = vmatpush.bf16.msra.mxu0 0
        %431 = vmatpush.bf16.msra.mxu0 0
        %432 = vmatpush.bf16.msra.mxu0 0
        %433 = vmatpush.bf16.msra.mxu0 0
        %434 = vmatpush.bf16.msra.mxu0 %v425
        %435 = vmatmul.bf16.gmra.mxu0 %v422
        %v436 = vpop.f32.mrf.mxu0
        %v437 = vadd.f32 0.0, %v436
        %v438 = vpop.f32.mrf.mxu0
        %v439 = vadd.f32 0.0, %v438
        %440 = vdwg.mxu0
        %v441 = vadd.f32 %v406, %v437
        %v442 = vadd.f32 %v407, %v439
        %s443 = scalar_lea.vmem %s2, 48
        %v444 = vld [vmem:[%s443] sm:$0xf]
        %v445 = vld [vmem:[%s443 + $0x4] sm:$0x1]
        %v448 = vunpack.c.l.b16 %v444
        %v449 = vunpack.c.l.b16 %v445
        %v450 = vpack.c.b16 %v449, %v448
        %v452 = vsel %vm263, %v450, 0
        %v455 = vand.u32 %v242, %v270
        %457 = vmatpush.bf16.msra.mxu0 0
        %458 = vmatpush.bf16.msra.mxu0 0
        %459 = vmatpush.bf16.msra.mxu0 0
        %460 = vmatpush.bf16.msra.mxu0 0
        %461 = vmatpush.bf16.msra.mxu0 0
        %462 = vmatpush.bf16.msra.mxu0 0
        %463 = vmatpush.bf16.msra.mxu0 0
        %464 = vmatpush.bf16.msra.mxu0 %v455
        %465 = vmatmul.bf16.gmra.mxu0 %v452
        %v466 = vpop.f32.mrf.mxu0
        %v467 = vadd.f32 0.0, %v466
        %v468 = vpop.f32.mrf.mxu0
        %v469 = vadd.f32 0.0, %v468
        %470 = vdwg.mxu0
        %v471 = vadd.f32 %v441, %v467
        %v472 = vadd.f32 %v442, %v469
        %s473 = scalar_lea.vmem %s2, 56
        %v474 = vld [vmem:[%s473] sm:$0xf]
        %v475 = vld [vmem:[%s473 + $0x4] sm:$0x1]
        %v478 = vunpack.c.l.b16 %v474
        %v479 = vunpack.c.l.b16 %v475
        %v480 = vpack.c.b16 %v479, %v478
        %v482 = vsel %vm263, %v480, 0
        %v485 = vand.u32 %v245, %v270
        %487 = vmatpush.bf16.msra.mxu0 0
        %488 = vmatpush.bf16.msra.mxu0 0
        %489 = vmatpush.bf16.msra.mxu0 0
        %490 = vmatpush.bf16.msra.mxu0 0
        %491 = vmatpush.bf16.msra.mxu0 0
        %492 = vmatpush.bf16.msra.mxu0 0
        %493 = vmatpush.bf16.msra.mxu0 0
        %494 = vmatpush.bf16.msra.mxu0 %v485
        %495 = vmatmul.bf16.gmra.mxu0 %v482
        %v496 = vpop.f32.mrf.mxu0
        %v497 = vadd.f32 0.0, %v496
        %v498 = vpop.f32.mrf.mxu0
        %v499 = vadd.f32 0.0, %v498
        %500 = vdwg.mxu0
        %v501 = vadd.f32 %v471, %v497
        %v502 = vadd.f32 %v472, %v499
        %s503 = scalar_lea.vmem %s2, 64
        %v504 = vld [vmem:[%s503] sm:$0xf]
        %v505 = vld [vmem:[%s503 + $0x4] sm:$0x1]
        %v508 = vunpack.c.l.b16 %v504
        %v509 = vunpack.c.l.b16 %v505
        %v510 = vpack.c.b16 %v509, %v508
        %511 = vst [vmem:[#allocation1] ss:$4 sm:$0xff] %v242
        %v512 = vld.sshfl [vmem:[#allocation1] sm:$0xff pattern:$0x73625140]
        %514 = vrot.lane.b32.xlu0 %v512, 127
        %v515 = vpop.permute.xlu0 %514
        %v517 = vsel %vm263, %v510, 0
        %v520 = vand.u32 %v515, %v270
        %522 = vmatpush.bf16.msra.mxu0 0
        %523 = vmatpush.bf16.msra.mxu0 0
        %524 = vmatpush.bf16.msra.mxu0 0
        %525 = vmatpush.bf16.msra.mxu0 0
        %526 = vmatpush.bf16.msra.mxu0 0
        %527 = vmatpush.bf16.msra.mxu0 0
        %528 = vmatpush.bf16.msra.mxu0 0
        %529 = vmatpush.bf16.msra.mxu0 %v520
        %530 = vmatmul.bf16.gmra.mxu0 %v517
        %v531 = vpop.f32.mrf.mxu0
        %v532 = vadd.f32 0.0, %v531
        %v533 = vpop.f32.mrf.mxu0
        %v534 = vadd.f32 0.0, %v533
        %535 = vdwg.mxu0
        %v536 = vadd.f32 %v501, %v532
        %v537 = vadd.f32 %v502, %v534
        %538 = vst [vmem:[#allocation1] ss:$4 sm:$0xff] %v228
        %v539 = vld.sshfl [vmem:[#allocation1] sm:$0xff pattern:$0x73625140]
        %541 = vrot.lane.b32.xlu0 %v539, 127
        %v542 = vpop.permute.xlu0 %541
        %v544 = vand.u32 %v542, %v270
        %546 = vmatpush.bf16.msra.mxu0 0
        %547 = vmatpush.bf16.msra.mxu0 0
        %548 = vmatpush.bf16.msra.mxu0 0
        %549 = vmatpush.bf16.msra.mxu0 0
        %550 = vmatpush.bf16.msra.mxu0 0
        %551 = vmatpush.bf16.msra.mxu0 0
        %552 = vmatpush.bf16.msra.mxu0 0
        %553 = vmatpush.bf16.msra.mxu0 %v544
        %554 = vmatmul.bf16.gmra.mxu0 %v265
        %v555 = vpop.f32.mrf.mxu0
        %v556 = vadd.f32 0.0, %v555
        %v557 = vpop.f32.mrf.mxu0
        %v558 = vadd.f32 0.0, %v557
        %559 = vdwg.mxu0
        %560 = vmatpush.bf16.msra.mxu0 0
        %561 = vmatpush.bf16.msra.mxu0 0
        %562 = vmatpush.bf16.msra.mxu0 0
        %563 = vmatpush.bf16.msra.mxu0 0
        %564 = vmatpush.bf16.msra.mxu0 0
        %565 = vmatpush.bf16.msra.mxu0 0
        %566 = vmatpush.bf16.msra.mxu0 0
        %567 = vmatpush.bf16.msra.mxu0 %v272
        %568 = vmatmul.bf16.gmra.mxu0 %v294
        %v569 = vpop.f32.mrf.mxu0
        %v570 = vadd.f32 %v556, %v569
        %v571 = vpop.f32.mrf.mxu0
        %v572 = vadd.f32 %v558, %v571
        %573 = vdwg.mxu0
        %574 = vst [vmem:[#allocation1] ss:$4 sm:$0xff] %v231
        %v575 = vld.sshfl [vmem:[#allocation1] sm:$0xff pattern:$0x73625140]
        %577 = vrot.lane.b32.xlu0 %v575, 127
        %v578 = vpop.permute.xlu0 %577
        %v580 = vand.u32 %v578, %v270
        %582 = vmatpush.bf16.msra.mxu0 0
        %583 = vmatpush.bf16.msra.mxu0 0
        %584 = vmatpush.bf16.msra.mxu0 0
        %585 = vmatpush.bf16.msra.mxu0 0
        %586 = vmatpush.bf16.msra.mxu0 0
        %587 = vmatpush.bf16.msra.mxu0 0
        %588 = vmatpush.bf16.msra.mxu0 0
        %589 = vmatpush.bf16.msra.mxu0 %v580
        %590 = vmatmul.bf16.gmra.mxu0 %v327
        %v591 = vpop.f32.mrf.mxu0
        %v592 = vadd.f32 0.0, %v591
        %v593 = vpop.f32.mrf.mxu0
        %v594 = vadd.f32 0.0, %v593
        %595 = vdwg.mxu0
        %v596 = vadd.f32 %v570, %v592
        %v597 = vadd.f32 %v572, %v594
        %598 = vmatpush.bf16.msra.mxu0 0
        %599 = vmatpush.bf16.msra.mxu0 0
        %600 = vmatpush.bf16.msra.mxu0 0
        %601 = vmatpush.bf16.msra.mxu0 0
        %602 = vmatpush.bf16.msra.mxu0 0
        %603 = vmatpush.bf16.msra.mxu0 0
        %604 = vmatpush.bf16.msra.mxu0 0
        %605 = vmatpush.bf16.msra.mxu0 %v390
        %606 = vmatmul.bf16.gmra.mxu0 %v357
        %v607 = vpop.f32.mrf.mxu0
        %v608 = vadd.f32 0.0, %v607
        %v609 = vpop.f32.mrf.mxu0
        %v610 = vadd.f32 0.0, %v609
        %611 = vdwg.mxu0
        %v612 = vadd.f32 %v596, %v608
        %v613 = vadd.f32 %v597, %v610
        %614 = vst [vmem:[#allocation1] ss:$4 sm:$0xff] %v235
        %v615 = vld.sshfl [vmem:[#allocation1] sm:$0xff pattern:$0x73625140]
        %617 = vrot.lane.b32.xlu0 %v615, 127
        %v618 = vpop.permute.xlu0 %617
        %v620 = vand.u32 %v618, %v270
        %622 = vmatpush.bf16.msra.mxu0 0
        %623 = vmatpush.bf16.msra.mxu0 0
        %624 = vmatpush.bf16.msra.mxu0 0
        %625 = vmatpush.bf16.msra.mxu0 0
        %626 = vmatpush.bf16.msra.mxu0 0
        %627 = vmatpush.bf16.msra.mxu0 0
        %628 = vmatpush.bf16.msra.mxu0 0
        %629 = vmatpush.bf16.msra.mxu0 %v620
        %630 = vmatmul.bf16.gmra.mxu0 %v387
        %v631 = vpop.f32.mrf.mxu0
        %v632 = vadd.f32 0.0, %v631
        %v633 = vpop.f32.mrf.mxu0
        %v634 = vadd.f32 0.0, %v633
        %635 = vdwg.mxu0
        %v636 = vadd.f32 %v612, %v632
        %v637 = vadd.f32 %v613, %v634
        %638 = vst [vmem:[#allocation1] ss:$4 sm:$0xff] %v238
        %v639 = vld.sshfl [vmem:[#allocation1] sm:$0xff pattern:$0x73625140]
        %641 = vrot.lane.b32.xlu0 %v639, 127
        %v642 = vpop.permute.xlu0 %641
        %v644 = vand.u32 %v642, %v270
        %646 = vmatpush.bf16.msra.mxu0 0
        %647 = vmatpush.bf16.msra.mxu0 0
        %648 = vmatpush.bf16.msra.mxu0 0
        %649 = vmatpush.bf16.msra.mxu0 0
        %650 = vmatpush.bf16.msra.mxu0 0
        %651 = vmatpush.bf16.msra.mxu0 0
        %652 = vmatpush.bf16.msra.mxu0 0
        %653 = vmatpush.bf16.msra.mxu0 %v644
        %654 = vmatmul.bf16.gmra.mxu0 %v422
        %v655 = vpop.f32.mrf.mxu0
        %v656 = vadd.f32 0.0, %v655
        %v657 = vpop.f32.mrf.mxu0
        %v658 = vadd.f32 0.0, %v657
        %659 = vdwg.mxu0
        %v660 = vadd.f32 %v636, %v656
        %v661 = vadd.f32 %v637, %v658
        %662 = vmatpush.bf16.msra.mxu0 0
        %663 = vmatpush.bf16.msra.mxu0 0
        %664 = vmatpush.bf16.msra.mxu0 0
        %665 = vmatpush.bf16.msra.mxu0 0
        %666 = vmatpush.bf16.msra.mxu0 0
        %667 = vmatpush.bf16.msra.mxu0 0
        %668 = vmatpush.bf16.msra.mxu0 0
        %669 = vmatpush.bf16.msra.mxu0 %v485
        %670 = vmatmul.bf16.gmra.mxu0 %v452
        %v671 = vpop.f32.mrf.mxu0
        %v672 = vadd.f32 0.0, %v671
        %v673 = vpop.f32.mrf.mxu0
        %v674 = vadd.f32 0.0, %v673
        %675 = vdwg.mxu0
        %v676 = vadd.f32 %v660, %v672
        %v677 = vadd.f32 %v661, %v674
        %678 = vst [vmem:[#allocation1] ss:$4 sm:$0xff] %v242
        %v679 = vld.sshfl [vmem:[#allocation1] sm:$0xff pattern:$0x73625140]
        %681 = vrot.lane.b32.xlu0 %v679, 127
        %v682 = vpop.permute.xlu0 %681
        %v684 = vand.u32 %v682, %v270
        %686 = vmatpush.bf16.msra.mxu0 0
        %687 = vmatpush.bf16.msra.mxu0 0
        %688 = vmatpush.bf16.msra.mxu0 0
        %689 = vmatpush.bf16.msra.mxu0 0
        %690 = vmatpush.bf16.msra.mxu0 0
        %691 = vmatpush.bf16.msra.mxu0 0
        %692 = vmatpush.bf16.msra.mxu0 0
        %693 = vmatpush.bf16.msra.mxu0 %v684
        %694 = vmatmul.bf16.gmra.mxu0 %v482
        %v695 = vpop.f32.mrf.mxu0
        %v696 = vadd.f32 0.0, %v695
        %v697 = vpop.f32.mrf.mxu0
        %v698 = vadd.f32 0.0, %v697
        %699 = vdwg.mxu0
        %v700 = vadd.f32 %v676, %v696
        %v701 = vadd.f32 %v677, %v698
        %702 = vst [vmem:[#allocation1] ss:$4 sm:$0xff] %v245
        %v703 = vld.sshfl [vmem:[#allocation1] sm:$0xff pattern:$0x73625140]
        %705 = vrot.lane.b32.xlu0 %v703, 127
        %v706 = vpop.permute.xlu0 %705
        %v708 = vand.u32 %v706, %v270
        %710 = vmatpush.bf16.msra.mxu0 0
        %711 = vmatpush.bf16.msra.mxu0 0
        %712 = vmatpush.bf16.msra.mxu0 0
        %713 = vmatpush.bf16.msra.mxu0 0
        %714 = vmatpush.bf16.msra.mxu0 0
        %715 = vmatpush.bf16.msra.mxu0 0
        %716 = vmatpush.bf16.msra.mxu0 0
        %717 = vmatpush.bf16.msra.mxu0 %v708
        %718 = vmatmul.bf16.gmra.mxu0 %v517
        %v719 = vpop.f32.mrf.mxu0
        %v720 = vadd.f32 0.0, %v719
        %v721 = vpop.f32.mrf.mxu0
        %v722 = vadd.f32 0.0, %v721
        %723 = vdwg.mxu0
        %v724 = vadd.f32 %v700, %v720
        %v725 = vadd.f32 %v701, %v722
        %v726 = vmax.f32 %v536, %v724
        %v727 = vmax.f32 %v537, %v725
        %728 = vmatpush.bf16.msra.mxu0 0
        %729 = vmatpush.bf16.msra.mxu0 0
        %730 = vmatpush.bf16.msra.mxu0 0
        %731 = vmatpush.bf16.msra.mxu0 0
        %732 = vmatpush.bf16.msra.mxu0 0
        %733 = vmatpush.bf16.msra.mxu0 0
        %734 = vmatpush.bf16.msra.mxu0 0
        %735 = vmatpush.bf16.msra.mxu0 %v390
        %736 = vmatmul.bf16.gmra.mxu0 %v265
        %v737 = vpop.f32.mrf.mxu0
        %v738 = vadd.f32 0.0, %v737
        %v739 = vpop.f32.mrf.mxu0
        %v740 = vadd.f32 0.0, %v739
        %741 = vdwg.mxu0
        %742 = vmatpush.bf16.msra.mxu0 0
        %743 = vmatpush.bf16.msra.mxu0 0
        %744 = vmatpush.bf16.msra.mxu0 0
        %745 = vmatpush.bf16.msra.mxu0 0
        %746 = vmatpush.bf16.msra.mxu0 0
        %747 = vmatpush.bf16.msra.mxu0 0
        %748 = vmatpush.bf16.msra.mxu0 0
        %749 = vmatpush.bf16.msra.mxu0 %v360
        %750 = vmatmul.bf16.gmra.mxu0 %v294
        %v751 = vpop.f32.mrf.mxu0
        %v752 = vadd.f32 %v738, %v751
        %v753 = vpop.f32.mrf.mxu0
        %v754 = vadd.f32 %v740, %v753
        %755 = vdwg.mxu0
        %756 = vst [vmem:[#allocation1] ss:$4 sm:$0xff] %v235
        %v757 = vld.sshfl [vmem:[#allocation1] sm:$0xff pattern:$0x73625140]
        %759 = vrot.lane.b32.xlu0 %v757, 127
        %v760 = vpop.permute.xlu0 %759
        %v762 = vand.u32 %v760, %v270
        %764 = vmatpush.bf16.msra.mxu0 0
        %765 = vmatpush.bf16.msra.mxu0 0
        %766 = vmatpush.bf16.msra.mxu0 0
        %767 = vmatpush.bf16.msra.mxu0 0
        %768 = vmatpush.bf16.msra.mxu0 0
        %769 = vmatpush.bf16.msra.mxu0 0
        %770 = vmatpush.bf16.msra.mxu0 0
        %771 = vmatpush.bf16.msra.mxu0 %v762
        %772 = vmatmul.bf16.gmra.mxu0 %v327
        %v773 = vpop.f32.mrf.mxu0
        %v774 = vadd.f32 0.0, %v773
        %v775 = vpop.f32.mrf.mxu0
        %v776 = vadd.f32 0.0, %v775
        %777 = vdwg.mxu0
        %v778 = vadd.f32 %v752, %v774
        %v779 = vadd.f32 %v754, %v776
        %780 = vmatpush.bf16.msra.mxu0 0
        %781 = vmatpush.bf16.msra.mxu0 0
        %782 = vmatpush.bf16.msra.mxu0 0
        %783 = vmatpush.bf16.msra.mxu0 0
        %784 = vmatpush.bf16.msra.mxu0 0
        %785 = vmatpush.bf16.msra.mxu0 0
        %786 = vmatpush.bf16.msra.mxu0 0
        %787 = vmatpush.bf16.msra.mxu0 %v455
        %788 = vmatmul.bf16.gmra.mxu0 %v357
        %v789 = vpop.f32.mrf.mxu0
        %v790 = vadd.f32 0.0, %v789
        %v791 = vpop.f32.mrf.mxu0
        %v792 = vadd.f32 0.0, %v791
        %793 = vdwg.mxu0
        %v794 = vadd.f32 %v778, %v790
        %v795 = vadd.f32 %v779, %v792
        %796 = vmatpush.bf16.msra.mxu0 0
        %797 = vmatpush.bf16.msra.mxu0 0
        %798 = vmatpush.bf16.msra.mxu0 0
        %799 = vmatpush.bf16.msra.mxu0 0
        %800 = vmatpush.bf16.msra.mxu0 0
        %801 = vmatpush.bf16.msra.mxu0 0
        %802 = vmatpush.bf16.msra.mxu0 0
        %803 = vmatpush.bf16.msra.mxu0 %v485
        %804 = vmatmul.bf16.gmra.mxu0 %v387
        %v805 = vpop.f32.mrf.mxu0
        %v806 = vadd.f32 0.0, %v805
        %v807 = vpop.f32.mrf.mxu0
        %v808 = vadd.f32 0.0, %v807
        %809 = vdwg.mxu0
        %v810 = vadd.f32 %v794, %v806
        %v811 = vadd.f32 %v795, %v808
        %812 = vst [vmem:[#allocation1] ss:$4 sm:$0xff] %v242
        %v813 = vld.sshfl [vmem:[#allocation1] sm:$0xff pattern:$0x73625140]
        %815 = vrot.lane.b32.xlu0 %v813, 127
        %v816 = vpop.permute.xlu0 %815
        %v818 = vand.u32 %v816, %v270
        %820 = vmatpush.bf16.msra.mxu0 0
        %821 = vmatpush.bf16.msra.mxu0 0
        %822 = vmatpush.bf16.msra.mxu0 0
        %823 = vmatpush.bf16.msra.mxu0 0
        %824 = vmatpush.bf16.msra.mxu0 0
        %825 = vmatpush.bf16.msra.mxu0 0
        %826 = vmatpush.bf16.msra.mxu0 0
        %827 = vmatpush.bf16.msra.mxu0 %v818
        %828 = vmatmul.bf16.gmra.mxu0 %v422
        %v829 = vpop.f32.mrf.mxu0
        %v830 = vadd.f32 0.0, %v829
        %v831 = vpop.f32.mrf.mxu0
        %v832 = vadd.f32 0.0, %v831
        %833 = vdwg.mxu0
        %v834 = vadd.f32 %v810, %v830
        %v835 = vadd.f32 %v811, %v832
        %v837 = vand.u32 %v249, %v270
        %839 = vmatpush.bf16.msra.mxu0 0
        %840 = vmatpush.bf16.msra.mxu0 0
        %841 = vmatpush.bf16.msra.mxu0 0
        %842 = vmatpush.bf16.msra.mxu0 0
        %843 = vmatpush.bf16.msra.mxu0 0
        %844 = vmatpush.bf16.msra.mxu0 0
        %845 = vmatpush.bf16.msra.mxu0 0
        %846 = vmatpush.bf16.msra.mxu0 %v837
        %847 = vmatmul.bf16.gmra.mxu0 %v452
        %v848 = vpop.f32.mrf.mxu0
        %v849 = vadd.f32 0.0, %v848
        %v850 = vpop.f32.mrf.mxu0
        %v851 = vadd.f32 0.0, %v850
        %852 = vdwg.mxu0
        %v853 = vadd.f32 %v834, %v849
        %v854 = vadd.f32 %v835, %v851
        %v856 = vand.u32 %v252, %v270
        %858 = vmatpush.bf16.msra.mxu0 0
        %859 = vmatpush.bf16.msra.mxu0 0
        %860 = vmatpush.bf16.msra.mxu0 0
        %861 = vmatpush.bf16.msra.mxu0 0
        %862 = vmatpush.bf16.msra.mxu0 0
        %863 = vmatpush.bf16.msra.mxu0 0
        %864 = vmatpush.bf16.msra.mxu0 0
        %865 = vmatpush.bf16.msra.mxu0 %v856
        %866 = vmatmul.bf16.gmra.mxu0 %v482
        %v867 = vpop.f32.mrf.mxu0
        %v868 = vadd.f32 0.0, %v867
        %v869 = vpop.f32.mrf.mxu0
        %v870 = vadd.f32 0.0, %v869
        %871 = vdwg.mxu0
        %v872 = vadd.f32 %v853, %v868
        %v873 = vadd.f32 %v854, %v870
        %874 = vst [vmem:[#allocation1] ss:$4 sm:$0xff] %v249
        %v875 = vld.sshfl [vmem:[#allocation1] sm:$0xff pattern:$0x73625140]
        %877 = vrot.lane.b32.xlu0 %v875, 127
        %v878 = vpop.permute.xlu0 %877
        %v880 = vand.u32 %v878, %v270
        %882 = vmatpush.bf16.msra.mxu0 0
        %883 = vmatpush.bf16.msra.mxu0 0
        %884 = vmatpush.bf16.msra.mxu0 0
        %885 = vmatpush.bf16.msra.mxu0 0
        %886 = vmatpush.bf16.msra.mxu0 0
        %887 = vmatpush.bf16.msra.mxu0 0
        %888 = vmatpush.bf16.msra.mxu0 0
        %889 = vmatpush.bf16.msra.mxu0 %v880
        %890 = vmatmul.bf16.gmra.mxu0 %v517
        %v891 = vpop.f32.mrf.mxu0
        %v892 = vadd.f32 0.0, %v891
        %v893 = vpop.f32.mrf.mxu0
        %v894 = vadd.f32 0.0, %v893
        %895 = vdwg.mxu0
        %v896 = vadd.f32 %v872, %v892
        %v897 = vadd.f32 %v873, %v894
        %v898 = vmax.f32 %v726, %v896
        %v899 = vmax.f32 %v727, %v897
        %900 = vst [vmem:[#allocation1] ss:$4 sm:$0xff] %v235
        %v901 = vld.sshfl [vmem:[#allocation1] sm:$0xff pattern:$0x73625140]
        %903 = vrot.lane.b32.xlu0 %v901, 127
        %v904 = vpop.permute.xlu0 %903
        %v906 = vand.u32 %v904, %v270
        %908 = vmatpush.bf16.msra.mxu0 0
        %909 = vmatpush.bf16.msra.mxu0 0
        %910 = vmatpush.bf16.msra.mxu0 0
        %911 = vmatpush.bf16.msra.mxu0 0
        %912 = vmatpush.bf16.msra.mxu0 0
        %913 = vmatpush.bf16.msra.mxu0 0
        %914 = vmatpush.bf16.msra.mxu0 0
        %915 = vmatpush.bf16.msra.mxu0 %v906
        %916 = vmatmul.bf16.gmra.mxu0 %v265
        %v917 = vpop.f32.mrf.mxu0
        %v918 = vadd.f32 0.0, %v917
        %v919 = vpop.f32.mrf.mxu0
        %v920 = vadd.f32 0.0, %v919
        %921 = vdwg.mxu0
        %922 = vmatpush.bf16.msra.mxu0 0
        %923 = vmatpush.bf16.msra.mxu0 0
        %924 = vmatpush.bf16.msra.mxu0 0
        %925 = vmatpush.bf16.msra.mxu0 0
        %926 = vmatpush.bf16.msra.mxu0 0
        %927 = vmatpush.bf16.msra.mxu0 0
        %928 = vmatpush.bf16.msra.mxu0 0
        %929 = vmatpush.bf16.msra.mxu0 %v390
        %930 = vmatmul.bf16.gmra.mxu0 %v294
        %v931 = vpop.f32.mrf.mxu0
        %v932 = vadd.f32 %v918, %v931
        %v933 = vpop.f32.mrf.mxu0
        %v934 = vadd.f32 %v920, %v933
        %935 = vdwg.mxu0
        %936 = vst [vmem:[#allocation1] ss:$4 sm:$0xff] %v238
        %v937 = vld.sshfl [vmem:[#allocation1] sm:$0xff pattern:$0x73625140]
        %939 = vrot.lane.b32.xlu0 %v937, 127
        %v940 = vpop.permute.xlu0 %939
        %v942 = vand.u32 %v940, %v270
        %944 = vmatpush.bf16.msra.mxu0 0
        %945 = vmatpush.bf16.msra.mxu0 0
        %946 = vmatpush.bf16.msra.mxu0 0
        %947 = vmatpush.bf16.msra.mxu0 0
        %948 = vmatpush.bf16.msra.mxu0 0
        %949 = vmatpush.bf16.msra.mxu0 0
        %950 = vmatpush.bf16.msra.mxu0 0
        %951 = vmatpush.bf16.msra.mxu0 %v942
        %952 = vmatmul.bf16.gmra.mxu0 %v327
        %v953 = vpop.f32.mrf.mxu0
        %v954 = vadd.f32 0.0, %v953
        %v955 = vpop.f32.mrf.mxu0
        %v956 = vadd.f32 0.0, %v955
        %957 = vdwg.mxu0
        %v958 = vadd.f32 %v932, %v954
        %v959 = vadd.f32 %v934, %v956
        %960 = vmatpush.bf16.msra.mxu0 0
        %961 = vmatpush.bf16.msra.mxu0 0
        %962 = vmatpush.bf16.msra.mxu0 0
        %963 = vmatpush.bf16.msra.mxu0 0
        %964 = vmatpush.bf16.msra.mxu0 0
        %965 = vmatpush.bf16.msra.mxu0 0
        %966 = vmatpush.bf16.msra.mxu0 0
        %967 = vmatpush.bf16.msra.mxu0 %v485
        %968 = vmatmul.bf16.gmra.mxu0 %v357
        %v969 = vpop.f32.mrf.mxu0
        %v970 = vadd.f32 0.0, %v969
        %v971 = vpop.f32.mrf.mxu0
        %v972 = vadd.f32 0.0, %v971
        %973 = vdwg.mxu0
        %v974 = vadd.f32 %v958, %v970
        %v975 = vadd.f32 %v959, %v972
        %976 = vst [vmem:[#allocation1] ss:$4 sm:$0xff] %v242
        %v977 = vld.sshfl [vmem:[#allocation1] sm:$0xff pattern:$0x73625140]
        %979 = vrot.lane.b32.xlu0 %v977, 127
        %v980 = vpop.permute.xlu0 %979
        %v982 = vand.u32 %v980, %v270
        %984 = vmatpush.bf16.msra.mxu0 0
        %985 = vmatpush.bf16.msra.mxu0 0
        %986 = vmatpush.bf16.msra.mxu0 0
        %987 = vmatpush.bf16.msra.mxu0 0
        %988 = vmatpush.bf16.msra.mxu0 0
        %989 = vmatpush.bf16.msra.mxu0 0
        %990 = vmatpush.bf16.msra.mxu0 0
        %991 = vmatpush.bf16.msra.mxu0 %v982
        %992 = vmatmul.bf16.gmra.mxu0 %v387
        %v993 = vpop.f32.mrf.mxu0
        %v994 = vadd.f32 0.0, %v993
        %v995 = vpop.f32.mrf.mxu0
        %v996 = vadd.f32 0.0, %v995
        %997 = vdwg.mxu0
        %v998 = vadd.f32 %v974, %v994
        %v999 = vadd.f32 %v975, %v996
        %1000 = vst [vmem:[#allocation1] ss:$4 sm:$0xff] %v245
        %v1001 = vld.sshfl [vmem:[#allocation1] sm:$0xff pattern:$0x73625140]
        %1003 = vrot.lane.b32.xlu0 %v1001, 127
        %v1004 = vpop.permute.xlu0 %1003
        %v1006 = vand.u32 %v1004, %v270
        %1008 = vmatpush.bf16.msra.mxu0 0
        %1009 = vmatpush.bf16.msra.mxu0 0
        %1010 = vmatpush.bf16.msra.mxu0 0
        %1011 = vmatpush.bf16.msra.mxu0 0
        %1012 = vmatpush.bf16.msra.mxu0 0
        %1013 = vmatpush.bf16.msra.mxu0 0
        %1014 = vmatpush.bf16.msra.mxu0 0
        %1015 = vmatpush.bf16.msra.mxu0 %v1006
        %1016 = vmatmul.bf16.gmra.mxu0 %v422
        %v1017 = vpop.f32.mrf.mxu0
        %v1018 = vadd.f32 0.0, %v1017
        %v1019 = vpop.f32.mrf.mxu0
        %v1020 = vadd.f32 0.0, %v1019
        %1021 = vdwg.mxu0
        %v1022 = vadd.f32 %v998, %v1018
        %v1023 = vadd.f32 %v999, %v1020
        %1024 = vmatpush.bf16.msra.mxu0 0
        %1025 = vmatpush.bf16.msra.mxu0 0
        %1026 = vmatpush.bf16.msra.mxu0 0
        %1027 = vmatpush.bf16.msra.mxu0 0
        %1028 = vmatpush.bf16.msra.mxu0 0
        %1029 = vmatpush.bf16.msra.mxu0 0
        %1030 = vmatpush.bf16.msra.mxu0 0
        %1031 = vmatpush.bf16.msra.mxu0 %v856
        %1032 = vmatmul.bf16.gmra.mxu0 %v452
        %v1033 = vpop.f32.mrf.mxu0
        %v1034 = vadd.f32 0.0, %v1033
        %v1035 = vpop.f32.mrf.mxu0
        %v1036 = vadd.f32 0.0, %v1035
        %1037 = vdwg.mxu0
        %v1038 = vadd.f32 %v1022, %v1034
        %v1039 = vadd.f32 %v1023, %v1036
        %1040 = vst [vmem:[#allocation1] ss:$4 sm:$0xff] %v249
        %v1041 = vld.sshfl [vmem:[#allocation1] sm:$0xff pattern:$0x73625140]
        %1043 = vrot.lane.b32.xlu0 %v1041, 127
        %v1044 = vpop.permute.xlu0 %1043
        %v1046 = vand.u32 %v1044, %v270
        %1048 = vmatpush.bf16.msra.mxu0 0
        %1049 = vmatpush.bf16.msra.mxu0 0
        %1050 = vmatpush.bf16.msra.mxu0 0
        %1051 = vmatpush.bf16.msra.mxu0 0
        %1052 = vmatpush.bf16.msra.mxu0 0
        %1053 = vmatpush.bf16.msra.mxu0 0
        %1054 = vmatpush.bf16.msra.mxu0 0
        %1055 = vmatpush.bf16.msra.mxu0 %v1046
        %1056 = vmatmul.bf16.gmra.mxu0 %v482
        %v1057 = vpop.f32.mrf.mxu0
        %v1058 = vadd.f32 0.0, %v1057
        %v1059 = vpop.f32.mrf.mxu0
        %v1060 = vadd.f32 0.0, %v1059
        %1061 = vdwg.mxu0
        %v1062 = vadd.f32 %v1038, %v1058
        %v1063 = vadd.f32 %v1039, %v1060
        %1064 = vst [vmem:[#allocation1] ss:$4 sm:$0xff] %v252
        %v1065 = vld.sshfl [vmem:[#allocation1] sm:$0xff pattern:$0x73625140]
        %1067 = vrot.lane.b32.xlu0 %v1065, 127
        %v1068 = vpop.permute.xlu0 %1067
        %v1070 = vand.u32 %v1068, %v270
        %1072 = vmatpush.bf16.msra.mxu0 0
        %1073 = vmatpush.bf16.msra.mxu0 0
        %1074 = vmatpush.bf16.msra.mxu0 0
        %1075 = vmatpush.bf16.msra.mxu0 0
        %1076 = vmatpush.bf16.msra.mxu0 0
        %1077 = vmatpush.bf16.msra.mxu0 0
        %1078 = vmatpush.bf16.msra.mxu0 0
        %1079 = vmatpush.bf16.msra.mxu0 %v1070
        %1080 = vmatmul.bf16.gmra.mxu0 %v517
        %v1081 = vpop.f32.mrf.mxu0
        %v1082 = vadd.f32 0.0, %v1081
        %v1083 = vpop.f32.mrf.mxu0
        %v1084 = vadd.f32 0.0, %v1083
        %1085 = vdwg.mxu0
        %v1086 = vadd.f32 %v1062, %v1082
        %v1087 = vadd.f32 %v1063, %v1084
        %v1088 = vmax.f32 %v898, %v1086
        %v1089 = vmax.f32 %v899, %v1087
        %v1090 = vld [vmem:[%s3] sm:$0xff]
        %v1091 = vld [vmem:[%s3 + $0x8] sm:$0x3]
        %1093 = vset.pattern.permute.xlu0 0
        %1094 = vperm.xlu0 %1093, %v1090
        %v1095 = vpop.permute.xlu0 %1094
        %1098 = vset.pattern.permute.xlu0 0
        %1099 = vperm.xlu0 %1098, %v1091
        %v1100 = vpop.permute.xlu0 %1099
        %v1102 = vadd.f32 %v1088, %v1095
        %v1103 = vadd.f32 %v1089, %v1100
        %v1104 = vmax.f32 %v1102, 0.0
        %v1105 = vmax.f32 %v1103, 0.0
        %v1106 = vpack.c.bf16 %v1104, %v1104
        %v1107 = vpack.c.bf16 %v1105, %v1105
        %s1108 = smul.addr %s225, 4
        %s1109 = scalar_lea.vmem %s217, %s1108
        %vm1110 = vcmask 52224
        %1111 = vst.msk [vmem:[%s1109] sm:$0xf] %vm1110, %v1106
        %vm1112 = vcmask 49152
        %1113 = vst.msk [vmem:[%s1109 + $0x4] sm:$0x1] %vm1112, %v1107
      $region41: #{pnet_forward.3} parent=35 // loop_footer
        %s224 = sadd.s32 1, %s220
      $region42: #{pnet_forward.3} parent=35 // loop_footer_branch
        %219 = sbr.rel target = $region38
      $region43: #{pnet_forward.3} parent=35 // loop_exit
        _
      %p1114 = scmp.lt.s32.totalorder %s15, 1
      %s1115 = scalar_select %p1114, %s15, 1
      %s1116 = smul.addr %s1115, 14
      %s1117 = smul.addr %s1116, 4
      %s1118 = scalar_lea.vmem %s4, %s1117
      // Predicated region
      $region44: #{pnet_forward.3} parent=35 // pred_check
        %p1119 = pneg %p127
      $region45: #{pnet_forward.3} parent=35 // pred_check_branch
        %1121 = sbr.rel (%p1119) target = $region47
      $region46: #{pnet_forward.3} parent=35 // pred_region
        _
      $region47: #{pnet_forward.3} parent=35 // pred_fallthru
        _
    $region36: #{pnet_forward.3} parent=5 // pred_fallthru
      _
    %p1122 = scmp.le.s32.totalorder 2, %s10
    // Predicated region
    $region48: #{pnet_forward.3} parent=5 // pred_check
      %p1123 = pneg %p1122
    $region49: #{pnet_forward.3} parent=5 // pred_check_branch
      %1125 = sbr.rel (%p1123) target = $region51
    $region50: #{pnet_forward.3} parent=5 // pred_region
      %s1126 = ssub.s32 %s10, 2
      // Predicated region
      $region52: #{pnet_forward.3} parent=50 // pred_check
        %p1127 = pneg %p133
      $region53: #{pnet_forward.3} parent=50 // pred_check_branch
        %1129 = sbr.rel (%p1127) target = $region55
      $region54: #{pnet_forward.3} parent=50 // pred_region
        %p1130 = scmp.lt.s32.totalorder %s16, 1
        %s1131 = scalar_select %p1130, %s16, 1
        %s1132 = smul.addr %s1131, 14
        %s1133 = smul.addr %s1132, 4
        %s1134 = scalar_lea.vmem %s4, %s1133
      $region55: #{pnet_forward.3} parent=50 // pred_fallthru
        _
    $region51: #{pnet_forward.3} parent=5 // pred_fallthru
      _
  $region6: #{pnet_forward.3} parent=0 // loop_footer
    %s14 = sadd.s32 1, %s10
  $region7: #{pnet_forward.3} parent=0 // loop_footer_branch
    %9 = sbr.rel target = $region3
  $region8: #{pnet_forward.3} parent=0 // loop_exit
    _

// kernel: pnet_forward.5
$region0: #{pnet_forward.5}
  #allocation0 [shape = 'u32[]', space=smem, size = 0x4, offset = 0x4, fixed_abs, tag = 'smem constant byte address 0x4 - core index']
  #allocation1 [shape = 'u32[72,128]{1,0:T(1,128)}', space=vmem, size = 0x9000, scoped, tag = 'internal scratch']
  %s0 = inlined_call_operand.vmem [shape: bf16[2,5,16,5], index: 0, kind: input, shape index: {}]
  %s1 = inlined_call_operand.vmem [shape: bf16[3,3,32,16], index: 1, kind: input, shape index: {}]
  %s2 = inlined_call_operand.vmem [shape: f32[32,1], index: 2, kind: input, shape index: {}]
  %s3 = inlined_call_operand.vmem [shape: bf16[16,32], index: 3, kind: input, shape index: {}]
  %s4 = inlined_call_operand.vmem [shape: f32[16,1], index: 4, kind: input, shape index: {}]
  %s5 = inlined_call_operand.vmem [shape: f32[2,3,16,3], index: 5, kind: output, shape index: {}]
  %s6 = sld [smem:[#allocation0]]
  $region60: #{pnet_forward.5} parent=0
    _
  %s8 = ssub.s32 1, %s6
  %s9 = scalar_select 0, %s8, %s6
  loop: start=0, step=1, limit=4
  $region2: #{pnet_forward.5} parent=0 // loop_pre_header
    _
  $region3: #{pnet_forward.5} parent=0 // loop_header
    %s11 = sphi 0, %s15
    %p12 = scmp.ge.s32.totalorder %s11, 4
    %s21 = sphi 0, %s23
    %s24 = sphi 0, %s21
    %s25 = sphi 0, %s24
    %s41 = sphi 0, %s25
    %s45 = sphi 0, %s45
    %s47 = sphi 0, %s45
    %s48 = sphi 0, %s47
    %s62 = sphi 0, %s48
    %s66 = sphi 0, %s66
    %s68 = sphi 0, %s66
    %s69 = sphi 0, %s68
    %s83 = sphi 0, %s69
    %s87 = sphi 0, %s87
    %s89 = sphi 0, %s87
    %s90 = sphi 0, %s89
    %s104 = sphi 0, %s90
    %s108 = sphi 0, %s108
    %s110 = sphi 0, %s108
    %s111 = sphi 0, %s110
    %s125 = sphi 0, %s111
    %s131 = sphi 0, %s133
    %s134 = sphi 0, %s131
    %s135 = sphi 0, %s134
    %s151 = sphi 0, %s135
  $region4: #{pnet_forward.5} parent=0 // loop_header_branch
    %14 = sbr.rel (%p12) target = $region8
  $region5: #{pnet_forward.5} parent=0 // loop_body
    %s16 = ssub.s32 %s11, 1
    %s17 = ssub.s32 %s11, 2
    %s18 = sadd.s32 %s11, 1
    %s19 = ssub.s32 %s11, %s18
    %p20 = scmp.eq.s32.totalorder %s19, 0
    %s22 = sadd.s32 %s21, 1
    %s23 = scalar_select %p20, %s21, %s22
    %p26 = pneg %p20
    %p27 = scmp.eq.s32.totalorder %s11, 1
    %p28 = por %p26, %p27
    %p29 = scmp.ne.s32.totalorder %s21, %s24
    %p30 = scmp.eq.s32.totalorder %s11, 0
    %p31 = por %p29, %p30
    %p32 = scmp.ne.s32.totalorder %s21, %s24
    %p33 = scmp.eq.s32.totalorder %s16, 1
    %p34 = por %p32, %p33
    %p35 = scmp.ne.s32.totalorder %s24, %s25
    %p36 = scmp.eq.s32.totalorder %s16, 0
    %p37 = por %p35, %p36
    %p38 = scmp.ne.s32.totalorder %s24, %s25
    %p39 = scmp.eq.s32.totalorder %s17, 1
    %p40 = por %p38, %p39
    %p42 = scmp.ne.s32.totalorder %s25, %s41
    %p43 = scmp.eq.s32.totalorder %s17, 0
    %p44 = por %p42, %p43
    %s46 = sadd.s32 %s45, 1
    %p49 = scmp.eq.s32.totalorder %s11, 1
    %p50 = scmp.ne.s32.totalorder %s45, %s47
    %p51 = scmp.eq.s32.totalorder %s11, 0
    %p52 = por %p50, %p51
    %p53 = scmp.ne.s32.totalorder %s45, %s47
    %p54 = scmp.eq.s32.totalorder %s16, 1
    %p55 = por %p53, %p54
    %p56 = scmp.ne.s32.totalorder %s47, %s48
    %p57 = scmp.eq.s32.totalorder %s16, 0
    %p58 = por %p56, %p57
    %p59 = scmp.ne.s32.totalorder %s47, %s48
    %p60 = scmp.eq.s32.totalorder %s17, 1
    %p61 = por %p59, %p60
    %p63 = scmp.ne.s32.totalorder %s48, %s62
    %p64 = scmp.eq.s32.totalorder %s17, 0
    %p65 = por %p63, %p64
    %s67 = sadd.s32 %s66, 1
    %p70 = scmp.eq.s32.totalorder %s11, 1
    %p71 = scmp.ne.s32.totalorder %s66, %s68
    %p72 = scmp.eq.s32.totalorder %s11, 0
    %p73 = por %p71, %p72
    %p74 = scmp.ne.s32.totalorder %s66, %s68
    %p75 = scmp.eq.s32.totalorder %s16, 1
    %p76 = por %p74, %p75
    %p77 = scmp.ne.s32.totalorder %s68, %s69
    %p78 = scmp.eq.s32.totalorder %s16, 0
    %p79 = por %p77, %p78
    %p80 = scmp.ne.s32.totalorder %s68, %s69
    %p81 = scmp.eq.s32.totalorder %s17, 1
    %p82 = por %p80, %p81
    %p84 = scmp.ne.s32.totalorder %s69, %s83
    %p85 = scmp.eq.s32.totalorder %s17, 0
    %p86 = por %p84, %p85
    %s88 = sadd.s32 %s87, 1
    %p91 = scmp.eq.s32.totalorder %s11, 1
    %p92 = scmp.ne.s32.totalorder %s87, %s89
    %p93 = scmp.eq.s32.totalorder %s11, 0
    %p94 = por %p92, %p93
    %p95 = scmp.ne.s32.totalorder %s87, %s89
    %p96 = scmp.eq.s32.totalorder %s16, 1
    %p97 = por %p95, %p96
    %p98 = scmp.ne.s32.totalorder %s89, %s90
    %p99 = scmp.eq.s32.totalorder %s16, 0
    %p100 = por %p98, %p99
    %p101 = scmp.ne.s32.totalorder %s89, %s90
    %p102 = scmp.eq.s32.totalorder %s17, 1
    %p103 = por %p101, %p102
    %p105 = scmp.ne.s32.totalorder %s90, %s104
    %p106 = scmp.eq.s32.totalorder %s17, 0
    %p107 = por %p105, %p106
    %s109 = sadd.s32 %s108, 1
    %p112 = scmp.eq.s32.totalorder %s11, 1
    %p113 = scmp.ne.s32.totalorder %s108, %s110
    %p114 = scmp.eq.s32.totalorder %s11, 0
    %p115 = por %p113, %p114
    %p116 = scmp.ne.s32.totalorder %s108, %s110
    %p117 = scmp.eq.s32.totalorder %s16, 1
    %p118 = por %p116, %p117
    %p119 = scmp.ne.s32.totalorder %s110, %s111
    %p120 = scmp.eq.s32.totalorder %s16, 0
    %p121 = por %p119, %p120
    %p122 = scmp.ne.s32.totalorder %s110, %s111
    %p123 = scmp.eq.s32.totalorder %s17, 1
    %p124 = por %p122, %p123
    %p126 = scmp.ne.s32.totalorder %s111, %s125
    %p127 = scmp.eq.s32.totalorder %s17, 0
    %p128 = por %p126, %p127
    %s129 = ssub.s32 %s11, %s18
    %p130 = scmp.eq.s32.totalorder %s129, 0
    %s132 = sadd.s32 %s131, 1
    %s133 = scalar_select %p130, %s131, %s132
    %p136 = pneg %p130
    %p137 = scmp.eq.s32.totalorder %s11, 1
    %p138 = por %p136, %p137
    %p139 = scmp.ne.s32.totalorder %s131, %s134
    %p140 = scmp.eq.s32.totalorder %s11, 0
    %p141 = por %p139, %p140
    %p142 = scmp.ne.s32.totalorder %s131, %s134
    %p143 = scmp.eq.s32.totalorder %s16, 1
    %p144 = por %p142, %p143
    %p145 = scmp.ne.s32.totalorder %s134, %s135
    %p146 = scmp.eq.s32.totalorder %s16, 0
    %p147 = por %p145, %p146
    %p148 = scmp.ne.s32.totalorder %s134, %s135
    %p149 = scmp.eq.s32.totalorder %s17, 1
    %p150 = por %p148, %p149
    %p152 = scmp.ne.s32.totalorder %s135, %s151
    %p153 = scmp.eq.s32.totalorder %s17, 0
    %p154 = por %p152, %p153
    %p155 = scmp.le.s32.totalorder 1, %s11
    %p156 = scmp.lt.s32.totalorder %s11, 3
    %p157 = pnand %p155, %p156
    %p158 = pneg %p157
    // Predicated region
    $region9: #{pnet_forward.5} parent=5 // pred_check
      _
    $region10: #{pnet_forward.5} parent=5 // pred_check_branch
      %160 = sbr.rel (%p157) target = $region12
    $region11: #{pnet_forward.5} parent=5 // pred_region
      %s161 = ssub.s32 %s11, 1
      // Predicated region
      $region13: #{pnet_forward.5} parent=11 // pred_check
        %p162 = pneg %p58
      $region14: #{pnet_forward.5} parent=11 // pred_check_branch
        %164 = sbr.rel (%p162) target = $region16
      $region15: #{pnet_forward.5} parent=11 // pred_region
        _
      $region16: #{pnet_forward.5} parent=11 // pred_fallthru
        _
      // Predicated region
      $region17: #{pnet_forward.5} parent=11 // pred_check
        %p165 = pneg %p79
      $region18: #{pnet_forward.5} parent=11 // pred_check_branch
        %167 = sbr.rel (%p165) target = $region20
      $region19: #{pnet_forward.5} parent=11 // pred_region
        _
      $region20: #{pnet_forward.5} parent=11 // pred_fallthru
        _
      // Predicated region
      $region21: #{pnet_forward.5} parent=11 // pred_check
        %p168 = pneg %p100
      $region22: #{pnet_forward.5} parent=11 // pred_check_branch
        %170 = sbr.rel (%p168) target = $region24
      $region23: #{pnet_forward.5} parent=11 // pred_region
        _
      $region24: #{pnet_forward.5} parent=11 // pred_fallthru
        _
      // Predicated region
      $region25: #{pnet_forward.5} parent=11 // pred_check
        %p171 = pneg %p121
      $region26: #{pnet_forward.5} parent=11 // pred_check_branch
        %173 = sbr.rel (%p171) target = $region28
      $region27: #{pnet_forward.5} parent=11 // pred_region
        _
      $region28: #{pnet_forward.5} parent=11 // pred_fallthru
        _
    $region12: #{pnet_forward.5} parent=5 // pred_fallthru
      _
    %p174 = scmp.lt.s32.totalorder %s11, 2
    // Predicated region
    $region29: #{pnet_forward.5} parent=5 // pred_check
      %p175 = pneg %p174
    $region30: #{pnet_forward.5} parent=5 // pred_check_branch
      %177 = sbr.rel (%p175) target = $region32
    $region31: #{pnet_forward.5} parent=5 // pred_region
      // Predicated region
      $region33: #{pnet_forward.5} parent=31 // pred_check
        %p178 = pneg %p31
      $region34: #{pnet_forward.5} parent=31 // pred_check_branch
        %180 = sbr.rel (%p178) target = $region36
      $region35: #{pnet_forward.5} parent=31 // pred_region
        %p181 = scmp.lt.s32.totalorder %s11, 1
        %s182 = scalar_select %p181, %s11, 1
        %s183 = smul.addr %s182, 10
        %s184 = smul.addr %s183, 4
        %s185 = scalar_lea.vmem %s0, %s184
      $region36: #{pnet_forward.5} parent=31 // pred_fallthru
        _
    $region32: #{pnet_forward.5} parent=5 // pred_fallthru
      _
    %p186 = scmp.le.s32.totalorder 1, %s11
    %p187 = scmp.lt.s32.totalorder %s11, 3
    %p188 = pnand %p186, %p187
    %p189 = pneg %p188
    // Predicated region
    $region37: #{pnet_forward.5} parent=5 // pred_check
      _
    $region38: #{pnet_forward.5} parent=5 // pred_check_branch
      %191 = sbr.rel (%p188) target = $region40
    $region39: #{pnet_forward.5} parent=5 // pred_region
      %s192 = ssub.s32 %s11, 1
      %p193 = scmp.lt.s32.totalorder %s16, 1
      %s194 = scalar_select %p193, %s16, 1
      %s195 = smul.addr %s194, 10
      %s196 = smul.addr %s195, 4
      %s197 = scalar_lea.vmem %s0, %s196
      %p198 = pneg %p37
      %p199 = pneg %p34
      %p200 = pneg %p58
      %p201 = pneg %p55
      %p202 = pneg %p79
      %p203 = pneg %p76
      %p204 = pneg %p100
      %p205 = pneg %p97
      %p206 = pneg %p121
      %p207 = pneg %p118
      %p208 = pneg %p147
      %p209 = pneg %p144
      %p210 = scmp.lt.s32.totalorder %s16, 1
      %s211 = scalar_select %p210, %s16, 1
      %s212 = smul.addr %s211, 6
      %s213 = smul.addr %s212, 8
      %s214 = scalar_lea.vmem %s5, %s213
      %p215 = scmp.lt.s32.totalorder %s16, 1
      %s216 = scalar_select %p215, %s16, 1
      %s217 = smul.addr %s216, 10
      %s218 = smul.addr %s217, 4
      %s219 = scalar_lea.vmem %s0, %s218
      %p220 = scmp.lt.s32.totalorder %s16, 1
      %s221 = scalar_select %p220, %s16, 1
      %s222 = smul.addr %s221, 6
      %s223 = smul.addr %s222, 8
      %s224 = scalar_lea.vmem %s5, %s223
      loop: start=0, step=1, limit=3
      $region41: #{pnet_forward.5} parent=39 // loop_pre_header
        _
      $region42: #{pnet_forward.5} parent=39 // loop_header
        %s227 = sphi 0, %s231
        %p228 = scmp.ge.s32.totalorder %s227, 3
      $region43: #{pnet_forward.5} parent=39 // loop_header_branch
        %230 = sbr.rel (%p228) target = $region47
      $region44: #{pnet_forward.5} parent=39 // loop_body
        %s232 = smul.u32 %s227, 2
        %s233 = smul.addr %s232, 4
        %s234 = scalar_lea.vmem %s219, %s233
        %v235 = vld [vmem:[%s234] sm:$0xf]
        %v236 = vld [vmem:[%s234 + $0x4] sm:$0xf]
        %v237 = vld [vmem:[%s1] sm:$0xf]
        %v238 = vld [vmem:[%s1 + $0x4] sm:$0xf]
        %v239 = vld [vmem:[%s1 + $0x8] sm:$0xf]
        %v240 = vld [vmem:[%s1 + $0xc] sm:$0xf]
        %s241 = scalar_lea.vmem %s1, 16
        %v242 = vld [vmem:[%s241] sm:$0xf]
        %v243 = vld [vmem:[%s241 + $0x4] sm:$0xf]
        %v244 = vld [vmem:[%s241 + $0x8] sm:$0xf]
        %v245 = vld [vmem:[%s241 + $0xc] sm:$0xf]
        %v250 = vunpack.c.l.b16 %v242
        %v251 = vunpack.c.l.b16 %v243
        %v252 = vunpack.c.l.b16 %v244
        %v253 = vunpack.c.l.b16 %v245
        %v254 = vpack.c.b16 %v251, %v250
        %v255 = vpack.c.b16 %v253, %v252
        %v258 = vunpack.c.l.b16 %v235
        %v259 = vunpack.c.l.b16 %v236
        %v260 = vpack.c.b16 %v259, %v258
        %261 = vrot.lane.b32.xlu0 %v260, 127
        %v262 = vpop.permute.xlu0 %261
        %vm264 = vcmask 130048
        %v266 = vsel %vm264, %v254, 0
        %v269 = vsel %vm264, %v255, 0
        %271 = vmatpush.bf16.msra.mxu0 0
        %272 = vmatpush.bf16.msra.mxu0 0
        %273 = vmatpush.bf16.msra.mxu0 0
        %274 = vmatpush.bf16.msra.mxu0 0
        %275 = vmatpush.bf16.msra.mxu0 0
        %276 = vmatpush.bf16.msra.mxu0 0
        %277 = vmatpush.bf16.msra.mxu0 0
        %278 = vmatpush.bf16.msra.mxu0 %v262
        %279 = vmatmul.bf16.gmra.mxu0 %v266
        %v280 = vpop.f32.mrf.mxu0
        %v281 = vadd.f32 0.0, %v280
        %v282 = vpop.f32.mrf.mxu0
        %v283 = vadd.f32 0.0, %v282
        %284 = vmatmul.bf16.gmra.mxu0 %v269
        %v285 = vpop.f32.mrf.mxu0
        %v286 = vadd.f32 0.0, %v285
        %v287 = vpop.f32.mrf.mxu0
        %v288 = vadd.f32 0.0, %v287
        %289 = vdwg.mxu0
        %v294 = vunpack.c.l.b16 %v237
        %v295 = vunpack.c.l.b16 %v238
        %v296 = vunpack.c.l.b16 %v239
        %v297 = vunpack.c.l.b16 %v240
        %v298 = vpack.c.b16 %v295, %v294
        %v299 = vpack.c.b16 %v297, %v296
        %v302 = vsel %vm264, %v298, 0
        %v305 = vsel %vm264, %v299, 0
        %307 = vmatpush.bf16.msra.mxu0 0
        %308 = vmatpush.bf16.msra.mxu0 0
        %309 = vmatpush.bf16.msra.mxu0 0
        %310 = vmatpush.bf16.msra.mxu0 0
        %311 = vmatpush.bf16.msra.mxu0 0
        %312 = vmatpush.bf16.msra.mxu0 0
        %313 = vmatpush.bf16.msra.mxu0 0
        %314 = vmatpush.bf16.msra.mxu0 %v260
        %315 = vmatmul.bf16.gmra.mxu0 %v302
        %v316 = vpop.f32.mrf.mxu0
        %v317 = vadd.f32 %v281, %v316
        %v318 = vpop.f32.mrf.mxu0
        %v319 = vadd.f32 %v283, %v318
        %320 = vmatmul.bf16.gmra.mxu0 %v305
        %v321 = vpop.f32.mrf.mxu0
        %v322 = vadd.f32 %v286, %v321
        %v323 = vpop.f32.mrf.mxu0
        %v324 = vadd.f32 %v288, %v323
        %325 = vdwg.mxu0
        %s326 = scalar_lea.vmem %s1, 32
        %v327 = vld [vmem:[%s326] sm:$0xf]
        %v328 = vld [vmem:[%s326 + $0x4] sm:$0xf]
        %v329 = vld [vmem:[%s326 + $0x8] sm:$0xf]
        %v330 = vld [vmem:[%s326 + $0xc] sm:$0xf]
        %v335 = vunpack.c.l.b16 %v327
        %v336 = vunpack.c.l.b16 %v328
        %v337 = vunpack.c.l.b16 %v329
        %v338 = vunpack.c.l.b16 %v330
        %v339 = vpack.c.b16 %v336, %v335
        %v340 = vpack.c.b16 %v338, %v337
        %341 = vrot.lane.b32.xlu0 %v260, 126
        %v342 = vpop.permute.xlu0 %341
        %v345 = vsel %vm264, %v339, 0
        %v348 = vsel %vm264, %v340, 0
        %350 = vmatpush.bf16.msra.mxu0 0
        %351 = vmatpush.bf16.msra.mxu0 0
        %352 = vmatpush.bf16.msra.mxu0 0
        %353 = vmatpush.bf16.msra.mxu0 0
        %354 = vmatpush.bf16.msra.mxu0 0
        %355 = vmatpush.bf16.msra.mxu0 0
        %356 = vmatpush.bf16.msra.mxu0 0
        %357 = vmatpush.bf16.msra.mxu0 %v342
        %358 = vmatmul.bf16.gmra.mxu0 %v345
        %v359 = vpop.f32.mrf.mxu0
        %v360 = vadd.f32 0.0, %v359
        %v361 = vpop.f32.mrf.mxu0
        %v362 = vadd.f32 0.0, %v361
        %363 = vmatmul.bf16.gmra.mxu0 %v348
        %v364 = vpop.f32.mrf.mxu0
        %v365 = vadd.f32 0.0, %v364
        %v366 = vpop.f32.mrf.mxu0
        %v367 = vadd.f32 0.0, %v366
        %368 = vdwg.mxu0
        %v369 = vadd.f32 %v317, %v360
        %v370 = vadd.f32 %v319, %v362
        %v371 = vadd.f32 %v322, %v365
        %v372 = vadd.f32 %v324, %v367
        %s373 = sadd.s32 %s227, 1
        %s374 = smul.u32 %s373, 2
        %s375 = smul.addr %s374, 4
        %s376 = scalar_lea.vmem %s219, %s375
        %v377 = vld [vmem:[%s376] sm:$0xf]
        %v378 = vld [vmem:[%s376 + $0x4] sm:$0xf]
        %s379 = scalar_lea.vmem %s1, 48
        %v380 = vld [vmem:[%s379] sm:$0xf]
        %v381 = vld [vmem:[%s379 + $0x4] sm:$0xf]
        %v382 = vld [vmem:[%s379 + $0x8] sm:$0xf]
        %v383 = vld [vmem:[%s379 + $0xc] sm:$0xf]
        %v388 = vunpack.c.l.b16 %v380
        %v389 = vunpack.c.l.b16 %v381
        %v390 = vunpack.c.l.b16 %v382
        %v391 = vunpack.c.l.b16 %v383
        %v392 = vpack.c.b16 %v389, %v388
        %v393 = vpack.c.b16 %v391, %v390
        %v396 = vunpack.c.l.b16 %v377
        %v397 = vunpack.c.l.b16 %v378
        %v398 = vpack.c.b16 %v397, %v396
        %v401 = vsel %vm264, %v392, 0
        %v404 = vsel %vm264, %v393, 0
        %406 = vmatpush.bf16.msra.mxu0 0
        %407 = vmatpush.bf16.msra.mxu0 0
        %408 = vmatpush.bf16.msra.mxu0 0
        %409 = vmatpush.bf16.msra.mxu0 0
        %410 = vmatpush.bf16.msra.mxu0 0
        %411 = vmatpush.bf16.msra.mxu0 0
        %412 = vmatpush.bf16.msra.mxu0 0
        %413 = vmatpush.bf16.msra.mxu0 %v398
        %414 = vmatmul.bf16.gmra.mxu0 %v401
        %v415 = vpop.f32.mrf.mxu0
        %v416 = vadd.f32 0.0, %v415
        %v417 = vpop.f32.mrf.mxu0
        %v418 = vadd.f32 0.0, %v417
        %419 = vmatmul.bf16.gmra.mxu0 %v404
        %v420 = vpop.f32.mrf.mxu0
        %v421 = vadd.f32 0.0, %v420
        %v422 = vpop.f32.mrf.mxu0
        %v423 = vadd.f32 0.0, %v422
        %424 = vdwg.mxu0
        %v425 = vadd.f32 %v369, %v416
        %v426 = vadd.f32 %v370, %v418
        %v427 = vadd.f32 %v371, %v421
        %v428 = vadd.f32 %v372, %v423
        %s429 = scalar_lea.vmem %s1, 64
        %v430 = vld [vmem:[%s429] sm:$0xf]
        %v431 = vld [vmem:[%s429 + $0x4] sm:$0xf]
        %v432 = vld [vmem:[%s429 + $0x8] sm:$0xf]
        %v433 = vld [vmem:[%s429 + $0xc] sm:$0xf]
        %v438 = vunpack.c.l.b16 %v430
        %v439 = vunpack.c.l.b16 %v431
        %v440 = vunpack.c.l.b16 %v432
        %v441 = vunpack.c.l.b16 %v433
        %v442 = vpack.c.b16 %v439, %v438
        %v443 = vpack.c.b16 %v441, %v440
        %444 = vrot.lane.b32.xlu0 %v398, 127
        %v445 = vpop.permute.xlu0 %444
        %v448 = vsel %vm264, %v442, 0
        %v451 = vsel %vm264, %v443, 0
        %453 = vmatpush.bf16.msra.mxu0 0
        %454 = vmatpush.bf16.msra.mxu0 0
        %455 = vmatpush.bf16.msra.mxu0 0
        %456 = vmatpush.bf16.msra.mxu0 0
        %457 = vmatpush.bf16.msra.mxu0 0
        %458 = vmatpush.bf16.msra.mxu0 0
        %459 = vmatpush.bf16.msra.mxu0 0
        %460 = vmatpush.bf16.msra.mxu0 %v445
        %461 = vmatmul.bf16.gmra.mxu0 %v448
        %v462 = vpop.f32.mrf.mxu0
        %v463 = vadd.f32 0.0, %v462
        %v464 = vpop.f32.mrf.mxu0
        %v465 = vadd.f32 0.0, %v464
        %466 = vmatmul.bf16.gmra.mxu0 %v451
        %v467 = vpop.f32.mrf.mxu0
        %v468 = vadd.f32 0.0, %v467
        %v469 = vpop.f32.mrf.mxu0
        %v470 = vadd.f32 0.0, %v469
        %471 = vdwg.mxu0
        %v472 = vadd.f32 %v425, %v463
        %v473 = vadd.f32 %v426, %v465
        %v474 = vadd.f32 %v427, %v468
        %v475 = vadd.f32 %v428, %v470
        %s476 = scalar_lea.vmem %s1, 80
        %v477 = vld [vmem:[%s476] sm:$0xf]
        %v478 = vld [vmem:[%s476 + $0x4] sm:$0xf]
        %v479 = vld [vmem:[%s476 + $0x8] sm:$0xf]
        %v480 = vld [vmem:[%s476 + $0xc] sm:$0xf]
        %v485 = vunpack.c.l.b16 %v477
        %v486 = vunpack.c.l.b16 %v478
        %v487 = vunpack.c.l.b16 %v479
        %v488 = vunpack.c.l.b16 %v480
        %v489 = vpack.c.b16 %v486, %v485
        %v490 = vpack.c.b16 %v488, %v487
        %491 = vrot.lane.b32.xlu0 %v398, 126
        %v492 = vpop.permute.xlu0 %491
        %v495 = vsel %vm264, %v489, 0
        %v498 = vsel %vm264, %v490, 0
        %500 = vmatpush.bf16.msra.mxu0 0
        %501 = vmatpush.bf16.msra.mxu0 0
        %502 = vmatpush.bf16.msra.mxu0 0
        %503 = vmatpush.bf16.msra.mxu0 0
        %504 = vmatpush.bf16.msra.mxu0 0
        %505 = vmatpush.bf16.msra.mxu0 0
        %506 = vmatpush.bf16.msra.mxu0 0
        %507 = vmatpush.bf16.msra.mxu0 %v492
        %508 = vmatmul.bf16.gmra.mxu0 %v495
        %v509 = vpop.f32.mrf.mxu0
        %v510 = vadd.f32 0.0, %v509
        %v511 = vpop.f32.mrf.mxu0
        %v512 = vadd.f32 0.0, %v511
        %513 = vmatmul.bf16.gmra.mxu0 %v498
        %v514 = vpop.f32.mrf.mxu0
        %v515 = vadd.f32 0.0, %v514
        %v516 = vpop.f32.mrf.mxu0
        %v517 = vadd.f32 0.0, %v516
        %518 = vdwg.mxu0
        %v519 = vadd.f32 %v472, %v510
        %v520 = vadd.f32 %v473, %v512
        %v521 = vadd.f32 %v474, %v515
        %v522 = vadd.f32 %v475, %v517
        %s523 = sadd.s32 %s227, 2
        %s524 = smul.u32 %s523, 2
        %s525 = smul.addr %s524, 4
        %s526 = scalar_lea.vmem %s219, %s525
        %v527 = vld [vmem:[%s526] sm:$0xf]
        %v528 = vld [vmem:[%s526 + $0x4] sm:$0xf]
        %s529 = scalar_lea.vmem %s1, 96
        %v530 = vld [vmem:[%s529] sm:$0xf]
        %v531 = vld [vmem:[%s529 + $0x4] sm:$0xf]
        %v532 = vld [vmem:[%s529 + $0x8] sm:$0xf]
        %v533 = vld [vmem:[%s529 + $0xc] sm:$0xf]
        %v538 = vunpack.c.l.b16 %v530
        %v539 = vunpack.c.l.b16 %v531
        %v540 = vunpack.c.l.b16 %v532
        %v541 = vunpack.c.l.b16 %v533
        %v542 = vpack.c.b16 %v539, %v538
        %v543 = vpack.c.b16 %v541, %v540
        %v546 = vunpack.c.l.b16 %v527
        %v547 = vunpack.c.l.b16 %v528
        %v548 = vpack.c.b16 %v547, %v546
        %v551 = vsel %vm264, %v542, 0
        %v554 = vsel %vm264, %v543, 0
        %556 = vmatpush.bf16.msra.mxu0 0
        %557 = vmatpush.bf16.msra.mxu0 0
        %558 = vmatpush.bf16.msra.mxu0 0
        %559 = vmatpush.bf16.msra.mxu0 0
        %560 = vmatpush.bf16.msra.mxu0 0
        %561 = vmatpush.bf16.msra.mxu0 0
        %562 = vmatpush.bf16.msra.mxu0 0
        %563 = vmatpush.bf16.msra.mxu0 %v548
        %564 = vmatmul.bf16.gmra.mxu0 %v551
        %v565 = vpop.f32.mrf.mxu0
        %v566 = vadd.f32 0.0, %v565
        %v567 = vpop.f32.mrf.mxu0
        %v568 = vadd.f32 0.0, %v567
        %569 = vmatmul.bf16.gmra.mxu0 %v554
        %v570 = vpop.f32.mrf.mxu0
        %v571 = vadd.f32 0.0, %v570
        %v572 = vpop.f32.mrf.mxu0
        %v573 = vadd.f32 0.0, %v572
        %574 = vdwg.mxu0
        %v575 = vadd.f32 %v519, %v566
        %v576 = vadd.f32 %v520, %v568
        %v577 = vadd.f32 %v521, %v571
        %v578 = vadd.f32 %v522, %v573
        %s579 = scalar_lea.vmem %s1, 112
        %v580 = vld [vmem:[%s579] sm:$0xf]
        %v581 = vld [vmem:[%s579 + $0x4] sm:$0xf]
        %v582 = vld [vmem:[%s579 + $0x8] sm:$0xf]
        %v583 = vld [vmem:[%s579 + $0xc] sm:$0xf]
        %v588 = vunpack.c.l.b16 %v580
        %v589 = vunpack.c.l.b16 %v581
        %v590 = vunpack.c.l.b16 %v582
        %v591 = vunpack.c.l.b16 %v583
        %v592 = vpack.c.b16 %v589, %v588
        %v593 = vpack.c.b16 %v591, %v590
        %594 = vrot.lane.b32.xlu0 %v548, 127
        %v595 = vpop.permute.xlu0 %594
        %v598 = vsel %vm264, %v592, 0
        %v601 = vsel %vm264, %v593, 0
        %603 = vmatpush.bf16.msra.mxu0 0
        %604 = vmatpush.bf16.msra.mxu0 0
        %605 = vmatpush.bf16.msra.mxu0 0
        %606 = vmatpush.bf16.msra.mxu0 0
        %607 = vmatpush.bf16.msra.mxu0 0
        %608 = vmatpush.bf16.msra.mxu0 0
        %609 = vmatpush.bf16.msra.mxu0 0
        %610 = vmatpush.bf16.msra.mxu0 %v595
        %611 = vmatmul.bf16.gmra.mxu0 %v598
        %v612 = vpop.f32.mrf.mxu0
        %v613 = vadd.f32 0.0, %v612
        %v614 = vpop.f32.mrf.mxu0
        %v615 = vadd.f32 0.0, %v614
        %616 = vmatmul.bf16.gmra.mxu0 %v601
        %v617 = vpop.f32.mrf.mxu0
        %v618 = vadd.f32 0.0, %v617
        %v619 = vpop.f32.mrf.mxu0
        %v620 = vadd.f32 0.0, %v619
        %621 = vdwg.mxu0
        %v622 = vadd.f32 %v575, %v613
        %v623 = vadd.f32 %v576, %v615
        %v624 = vadd.f32 %v577, %v618
        %v625 = vadd.f32 %v578, %v620
        %s626 = scalar_lea.vmem %s1, 128
        %v627 = vld [vmem:[%s626] sm:$0xf]
        %v628 = vld [vmem:[%s626 + $0x4] sm:$0xf]
        %v629 = vld [vmem:[%s626 + $0x8] sm:$0xf]
        %v630 = vld [vmem:[%s626 + $0xc] sm:$0xf]
        %v635 = vunpack.c.l.b16 %v627
        %v636 = vunpack.c.l.b16 %v628
        %v637 = vunpack.c.l.b16 %v629
        %v638 = vunpack.c.l.b16 %v630
        %v639 = vpack.c.b16 %v636, %v635
        %v640 = vpack.c.b16 %v638, %v637
        %641 = vrot.lane.b32.xlu0 %v548, 126
        %v642 = vpop.permute.xlu0 %641
        %v645 = vsel %vm264, %v639, 0
        %v648 = vsel %vm264, %v640, 0
        %650 = vmatpush.bf16.msra.mxu0 0
        %651 = vmatpush.bf16.msra.mxu0 0
        %652 = vmatpush.bf16.msra.mxu0 0
        %653 = vmatpush.bf16.msra.mxu0 0
        %654 = vmatpush.bf16.msra.mxu0 0
        %655 = vmatpush.bf16.msra.mxu0 0
        %656 = vmatpush.bf16.msra.mxu0 0
        %657 = vmatpush.bf16.msra.mxu0 %v642
        %658 = vmatmul.bf16.gmra.mxu0 %v645
        %v659 = vpop.f32.mrf.mxu0
        %v660 = vadd.f32 0.0, %v659
        %v661 = vpop.f32.mrf.mxu0
        %v662 = vadd.f32 0.0, %v661
        %663 = vmatmul.bf16.gmra.mxu0 %v648
        %v664 = vpop.f32.mrf.mxu0
        %v665 = vadd.f32 0.0, %v664
        %v666 = vpop.f32.mrf.mxu0
        %v667 = vadd.f32 0.0, %v666
        %668 = vdwg.mxu0
        %v669 = vadd.f32 %v622, %v660
        %v670 = vadd.f32 %v623, %v662
        %v671 = vadd.f32 %v624, %v665
        %v672 = vadd.f32 %v625, %v667
        %v673 = vld [vmem:[%s2] sm:$0xff]
        %v674 = vld [vmem:[%s2 + $0x8] sm:$0xff]
        %v675 = vld [vmem:[%s2 + $0x10] sm:$0xff]
        %v676 = vld [vmem:[%s2 + $0x18] sm:$0xff]
        %678 = vset.pattern.permute.xlu0 0
        %679 = vperm.xlu0 %678, %v673
        %v680 = vpop.permute.xlu0 %679
        %683 = vset.pattern.permute.xlu0 0
        %684 = vperm.xlu0 %683, %v674
        %v685 = vpop.permute.xlu0 %684
        %688 = vset.pattern.permute.xlu0 0
        %689 = vperm.xlu0 %688, %v675
        %v690 = vpop.permute.xlu0 %689
        %693 = vset.pattern.permute.xlu0 0
        %694 = vperm.xlu0 %693, %v676
        %v695 = vpop.permute.xlu0 %694
        %v697 = vadd.f32 %v669, %v680
        %v698 = vadd.f32 %v670, %v685
        %v699 = vadd.f32 %v671, %v690
        %v700 = vadd.f32 %v672, %v695
        %v701 = vmax.f32 %v697, 0.0
        %v702 = vmax.f32 %v698, 0.0
        %v703 = vmax.f32 %v699, 0.0
        %v704 = vmax.f32 %v700, 0.0
        %v705 = vld [vmem:[%s3] sm:$0xf]
        %v706 = vld [vmem:[%s3 + $0x4] sm:$0xf]
        %v707 = vpack.c.bf16 %v702, %v701
        %v708 = vpack.c.bf16 %v704, %v703
        %v709 = vld [vmem:[%s4] sm:$0xff]
        %v710 = vld [vmem:[%s4 + $0x8] sm:$0xff]
        %712 = vset.pattern.permute.xlu0 0
        %713 = vperm.xlu0 %712, %v709
        %v714 = vpop.permute.xlu0 %713
        %717 = vset.pattern.permute.xlu0 0
        %718 = vperm.xlu0 %717, %v710
        %v719 = vpop.permute.xlu0 %718
        %v723 = vunpack.c.l.b16 %v705
        %v724 = vunpack.c.l.b16 %v706
        %v725 = vpack.c.b16 %v724, %v723
        %vm726 = vcmask 261120
        %v728 = vsel %vm726, %v725, 0
        %730 = vmatpush.bf16.msra.mxu0 0
        %731 = vmatpush.bf16.msra.mxu0 0
        %732 = vmatpush.bf16.msra.mxu0 0
        %733 = vmatpush.bf16.msra.mxu0 0
        %734 = vmatpush.bf16.msra.mxu0 0
        %735 = vmatpush.bf16.msra.mxu0 0
        %736 = vmatpush.bf16.msra.mxu0 %v708
        %737 = vmatpush.bf16.msra.mxu0 %v707
        %738 = vmatmul.bf16.gmra.mxu0 %v728
        %v739 = vpop.f32.mrf.mxu0
        %v740 = vadd.f32 %v714, %v739
        %v741 = vpop.f32.mrf.mxu0
        %v742 = vadd.f32 %v719, %v741
        %743 = vdwg.mxu0
        %s744 = smul.u32 %s227, 16
        %s745 = scalar_lea.vmem %s224, %s744
        %vm746 = vcmask 23552
        %747 = vst.msk [vmem:[%s745] sm:$0xff] %vm746, %v740
        %748 = vst.msk [vmem:[%s745 + $0x8] sm:$0xff] %vm746, %v742
      $region45: #{pnet_forward.5} parent=39 // loop_footer
        %s231 = sadd.s32 1, %s227
      $region46: #{pnet_forward.5} parent=39 // loop_footer_branch
        %226 = sbr.rel target = $region42
      $region47: #{pnet_forward.5} parent=39 // loop_exit
        _
      %p749 = scmp.lt.s32.totalorder %s16, 1
      %s750 = scalar_select %p749, %s16, 1
      %s751 = smul.addr %s750, 6
      %s752 = smul.addr %s751, 8
      %s753 = scalar_lea.vmem %s5, %s752
      // Predicated region
      $region48: #{pnet_forward.5} parent=39 // pred_check
        %p754 = pneg %p144
      $region49: #{pnet_forward.5} parent=39 // pred_check_branch
        %756 = sbr.rel (%p754) target = $region51
      $region50: #{pnet_forward.5} parent=39 // pred_region
        _
      $region51: #{pnet_forward.5} parent=39 // pred_fallthru
        _
    $region40: #{pnet_forward.5} parent=5 // pred_fallthru
      _
    %p757 = scmp.le.s32.totalorder 2, %s11
    // Predicated region
    $region52: #{pnet_forward.5} parent=5 // pred_check
      %p758 = pneg %p757
    $region53: #{pnet_forward.5} parent=5 // pred_check_branch
      %760 = sbr.rel (%p758) target = $region55
    $region54: #{pnet_forward.5} parent=5 // pred_region
      %s761 = ssub.s32 %s11, 2
      // Predicated region
      $region56: #{pnet_forward.5} parent=54 // pred_check
        %p762 = pneg %p150
      $region57: #{pnet_forward.5} parent=54 // pred_check_branch
        %764 = sbr.rel (%p762) target = $region59
      $region58: #{pnet_forward.5} parent=54 // pred_region
        %p765 = scmp.lt.s32.totalorder %s17, 1
        %s766 = scalar_select %p765, %s17, 1
        %s767 = smul.addr %s766, 6
        %s768 = smul.addr %s767, 8
        %s769 = scalar_lea.vmem %s5, %s768
      $region59: #{pnet_forward.5} parent=54 // pred_fallthru
        _
    $region55: #{pnet_forward.5} parent=5 // pred_fallthru
      _
  $region6: #{pnet_forward.5} parent=0 // loop_footer
    %s15 = sadd.s32 1, %s11
  $region7: #{pnet_forward.5} parent=0 // loop_footer_branch
    %10 = sbr.rel target = $region3
  $region8: #{pnet_forward.5} parent=0 // loop_exit
    _

</llo_original>
